<compile_context>
chip_gen: v6e
topology: v6e:2x2x1
jax: 0.10.0
libtpu: 0.0.40
codegen_flags: <defaults>
</compile_context>

<pallas_src>
import functools
import math

import jax
import jax.numpy as jnp
from jax.experimental import pallas as pl
from jax.experimental.pallas import tpu as pltpu

# ----------------------------- config -----------------------------
D_MODEL = 32
N_HEADS = 4
D_FF = 64
B = 2          # batch
T_TGT = 8      # target (query) sequence length
S_SRC = 16     # memory (source) sequence length
EPS = 1e-6
DTYPE = jnp.float32


# ----------------------------- fused Pallas kernel -----------------------------
def _decoder_layer_kernel(x_ref, qpos_ref, mem_ref, pos_ref,
                          tkeep_ref, skeep_ref, w_ref, misc_ref,
                          o_ref, *, n_heads, eps, d, d_ff):
  dk = d // n_heads
  scale = 1.0 / math.sqrt(dk)

  x = x_ref[...].astype(jnp.float32)        # (B*T, D)
  qpos = qpos_ref[...].astype(jnp.float32)  # (B*T, D)
  mem = mem_ref[...].astype(jnp.float32)    # (B*S, D)
  pos = pos_ref[...].astype(jnp.float32)    # (B*S, D)
  tgt_keep = tkeep_ref[...] != 0.0          # (B*T, B*T) block-diag keep mask
  src_keep = skeep_ref[...] != 0.0          # (B*T, B*S) block-diag keep mask

  # --- static slices of the packed weight slab / misc array ---
  sa_w = w_ref[0:d, :]                      # (D, 4D): [wq|wk|wv|wo]
  ca_w = w_ref[d:2 * d, :]                  # (D, 4D)
  w1 = w_ref[2 * d:3 * d, 0:d_ff]           # (D, D_FF)
  w2 = w_ref[3 * d:3 * d + d_ff, 0:d]       # (D_FF, D)

  misc = misc_ref[...].astype(jnp.float32)  # (16, 128)
  ln = misc[0:6, 0:d]                       # rows: a1,b1,a2,b2,a3,b3
  sa_b = misc[6:7, :]                       # (1, 4D): [bq|bk|bv|bo]
  ca_b = misc[7:8, :]                       # (1, 4D)
  b1 = misc[8:9, 0:d_ff]                    # (1, D_FF)
  b2 = misc[8:9, d_ff:d_ff + d]             # (1, D)

  def layer_norm(v, a, b):
    # annotated-transformer LayerNorm: torch.std (unbiased, n-1) and (std + eps).
    mean = jnp.mean(v, axis=-1, keepdims=True)
    diff = v - mean
    var = jnp.sum(diff * diff, axis=-1, keepdims=True) / (v.shape[-1] - 1)
    inv = pl.reciprocal(jnp.sqrt(var) + eps, approx=True)   # per-row, on the EUP
    return a * (diff * inv) + b

  def mha(q_in, k_in, v_in, w_slab, b_row, keep, qk_shared):
    wo = w_slab[:, 3 * d:4 * d]
    bo = b_row[:, 3 * d:4 * d]
    if qk_shared:
      # q and k share the same input -> one (D, 2D) MXU push.
      qk = jnp.dot(q_in, w_slab[:, 0:2 * d],
                   preferred_element_type=jnp.float32) + b_row[:, 0:2 * d]
      q, k = qk[:, 0:d], qk[:, d:2 * d]
    else:
      q = jnp.dot(q_in, w_slab[:, 0:d],
                  preferred_element_type=jnp.float32) + b_row[:, 0:d]
      k = jnp.dot(k_in, w_slab[:, d:2 * d],
                  preferred_element_type=jnp.float32) + b_row[:, d:2 * d]
    v = jnp.dot(v_in, w_slab[:, 2 * d:3 * d],
                preferred_element_type=jnp.float32) + b_row[:, 2 * d:3 * d]

    kT = k.T                                 # one transpose per attention (hoisted)
    acc = jnp.zeros((q_in.shape[0], d), dtype=jnp.float32)
    for h in range(n_heads):                 # static unroll; heads are static slices
      sl = slice(h * dk, (h + 1) * dk)
      s = jnp.dot(q[:, sl], kT[sl, :],
                  preferred_element_type=jnp.float32) * scale
      # Unnormalized masked softmax: exp + mask-to-zero; scores are O(1) here so no
      # row-max subtraction is needed (matches masked_fill(-1e9) reference numerically).
      p = jnp.where(keep, jnp.exp(s), 0.0)
      p = p * pl.reciprocal(jnp.sum(p, axis=-1, keepdims=True), approx=True)
      ctx = jnp.dot(p, v[:, sl], preferred_element_type=jnp.float32)
      # accumulate the output projection per head instead of lane-concat + one matmul
      acc = acc + jnp.dot(ctx, wo[sl, :], preferred_element_type=jnp.float32)
    return acc + bo

  # sublayer 0: self-attention (pre-norm + residual; dropout disabled / eval mode)
  xn = layer_norm(x, ln[0:1, :], ln[1:2, :])
  q_in = xn + qpos
  x = x + mha(q_in, q_in, xn, sa_w, sa_b, tgt_keep, qk_shared=True)

  # sublayer 1: cross-attention over memory
  xn = layer_norm(x, ln[2:3, :], ln[3:4, :])
  x = x + mha(xn + qpos, mem + pos, mem, ca_w, ca_b, src_keep, qk_shared=False)

  # sublayer 2: position-wise feed-forward
  xn = layer_norm(x, ln[4:5, :], ln[5:6, :])
  h1 = jnp.maximum(jnp.dot(xn, w1, preferred_element_type=jnp.float32) + b1, 0.0)
  x = x + jnp.dot(h1, w2, preferred_element_type=jnp.float32) + b2

  o_ref[...] = x.astype(o_ref.dtype)


# ----------------------------- wrapper -----------------------------
def decoder_layer_pos_embed(packed, x, memory, src_mask, tgt_mask,
                            pos=None, query_pos=None, n_heads=N_HEADS):
  """Mirrors DecoderLayerPosEmbed.forward. x: (B,T,D), memory: (B,S,D)."""
  Bq, T, D = x.shape
  S = memory.shape[1]
  d_ff = packed["w"].shape[0] - 3 * D

  if pos is None:
    pos = jnp.zeros_like(memory)
  if query_pos is None:
    query_pos = jnp.zeros_like(x)

  # Stack batch on the sublane axis (free, contiguous reshapes).
  x2 = x.reshape(Bq * T, D)
  qp2 = query_pos.reshape(Bq * T, D)
  m2 = memory.reshape(Bq * S, D)
  p2 = pos.reshape(Bq * S, D)

  # Fold per-batch masks into block-diagonal keep masks over the stacked sequences.
  eye = jnp.eye(Bq, dtype=jnp.float32)
  def block_diag_keep(mask):  # (B, Tq, Tk) -> (B*Tq, B*Tk) float {0,1}
    m = (mask != 0).astype(jnp.float32)
    k4 = m[:, :, None, :] * eye[:, None, :, None]
    return k4.reshape(Bq * mask.shape[1], Bq * mask.shape[2])

  tkeep = block_diag_keep(tgt_mask)   # (B*T, B*T)
  skeep = block_diag_keep(src_mask)   # (B*T, B*S)

  args = (x2, qp2, m2, p2, tkeep, skeep, packed["w"], packed["misc"])

  def full_spec(shape):
    nd = len(shape)
    return pl.BlockSpec(tuple(shape), lambda i, _nd=nd: (0,) * _nd)

  out = pl.pallas_call(
      functools.partial(_decoder_layer_kernel, n_heads=n_heads, eps=EPS,
                        d=D, d_ff=d_ff),
      out_shape=jax.ShapeDtypeStruct((Bq * T, D), x.dtype),
      grid=(1,),                                    # single program, single grid step
      in_specs=[full_spec(a.shape) for a in args],
      out_specs=full_spec((Bq * T, D)),
      compiler_params=pltpu.CompilerParams(
          dimension_semantics=("arbitrary",)),
  )(*args)
  return out.reshape(Bq, T, D)


# ----------------------------- pure-JAX reference (sanity check) -----------------------------
def _reference_forward(params, x, memory, src_mask, tgt_mask, pos, query_pos,
                       n_heads=N_HEADS):
  d = x.shape[-1]
  dk = d // n_heads

  def layer_norm(v, a, b):
    mean = v.mean(-1, keepdims=True)
    diff = v - mean
    std = jnp.sqrt((diff * diff).sum(-1, keepdims=True) / (v.shape[-1] - 1))
    return a * diff / (std + EPS) + b

  def mha(p, q_in, k_in, v_in, mask):
    q = q_in @ p["wqkv"][:, :d] + p["bqkv"][0, :d]
    k = k_in @ p["wqkv"][:, d:2 * d] + p["bqkv"][0, d:2 * d]
    v = v_in @ p["wqkv"][:, 2 * d:] + p["bqkv"][0, 2 * d:]
    def split(t):
      return t.reshape(t.shape[0], t.shape[1], n_heads, dk).transpose(0, 2, 1, 3)
    qh, kh, vh = split(q), split(k), split(v)
    s = jnp.einsum("bhqd,bhkd->bhqk", qh, kh) / math.sqrt(dk)
    s = jnp.where(mask[:, None] != 0, s, -1e9)
    w = jax.nn.softmax(s, axis=-1)
    o = jnp.einsum("bhqk,bhkd->bhqd", w, vh).transpose(0, 2, 1, 3)
    return o.reshape(q.shape) @ p["wo"] + p["bo"][0]

  ln = params["ln"]
  xn = layer_norm(x, ln[0], ln[1])
  qk = xn + query_pos
  x = x + mha(params["self_attn"], qk, qk, xn, tgt_mask)
  xn = layer_norm(x, ln[2], ln[3])
  x = x + mha(params["src_attn"], xn + query_pos, memory + pos, memory, src_mask)
  xn = layer_norm(x, ln[4], ln[5])
  h = jnp.maximum(xn @ params["w1"] + params["b1"][0], 0.0)
  return x + h @ params["w2"] + params["b2"][0]


# ----------------------------- deterministic params + packing -----------------------------
def init_params(key):
  def dense(k, din, dout, scale=0.05):
    return scale * jax.random.normal(k, (din, dout), dtype=DTYPE)

  def attn_params(k):
    ks = jax.random.split(k, 6)
    return {
        "wqkv": jnp.concatenate(
            [dense(ks[0], D_MODEL, D_MODEL),
             dense(ks[1], D_MODEL, D_MODEL),
             dense(ks[2], D_MODEL, D_MODEL)], axis=1),          # (D, 3D)
        "bqkv": 0.02 * jax.random.normal(ks[3], (1, 3 * D_MODEL), dtype=DTYPE),
        "wo": dense(ks[4], D_MODEL, D_MODEL),
        "bo": 0.02 * jax.random.normal(ks[5], (1, D_MODEL), dtype=DTYPE),
    }

  k_sa, k_ca, k1, k2, kb1, kb2, ka, kb = jax.random.split(key, 8)
  ln_a = 1.0 + 0.05 * jax.random.normal(ka, (3, D_MODEL), dtype=DTYPE)
  ln_b = 0.05 * jax.random.normal(kb, (3, D_MODEL), dtype=DTYPE)
  ln = jnp.stack([ln_a[0], ln_b[0], ln_a[1], ln_b[1], ln_a[2], ln_b[2]], axis=0)

  return {
      "self_attn": attn_params(k_sa),
      "src_attn": attn_params(k_ca),
      "w1": dense(k1, D_MODEL, D_FF),
      "b1": 0.02 * jax.random.normal(kb1, (1, D_FF), dtype=DTYPE),
      "w2": dense(k2, D_FF, D_MODEL),
      "b2": 0.02 * jax.random.normal(kb2, (1, D_MODEL), dtype=DTYPE),
      "ln": ln,
  }


def pack_params(params, d=D_MODEL, d_ff=D_FF):
  """Pack all layer weights into one (3D+D_FF, 4D) slab + one (16, 4D) misc array."""
  sa, ca = params["self_attn"], params["src_attn"]

  def attn_slab(p):
    return jnp.concatenate([p["wqkv"], p["wo"]], axis=1)      # (D, 4D)

  w = jnp.zeros((3 * d + d_ff, 4 * d), DTYPE)                 # (160, 128)
  w = w.at[0:d, :].set(attn_slab(sa))
  w = w.at[d:2 * d, :].set(attn_slab(ca))
  w = w.at[2 * d:3 * d, 0:d_ff].set(params["w1"])
  w = w.at[3 * d:3 * d + d_ff, 0:d].set(params["w2"])

  misc = jnp.zeros((16, 4 * d), DTYPE)                        # (16, 128)
  misc = misc.at[0:6, 0:d].set(params["ln"])
  misc = misc.at[6, :].set(jnp.concatenate([sa["bqkv"][0], sa["bo"][0]]))
  misc = misc.at[7, :].set(jnp.concatenate([ca["bqkv"][0], ca["bo"][0]]))
  misc = misc.at[8, 0:d_ff].set(params["b1"][0])
  misc = misc.at[8, d_ff:d_ff + d].set(params["b2"][0])
  return {"w": w, "misc": misc}


# ----------------------------- main -----------------------------
if __name__ == "__main__":
  key = jax.random.PRNGKey(0)
  kp, kx, km, kpos, kqpos = jax.random.split(key, 5)

  params = init_params(kp)
  packed = pack_params(params)

  x = jax.random.normal(kx, (B, T_TGT, D_MODEL), dtype=DTYPE)          # queries
  memory = jax.random.normal(km, (B, S_SRC, D_MODEL), dtype=DTYPE)     # encoder memory
  pos = 0.1 * jax.random.normal(kpos, (B, S_SRC, D_MODEL), dtype=DTYPE)
  query_pos = 0.1 * jax.random.normal(kqpos, (B, T_TGT, D_MODEL), dtype=DTYPE)

  # tgt_mask: causal over target; src_mask: full visibility of memory (nonzero = keep)
  tgt_mask = jnp.tril(jnp.ones((T_TGT, T_TGT), DTYPE))[None].repeat(B, axis=0)
  src_mask = jnp.ones((B, T_TGT, S_SRC), DTYPE)

  fwd = jax.jit(functools.partial(decoder_layer_pos_embed, packed))
  out = jax.block_until_ready(
      fwd(x, memory, src_mask, tgt_mask, pos=pos, query_pos=query_pos))

  assert out.shape == (B, T_TGT, D_MODEL)
  assert bool(jnp.all(jnp.isfinite(out)))

  with jax.default_matmul_precision("float32"):
    ref = _reference_forward(params, x, memory, src_mask, tgt_mask, pos, query_pos)
  max_err = float(jnp.max(jnp.abs(out - ref)))
  assert max_err < 3e-2, f"mismatch vs reference: {max_err}"

  print("KERNEL_OK")
</pallas_src>

<mosaic_0001>
module attributes {stable_mosaic.version = 11 : i64} {
  func.func @_decoder_layer_kernel(%arg0: i32, %arg1: memref<16x32xf32, #tpu.memory_space<vmem>>, %arg2: memref<16x32xf32, #tpu.memory_space<vmem>>, %arg3: memref<32x32xf32, #tpu.memory_space<vmem>>, %arg4: memref<32x32xf32, #tpu.memory_space<vmem>>, %arg5: memref<16x16xf32, #tpu.memory_space<vmem>>, %arg6: memref<16x32xf32, #tpu.memory_space<vmem>>, %arg7: memref<160x128xf32, #tpu.memory_space<vmem>>, %arg8: memref<16x128xf32, #tpu.memory_space<vmem>>, %arg9: memref<16x32xf32, #tpu.memory_space<vmem>>) attributes {dimension_semantics = [#tpu.dimension_semantics<arbitrary>], iteration_bounds = array<i64: 1>, scalar_prefetch = 0 : i64, scratch_operands = 0 : i64, tpu.core_type = #tpu.core_type<tc>, window_params = [{pipeline_mode = #tpu.pipeline_mode<synchronous>, transform_indices = @transform_0, window_bounds = array<i64: 16, 32>}, {pipeline_mode = #tpu.pipeline_mode<synchronous>, transform_indices = @transform_1, window_bounds = array<i64: 16, 32>}, {pipeline_mode = #tpu.pipeline_mode<synchronous>, transform_indices = @transform_2, window_bounds = array<i64: 32, 32>}, {pipeline_mode = #tpu.pipeline_mode<synchronous>, transform_indices = @transform_3, window_bounds = array<i64: 32, 32>}, {pipeline_mode = #tpu.pipeline_mode<synchronous>, transform_indices = @transform_4, window_bounds = array<i64: 16, 16>}, {pipeline_mode = #tpu.pipeline_mode<synchronous>, transform_indices = @transform_5, window_bounds = array<i64: 16, 32>}, {pipeline_mode = #tpu.pipeline_mode<synchronous>, transform_indices = @transform_6, window_bounds = array<i64: 160, 128>}, {pipeline_mode = #tpu.pipeline_mode<synchronous>, transform_indices = @transform_7, window_bounds = array<i64: 16, 128>}, {pipeline_mode = #tpu.pipeline_mode<synchronous>, transform_indices = @transform_8, window_bounds = array<i64: 16, 32>}]} {
    %c0 = arith.constant 0 : index
    %c0_0 = arith.constant 0 : index
    %0 = vector.load %arg1[%c0, %c0_0] : memref<16x32xf32, #tpu.memory_space<vmem>>, vector<16x32xf32>
    %c0_1 = arith.constant 0 : index
    %c0_2 = arith.constant 0 : index
    %1 = vector.load %arg2[%c0_1, %c0_2] : memref<16x32xf32, #tpu.memory_space<vmem>>, vector<16x32xf32>
    %c0_3 = arith.constant 0 : index
    %c0_4 = arith.constant 0 : index
    %2 = vector.load %arg3[%c0_3, %c0_4] : memref<32x32xf32, #tpu.memory_space<vmem>>, vector<32x32xf32>
    %c0_5 = arith.constant 0 : index
    %c0_6 = arith.constant 0 : index
    %3 = vector.load %arg4[%c0_5, %c0_6] : memref<32x32xf32, #tpu.memory_space<vmem>>, vector<32x32xf32>
    %c0_7 = arith.constant 0 : index
    %c0_8 = arith.constant 0 : index
    %4 = vector.load %arg5[%c0_7, %c0_8] : memref<16x16xf32, #tpu.memory_space<vmem>>, vector<16x16xf32>
    %cst = arith.constant 0.000000e+00 : f32
    %5 = vector.broadcast %cst : f32 to vector<16x16xf32>
    %6 = arith.cmpf one, %4, %5 : vector<16x16xf32>
    %c0_9 = arith.constant 0 : index
    %c0_10 = arith.constant 0 : index
    %7 = vector.load %arg6[%c0_9, %c0_10] : memref<16x32xf32, #tpu.memory_space<vmem>>, vector<16x32xf32>
    %cst_11 = arith.constant 0.000000e+00 : f32
    %8 = vector.broadcast %cst_11 : f32 to vector<16x32xf32>
    %9 = arith.cmpf one, %7, %8 : vector<16x32xf32>
    %c0_12 = arith.constant 0 : index
    %c0_13 = arith.constant 0 : index
    %10 = vector.load %arg7[%c0_12, %c0_13] : memref<160x128xf32, #tpu.memory_space<vmem>>, vector<32x128xf32>
    %c32 = arith.constant 32 : index
    %c0_14 = arith.constant 0 : index
    %11 = vector.load %arg7[%c32, %c0_14] : memref<160x128xf32, #tpu.memory_space<vmem>>, vector<32x128xf32>
    %c64 = arith.constant 64 : index
    %c0_15 = arith.constant 0 : index
    %12 = vector.load %arg7[%c64, %c0_15] : memref<160x128xf32, #tpu.memory_space<vmem>>, vector<32x64xf32>
    %c96 = arith.constant 96 : index
    %c0_16 = arith.constant 0 : index
    %13 = vector.load %arg7[%c96, %c0_16] : memref<160x128xf32, #tpu.memory_space<vmem>>, vector<64x32xf32>
    %c0_17 = arith.constant 0 : index
    %c0_18 = arith.constant 0 : index
    %14 = vector.load %arg8[%c0_17, %c0_18] : memref<16x128xf32, #tpu.memory_space<vmem>>, vector<16x128xf32>
    %15 = vector.extract_strided_slice %14 {offsets = [0, 0], sizes = [6, 32], strides = [1, 1]} : vector<16x128xf32> to vector<6x32xf32>
    %16 = vector.extract_strided_slice %14 {offsets = [6, 0], sizes = [1, 128], strides = [1, 1]} : vector<16x128xf32> to vector<1x128xf32>
    %17 = vector.extract_strided_slice %14 {offsets = [7, 0], sizes = [1, 128], strides = [1, 1]} : vector<16x128xf32> to vector<1x128xf32>
    %18 = vector.extract_strided_slice %14 {offsets = [8, 0], sizes = [1, 64], strides = [1, 1]} : vector<16x128xf32> to vector<1x64xf32>
    %19 = vector.extract_strided_slice %14 {offsets = [8, 64], sizes = [1, 32], strides = [1, 1]} : vector<16x128xf32> to vector<1x32xf32>
    %20 = vector.extract_strided_slice %15 {offsets = [0, 0], sizes = [1, 32], strides = [1, 1]} : vector<6x32xf32> to vector<1x32xf32>
    %21 = vector.extract_strided_slice %15 {offsets = [1, 0], sizes = [1, 32], strides = [1, 1]} : vector<6x32xf32> to vector<1x32xf32>
    %cst_19 = arith.constant dense<0.000000e+00> : vector<16xf32>
    %22 = vector.multi_reduction <add>, %0, %cst_19 [1] : vector<16x32xf32> to vector<16xf32>
    %23 = vector.shape_cast %22 : vector<16xf32> to vector<16x1xf32>
    %cst_20 = arith.constant 3.200000e+01 : f32
    %24 = vector.broadcast %cst_20 : f32 to vector<16x1xf32>
    %25 = arith.divf %23, %24 : vector<16x1xf32>
    %26 = vector.broadcast %25 : vector<16x1xf32> to vector<16x32xf32>
    %27 = arith.subf %0, %26 : vector<16x32xf32>
    %28 = arith.mulf %27, %27 : vector<16x32xf32>
    %cst_21 = arith.constant dense<0.000000e+00> : vector<16xf32>
    %29 = vector.multi_reduction <add>, %28, %cst_21 [1] : vector<16x32xf32> to vector<16xf32>
    %30 = vector.shape_cast %29 : vector<16xf32> to vector<16x1xf32>
    %cst_22 = arith.constant 3.100000e+01 : f32
    %31 = vector.broadcast %cst_22 : f32 to vector<16x1xf32>
    %32 = arith.divf %30, %31 : vector<16x1xf32>
    %33 = math.sqrt %32 : vector<16x1xf32>
    %cst_23 = arith.constant 9.99999997E-7 : f32
    %34 = vector.broadcast %cst_23 : f32 to vector<16x1xf32>
    %35 = arith.addf %33, %34 : vector<16x1xf32>
    %36 = tpu.reciprocal %35 {approx = true} : vector<16x1xf32> -> vector<16x1xf32>
    %37 = vector.broadcast %36 : vector<16x1xf32> to vector<16x32xf32>
    %38 = arith.mulf %27, %37 : vector<16x32xf32>
    %39 = vector.broadcast %20 : vector<1x32xf32> to vector<16x32xf32>
    %40 = arith.mulf %39, %38 : vector<16x32xf32>
    %41 = vector.broadcast %21 : vector<1x32xf32> to vector<16x32xf32>
    %42 = arith.addf %40, %41 : vector<16x32xf32>
    %43 = arith.addf %42, %1 : vector<16x32xf32>
    %44 = vector.extract_strided_slice %10 {offsets = [0, 96], sizes = [32, 32], strides = [1, 1]} : vector<32x128xf32> to vector<32x32xf32>
    %45 = vector.extract_strided_slice %16 {offsets = [0, 96], sizes = [1, 32], strides = [1, 1]} : vector<1x128xf32> to vector<1x32xf32>
    %46 = vector.extract_strided_slice %10 {offsets = [0, 0], sizes = [32, 64], strides = [1, 1]} : vector<32x128xf32> to vector<32x64xf32>
    %cst_24 = arith.constant dense<0.000000e+00> : vector<16x64xf32>
    %47 = tpu.matmul %43, %46, %cst_24 {dimension_numbers = #tpu.dot_dimension_numbers<[1], [0], [0], [1], [0, 0, 1, 1], [], []>} : vector<16x32xf32>, vector<32x64xf32>, vector<16x64xf32> -> vector<16x64xf32>
    %48 = vector.extract_strided_slice %16 {offsets = [0, 0], sizes = [1, 64], strides = [1, 1]} : vector<1x128xf32> to vector<1x64xf32>
    %49 = vector.broadcast %48 : vector<1x64xf32> to vector<16x64xf32>
    %50 = arith.addf %47, %49 : vector<16x64xf32>
    %51 = vector.extract_strided_slice %50 {offsets = [0, 0], sizes = [16, 32], strides = [1, 1]} : vector<16x64xf32> to vector<16x32xf32>
    %52 = vector.extract_strided_slice %50 {offsets = [0, 32], sizes = [16, 32], strides = [1, 1]} : vector<16x64xf32> to vector<16x32xf32>
    %53 = vector.extract_strided_slice %10 {offsets = [0, 64], sizes = [32, 32], strides = [1, 1]} : vector<32x128xf32> to vector<32x32xf32>
    %cst_25 = arith.constant dense<0.000000e+00> : vector<16x32xf32>
    %54 = tpu.matmul %42, %53, %cst_25 {dimension_numbers = #tpu.dot_dimension_numbers<[1], [0], [0], [1], [0, 0, 1, 1], [], []>} : vector<16x32xf32>, vector<32x32xf32>, vector<16x32xf32> -> vector<16x32xf32>
    %55 = vector.extract_strided_slice %16 {offsets = [0, 64], sizes = [1, 32], strides = [1, 1]} : vector<1x128xf32> to vector<1x32xf32>
    %56 = vector.broadcast %55 : vector<1x32xf32> to vector<16x32xf32>
    %57 = arith.addf %54, %56 : vector<16x32xf32>
    %58 = tpu.transpose %52, [1, 0] : vector<16x32xf32> -> vector<32x16xf32>
    %cst_26 = arith.constant 0.000000e+00 : f32
    %59 = vector.broadcast %cst_26 : f32 to vector<16x32xf32>
    %60 = vector.extract_strided_slice %51 {offsets = [0, 0], sizes = [16, 8], strides = [1, 1]} : vector<16x32xf32> to vector<16x8xf32>
    %61 = vector.extract_strided_slice %58 {offsets = [0, 0], sizes = [8, 16], strides = [1, 1]} : vector<32x16xf32> to vector<8x16xf32>
    %cst_27 = arith.constant dense<0.000000e+00> : vector<16x16xf32>
    %62 = tpu.matmul %60, %61, %cst_27 {dimension_numbers = #tpu.dot_dimension_numbers<[1], [0], [0], [1], [0, 0, 1, 1], [], []>} : vector<16x8xf32>, vector<8x16xf32>, vector<16x16xf32> -> vector<16x16xf32>
    %cst_28 = arith.constant 0.353553385 : f32
    %63 = vector.broadcast %cst_28 : f32 to vector<16x16xf32>
    %64 = arith.mulf %62, %63 : vector<16x16xf32>
    %65 = math.exp %64 : vector<16x16xf32>
    %cst_29 = arith.constant 0.000000e+00 : f32
    %66 = vector.broadcast %cst_29 : f32 to vector<16x16xf32>
    %67 = arith.select %6, %65, %66 : vector<16x16xi1>, vector<16x16xf32>
    %cst_30 = arith.constant dense<0.000000e+00> : vector<16xf32>
    %68 = vector.multi_reduction <add>, %67, %cst_30 [1] : vector<16x16xf32> to vector<16xf32>
    %69 = vector.shape_cast %68 : vector<16xf32> to vector<16x1xf32>
    %70 = tpu.reciprocal %69 {approx = true} : vector<16x1xf32> -> vector<16x1xf32>
    %71 = vector.broadcast %70 : vector<16x1xf32> to vector<16x16xf32>
    %72 = arith.mulf %67, %71 : vector<16x16xf32>
    %73 = vector.extract_strided_slice %57 {offsets = [0, 0], sizes = [16, 8], strides = [1, 1]} : vector<16x32xf32> to vector<16x8xf32>
    %cst_31 = arith.constant dense<0.000000e+00> : vector<16x8xf32>
    %74 = tpu.matmul %72, %73, %cst_31 {dimension_numbers = #tpu.dot_dimension_numbers<[1], [0], [0], [1], [0, 0, 1, 1], [], []>} : vector<16x16xf32>, vector<16x8xf32>, vector<16x8xf32> -> vector<16x8xf32>
    %75 = vector.extract_strided_slice %44 {offsets = [0, 0], sizes = [8, 32], strides = [1, 1]} : vector<32x32xf32> to vector<8x32xf32>
    %cst_32 = arith.constant dense<0.000000e+00> : vector<16x32xf32>
    %76 = tpu.matmul %74, %75, %cst_32 {dimension_numbers = #tpu.dot_dimension_numbers<[1], [0], [0], [1], [0, 0, 1, 1], [], []>} : vector<16x8xf32>, vector<8x32xf32>, vector<16x32xf32> -> vector<16x32xf32>
    %77 = arith.addf %59, %76 : vector<16x32xf32>
    %78 = vector.extract_strided_slice %51 {offsets = [0, 8], sizes = [16, 8], strides = [1, 1]} : vector<16x32xf32> to vector<16x8xf32>
    %79 = vector.extract_strided_slice %58 {offsets = [8, 0], sizes = [8, 16], strides = [1, 1]} : vector<32x16xf32> to vector<8x16xf32>
    %cst_33 = arith.constant dense<0.000000e+00> : vector<16x16xf32>
    %80 = tpu.matmul %78, %79, %cst_33 {dimension_numbers = #tpu.dot_dimension_numbers<[1], [0], [0], [1], [0, 0, 1, 1], [], []>} : vector<16x8xf32>, vector<8x16xf32>, vector<16x16xf32> -> vector<16x16xf32>
    %cst_34 = arith.constant 0.353553385 : f32
    %81 = vector.broadcast %cst_34 : f32 to vector<16x16xf32>
    %82 = arith.mulf %80, %81 : vector<16x16xf32>
    %83 = math.exp %82 : vector<16x16xf32>
    %cst_35 = arith.constant 0.000000e+00 : f32
    %84 = vector.broadcast %cst_35 : f32 to vector<16x16xf32>
    %85 = arith.select %6, %83, %84 : vector<16x16xi1>, vector<16x16xf32>
    %cst_36 = arith.constant dense<0.000000e+00> : vector<16xf32>
    %86 = vector.multi_reduction <add>, %85, %cst_36 [1] : vector<16x16xf32> to vector<16xf32>
    %87 = vector.shape_cast %86 : vector<16xf32> to vector<16x1xf32>
    %88 = tpu.reciprocal %87 {approx = true} : vector<16x1xf32> -> vector<16x1xf32>
    %89 = vector.broadcast %88 : vector<16x1xf32> to vector<16x16xf32>
    %90 = arith.mulf %85, %89 : vector<16x16xf32>
    %91 = vector.extract_strided_slice %57 {offsets = [0, 8], sizes = [16, 8], strides = [1, 1]} : vector<16x32xf32> to vector<16x8xf32>
    %cst_37 = arith.constant dense<0.000000e+00> : vector<16x8xf32>
    %92 = tpu.matmul %90, %91, %cst_37 {dimension_numbers = #tpu.dot_dimension_numbers<[1], [0], [0], [1], [0, 0, 1, 1], [], []>} : vector<16x16xf32>, vector<16x8xf32>, vector<16x8xf32> -> vector<16x8xf32>
    %93 = vector.extract_strided_slice %44 {offsets = [8, 0], sizes = [8, 32], strides = [1, 1]} : vector<32x32xf32> to vector<8x32xf32>
    %cst_38 = arith.constant dense<0.000000e+00> : vector<16x32xf32>
    %94 = tpu.matmul %92, %93, %cst_38 {dimension_numbers = #tpu.dot_dimension_numbers<[1], [0], [0], [1], [0, 0, 1, 1], [], []>} : vector<16x8xf32>, vector<8x32xf32>, vector<16x32xf32> -> vector<16x32xf32>
    %95 = arith.addf %77, %94 : vector<16x32xf32>
    %96 = vector.extract_strided_slice %51 {offsets = [0, 16], sizes = [16, 8], strides = [1, 1]} : vector<16x32xf32> to vector<16x8xf32>
    %97 = vector.extract_strided_slice %58 {offsets = [16, 0], sizes = [8, 16], strides = [1, 1]} : vector<32x16xf32> to vector<8x16xf32>
    %cst_39 = arith.constant dense<0.000000e+00> : vector<16x16xf32>
    %98 = tpu.matmul %96, %97, %cst_39 {dimension_numbers = #tpu.dot_dimension_numbers<[1], [0], [0], [1], [0, 0, 1, 1], [], []>} : vector<16x8xf32>, vector<8x16xf32>, vector<16x16xf32> -> vector<16x16xf32>
    %cst_40 = arith.constant 0.353553385 : f32
    %99 = vector.broadcast %cst_40 : f32 to vector<16x16xf32>
    %100 = arith.mulf %98, %99 : vector<16x16xf32>
    %101 = math.exp %100 : vector<16x16xf32>
    %cst_41 = arith.constant 0.000000e+00 : f32
    %102 = vector.broadcast %cst_41 : f32 to vector<16x16xf32>
    %103 = arith.select %6, %101, %102 : vector<16x16xi1>, vector<16x16xf32>
    %cst_42 = arith.constant dense<0.000000e+00> : vector<16xf32>
    %104 = vector.multi_reduction <add>, %103, %cst_42 [1] : vector<16x16xf32> to vector<16xf32>
    %105 = vector.shape_cast %104 : vector<16xf32> to vector<16x1xf32>
    %106 = tpu.reciprocal %105 {approx = true} : vector<16x1xf32> -> vector<16x1xf32>
    %107 = vector.broadcast %106 : vector<16x1xf32> to vector<16x16xf32>
    %108 = arith.mulf %103, %107 : vector<16x16xf32>
    %109 = vector.extract_strided_slice %57 {offsets = [0, 16], sizes = [16, 8], strides = [1, 1]} : vector<16x32xf32> to vector<16x8xf32>
    %cst_43 = arith.constant dense<0.000000e+00> : vector<16x8xf32>
    %110 = tpu.matmul %108, %109, %cst_43 {dimension_numbers = #tpu.dot_dimension_numbers<[1], [0], [0], [1], [0, 0, 1, 1], [], []>} : vector<16x16xf32>, vector<16x8xf32>, vector<16x8xf32> -> vector<16x8xf32>
    %111 = vector.extract_strided_slice %44 {offsets = [16, 0], sizes = [8, 32], strides = [1, 1]} : vector<32x32xf32> to vector<8x32xf32>
    %cst_44 = arith.constant dense<0.000000e+00> : vector<16x32xf32>
    %112 = tpu.matmul %110, %111, %cst_44 {dimension_numbers = #tpu.dot_dimension_numbers<[1], [0], [0], [1], [0, 0, 1, 1], [], []>} : vector<16x8xf32>, vector<8x32xf32>, vector<16x32xf32> -> vector<16x32xf32>
    %113 = arith.addf %95, %112 : vector<16x32xf32>
    %114 = vector.extract_strided_slice %51 {offsets = [0, 24], sizes = [16, 8], strides = [1, 1]} : vector<16x32xf32> to vector<16x8xf32>
    %115 = vector.extract_strided_slice %58 {offsets = [24, 0], sizes = [8, 16], strides = [1, 1]} : vector<32x16xf32> to vector<8x16xf32>
    %cst_45 = arith.constant dense<0.000000e+00> : vector<16x16xf32>
    %116 = tpu.matmul %114, %115, %cst_45 {dimension_numbers = #tpu.dot_dimension_numbers<[1], [0], [0], [1], [0, 0, 1, 1], [], []>} : vector<16x8xf32>, vector<8x16xf32>, vector<16x16xf32> -> vector<16x16xf32>
    %cst_46 = arith.constant 0.353553385 : f32
    %117 = vector.broadcast %cst_46 : f32 to vector<16x16xf32>
    %118 = arith.mulf %116, %117 : vector<16x16xf32>
    %119 = math.exp %118 : vector<16x16xf32>
    %cst_47 = arith.constant 0.000000e+00 : f32
    %120 = vector.broadcast %cst_47 : f32 to vector<16x16xf32>
    %121 = arith.select %6, %119, %120 : vector<16x16xi1>, vector<16x16xf32>
    %cst_48 = arith.constant dense<0.000000e+00> : vector<16xf32>
    %122 = vector.multi_reduction <add>, %121, %cst_48 [1] : vector<16x16xf32> to vector<16xf32>
    %123 = vector.shape_cast %122 : vector<16xf32> to vector<16x1xf32>
    %124 = tpu.reciprocal %123 {approx = true} : vector<16x1xf32> -> vector<16x1xf32>
    %125 = vector.broadcast %124 : vector<16x1xf32> to vector<16x16xf32>
    %126 = arith.mulf %121, %125 : vector<16x16xf32>
    %127 = vector.extract_strided_slice %57 {offsets = [0, 24], sizes = [16, 8], strides = [1, 1]} : vector<16x32xf32> to vector<16x8xf32>
    %cst_49 = arith.constant dense<0.000000e+00> : vector<16x8xf32>
    %128 = tpu.matmul %126, %127, %cst_49 {dimension_numbers = #tpu.dot_dimension_numbers<[1], [0], [0], [1], [0, 0, 1, 1], [], []>} : vector<16x16xf32>, vector<16x8xf32>, vector<16x8xf32> -> vector<16x8xf32>
    %129 = vector.extract_strided_slice %44 {offsets = [24, 0], sizes = [8, 32], strides = [1, 1]} : vector<32x32xf32> to vector<8x32xf32>
    %cst_50 = arith.constant dense<0.000000e+00> : vector<16x32xf32>
    %130 = tpu.matmul %128, %129, %cst_50 {dimension_numbers = #tpu.dot_dimension_numbers<[1], [0], [0], [1], [0, 0, 1, 1], [], []>} : vector<16x8xf32>, vector<8x32xf32>, vector<16x32xf32> -> vector<16x32xf32>
    %131 = arith.addf %113, %130 : vector<16x32xf32>
    %132 = vector.broadcast %45 : vector<1x32xf32> to vector<16x32xf32>
    %133 = arith.addf %131, %132 : vector<16x32xf32>
    %134 = arith.addf %0, %133 : vector<16x32xf32>
    %135 = vector.extract_strided_slice %15 {offsets = [2, 0], sizes = [1, 32], strides = [1, 1]} : vector<6x32xf32> to vector<1x32xf32>
    %136 = vector.extract_strided_slice %15 {offsets = [3, 0], sizes = [1, 32], strides = [1, 1]} : vector<6x32xf32> to vector<1x32xf32>
    %cst_51 = arith.constant dense<0.000000e+00> : vector<16xf32>
    %137 = vector.multi_reduction <add>, %134, %cst_51 [1] : vector<16x32xf32> to vector<16xf32>
    %138 = vector.shape_cast %137 : vector<16xf32> to vector<16x1xf32>
    %cst_52 = arith.constant 3.200000e+01 : f32
    %139 = vector.broadcast %cst_52 : f32 to vector<16x1xf32>
    %140 = arith.divf %138, %139 : vector<16x1xf32>
    %141 = vector.broadcast %140 : vector<16x1xf32> to vector<16x32xf32>
    %142 = arith.subf %134, %141 : vector<16x32xf32>
    %143 = arith.mulf %142, %142 : vector<16x32xf32>
    %cst_53 = arith.constant dense<0.000000e+00> : vector<16xf32>
    %144 = vector.multi_reduction <add>, %143, %cst_53 [1] : vector<16x32xf32> to vector<16xf32>
    %145 = vector.shape_cast %144 : vector<16xf32> to vector<16x1xf32>
    %cst_54 = arith.constant 3.100000e+01 : f32
    %146 = vector.broadcast %cst_54 : f32 to vector<16x1xf32>
    %147 = arith.divf %145, %146 : vector<16x1xf32>
    %148 = math.sqrt %147 : vector<16x1xf32>
    %cst_55 = arith.constant 9.99999997E-7 : f32
    %149 = vector.broadcast %cst_55 : f32 to vector<16x1xf32>
    %150 = arith.addf %148, %149 : vector<16x1xf32>
    %151 = tpu.reciprocal %150 {approx = true} : vector<16x1xf32> -> vector<16x1xf32>
    %152 = vector.broadcast %151 : vector<16x1xf32> to vector<16x32xf32>
    %153 = arith.mulf %142, %152 : vector<16x32xf32>
    %154 = vector.broadcast %135 : vector<1x32xf32> to vector<16x32xf32>
    %155 = arith.mulf %154, %153 : vector<16x32xf32>
    %156 = vector.broadcast %136 : vector<1x32xf32> to vector<16x32xf32>
    %157 = arith.addf %155, %156 : vector<16x32xf32>
    %158 = arith.addf %157, %1 : vector<16x32xf32>
    %159 = arith.addf %2, %3 : vector<32x32xf32>
    %160 = vector.extract_strided_slice %11 {offsets = [0, 96], sizes = [32, 32], strides = [1, 1]} : vector<32x128xf32> to vector<32x32xf32>
    %161 = vector.extract_strided_slice %17 {offsets = [0, 96], sizes = [1, 32], strides = [1, 1]} : vector<1x128xf32> to vector<1x32xf32>
    %162 = vector.extract_strided_slice %11 {offsets = [0, 0], sizes = [32, 32], strides = [1, 1]} : vector<32x128xf32> to vector<32x32xf32>
    %cst_56 = arith.constant dense<0.000000e+00> : vector<16x32xf32>
    %163 = tpu.matmul %158, %162, %cst_56 {dimension_numbers = #tpu.dot_dimension_numbers<[1], [0], [0], [1], [0, 0, 1, 1], [], []>} : vector<16x32xf32>, vector<32x32xf32>, vector<16x32xf32> -> vector<16x32xf32>
    %164 = vector.extract_strided_slice %17 {offsets = [0, 0], sizes = [1, 32], strides = [1, 1]} : vector<1x128xf32> to vector<1x32xf32>
    %165 = vector.broadcast %164 : vector<1x32xf32> to vector<16x32xf32>
    %166 = arith.addf %163, %165 : vector<16x32xf32>
    %167 = vector.extract_strided_slice %11 {offsets = [0, 32], sizes = [32, 32], strides = [1, 1]} : vector<32x128xf32> to vector<32x32xf32>
    %cst_57 = arith.constant dense<0.000000e+00> : vector<32x32xf32>
    %168 = tpu.matmul %159, %167, %cst_57 {dimension_numbers = #tpu.dot_dimension_numbers<[1], [0], [0], [1], [0, 0, 1, 1], [], []>} : vector<32x32xf32>, vector<32x32xf32>, vector<32x32xf32> -> vector<32x32xf32>
    %169 = vector.extract_strided_slice %17 {offsets = [0, 32], sizes = [1, 32], strides = [1, 1]} : vector<1x128xf32> to vector<1x32xf32>
    %170 = vector.broadcast %169 : vector<1x32xf32> to vector<32x32xf32>
    %171 = arith.addf %168, %170 : vector<32x32xf32>
    %172 = vector.extract_strided_slice %11 {offsets = [0, 64], sizes = [32, 32], strides = [1, 1]} : vector<32x128xf32> to vector<32x32xf32>
    %cst_58 = arith.constant dense<0.000000e+00> : vector<32x32xf32>
    %173 = tpu.matmul %2, %172, %cst_58 {dimension_numbers = #tpu.dot_dimension_numbers<[1], [0], [0], [1], [0, 0, 1, 1], [], []>} : vector<32x32xf32>, vector<32x32xf32>, vector<32x32xf32> -> vector<32x32xf32>
    %174 = vector.extract_strided_slice %17 {offsets = [0, 64], sizes = [1, 32], strides = [1, 1]} : vector<1x128xf32> to vector<1x32xf32>
    %175 = vector.broadcast %174 : vector<1x32xf32> to vector<32x32xf32>
    %176 = arith.addf %173, %175 : vector<32x32xf32>
    %177 = tpu.transpose %171, [1, 0] : vector<32x32xf32> -> vector<32x32xf32>
    %cst_59 = arith.constant 0.000000e+00 : f32
    %178 = vector.broadcast %cst_59 : f32 to vector<16x32xf32>
    %179 = vector.extract_strided_slice %166 {offsets = [0, 0], sizes = [16, 8], strides = [1, 1]} : vector<16x32xf32> to vector<16x8xf32>
    %180 = vector.extract_strided_slice %177 {offsets = [0, 0], sizes = [8, 32], strides = [1, 1]} : vector<32x32xf32> to vector<8x32xf32>
    %cst_60 = arith.constant dense<0.000000e+00> : vector<16x32xf32>
    %181 = tpu.matmul %179, %180, %cst_60 {dimension_numbers = #tpu.dot_dimension_numbers<[1], [0], [0], [1], [0, 0, 1, 1], [], []>} : vector<16x8xf32>, vector<8x32xf32>, vector<16x32xf32> -> vector<16x32xf32>
    %cst_61 = arith.constant 0.353553385 : f32
    %182 = vector.broadcast %cst_61 : f32 to vector<16x32xf32>
    %183 = arith.mulf %181, %182 : vector<16x32xf32>
    %184 = math.exp %183 : vector<16x32xf32>
    %cst_62 = arith.constant 0.000000e+00 : f32
    %185 = vector.broadcast %cst_62 : f32 to vector<16x32xf32>
    %186 = arith.select %9, %184, %185 : vector<16x32xi1>, vector<16x32xf32>
    %cst_63 = arith.constant dense<0.000000e+00> : vector<16xf32>
    %187 = vector.multi_reduction <add>, %186, %cst_63 [1] : vector<16x32xf32> to vector<16xf32>
    %188 = vector.shape_cast %187 : vector<16xf32> to vector<16x1xf32>
    %189 = tpu.reciprocal %188 {approx = true} : vector<16x1xf32> -> vector<16x1xf32>
    %190 = vector.broadcast %189 : vector<16x1xf32> to vector<16x32xf32>
    %191 = arith.mulf %186, %190 : vector<16x32xf32>
    %192 = vector.extract_strided_slice %176 {offsets = [0, 0], sizes = [32, 8], strides = [1, 1]} : vector<32x32xf32> to vector<32x8xf32>
    %cst_64 = arith.constant dense<0.000000e+00> : vector<16x8xf32>
    %193 = tpu.matmul %191, %192, %cst_64 {dimension_numbers = #tpu.dot_dimension_numbers<[1], [0], [0], [1], [0, 0, 1, 1], [], []>} : vector<16x32xf32>, vector<32x8xf32>, vector<16x8xf32> -> vector<16x8xf32>
    %194 = vector.extract_strided_slice %160 {offsets = [0, 0], sizes = [8, 32], strides = [1, 1]} : vector<32x32xf32> to vector<8x32xf32>
    %cst_65 = arith.constant dense<0.000000e+00> : vector<16x32xf32>
    %195 = tpu.matmul %193, %194, %cst_65 {dimension_numbers = #tpu.dot_dimension_numbers<[1], [0], [0], [1], [0, 0, 1, 1], [], []>} : vector<16x8xf32>, vector<8x32xf32>, vector<16x32xf32> -> vector<16x32xf32>
    %196 = arith.addf %178, %195 : vector<16x32xf32>
    %197 = vector.extract_strided_slice %166 {offsets = [0, 8], sizes = [16, 8], strides = [1, 1]} : vector<16x32xf32> to vector<16x8xf32>
    %198 = vector.extract_strided_slice %177 {offsets = [8, 0], sizes = [8, 32], strides = [1, 1]} : vector<32x32xf32> to vector<8x32xf32>
    %cst_66 = arith.constant dense<0.000000e+00> : vector<16x32xf32>
    %199 = tpu.matmul %197, %198, %cst_66 {dimension_numbers = #tpu.dot_dimension_numbers<[1], [0], [0], [1], [0, 0, 1, 1], [], []>} : vector<16x8xf32>, vector<8x32xf32>, vector<16x32xf32> -> vector<16x32xf32>
    %cst_67 = arith.constant 0.353553385 : f32
    %200 = vector.broadcast %cst_67 : f32 to vector<16x32xf32>
    %201 = arith.mulf %199, %200 : vector<16x32xf32>
    %202 = math.exp %201 : vector<16x32xf32>
    %cst_68 = arith.constant 0.000000e+00 : f32
    %203 = vector.broadcast %cst_68 : f32 to vector<16x32xf32>
    %204 = arith.select %9, %202, %203 : vector<16x32xi1>, vector<16x32xf32>
    %cst_69 = arith.constant dense<0.000000e+00> : vector<16xf32>
    %205 = vector.multi_reduction <add>, %204, %cst_69 [1] : vector<16x32xf32> to vector<16xf32>
    %206 = vector.shape_cast %205 : vector<16xf32> to vector<16x1xf32>
    %207 = tpu.reciprocal %206 {approx = true} : vector<16x1xf32> -> vector<16x1xf32>
    %208 = vector.broadcast %207 : vector<16x1xf32> to vector<16x32xf32>
    %209 = arith.mulf %204, %208 : vector<16x32xf32>
    %210 = vector.extract_strided_slice %176 {offsets = [0, 8], sizes = [32, 8], strides = [1, 1]} : vector<32x32xf32> to vector<32x8xf32>
    %cst_70 = arith.constant dense<0.000000e+00> : vector<16x8xf32>
    %211 = tpu.matmul %209, %210, %cst_70 {dimension_numbers = #tpu.dot_dimension_numbers<[1], [0], [0], [1], [0, 0, 1, 1], [], []>} : vector<16x32xf32>, vector<32x8xf32>, vector<16x8xf32> -> vector<16x8xf32>
    %212 = vector.extract_strided_slice %160 {offsets = [8, 0], sizes = [8, 32], strides = [1, 1]} : vector<32x32xf32> to vector<8x32xf32>
    %cst_71 = arith.constant dense<0.000000e+00> : vector<16x32xf32>
    %213 = tpu.matmul %211, %212, %cst_71 {dimension_numbers = #tpu.dot_dimension_numbers<[1], [0], [0], [1], [0, 0, 1, 1], [], []>} : vector<16x8xf32>, vector<8x32xf32>, vector<16x32xf32> -> vector<16x32xf32>
    %214 = arith.addf %196, %213 : vector<16x32xf32>
    %215 = vector.extract_strided_slice %166 {offsets = [0, 16], sizes = [16, 8], strides = [1, 1]} : vector<16x32xf32> to vector<16x8xf32>
    %216 = vector.extract_strided_slice %177 {offsets = [16, 0], sizes = [8, 32], strides = [1, 1]} : vector<32x32xf32> to vector<8x32xf32>
    %cst_72 = arith.constant dense<0.000000e+00> : vector<16x32xf32>
    %217 = tpu.matmul %215, %216, %cst_72 {dimension_numbers = #tpu.dot_dimension_numbers<[1], [0], [0], [1], [0, 0, 1, 1], [], []>} : vector<16x8xf32>, vector<8x32xf32>, vector<16x32xf32> -> vector<16x32xf32>
    %cst_73 = arith.constant 0.353553385 : f32
    %218 = vector.broadcast %cst_73 : f32 to vector<16x32xf32>
    %219 = arith.mulf %217, %218 : vector<16x32xf32>
    %220 = math.exp %219 : vector<16x32xf32>
    %cst_74 = arith.constant 0.000000e+00 : f32
    %221 = vector.broadcast %cst_74 : f32 to vector<16x32xf32>
    %222 = arith.select %9, %220, %221 : vector<16x32xi1>, vector<16x32xf32>
    %cst_75 = arith.constant dense<0.000000e+00> : vector<16xf32>
    %223 = vector.multi_reduction <add>, %222, %cst_75 [1] : vector<16x32xf32> to vector<16xf32>
    %224 = vector.shape_cast %223 : vector<16xf32> to vector<16x1xf32>
    %225 = tpu.reciprocal %224 {approx = true} : vector<16x1xf32> -> vector<16x1xf32>
    %226 = vector.broadcast %225 : vector<16x1xf32> to vector<16x32xf32>
    %227 = arith.mulf %222, %226 : vector<16x32xf32>
    %228 = vector.extract_strided_slice %176 {offsets = [0, 16], sizes = [32, 8], strides = [1, 1]} : vector<32x32xf32> to vector<32x8xf32>
    %cst_76 = arith.constant dense<0.000000e+00> : vector<16x8xf32>
    %229 = tpu.matmul %227, %228, %cst_76 {dimension_numbers = #tpu.dot_dimension_numbers<[1], [0], [0], [1], [0, 0, 1, 1], [], []>} : vector<16x32xf32>, vector<32x8xf32>, vector<16x8xf32> -> vector<16x8xf32>
    %230 = vector.extract_strided_slice %160 {offsets = [16, 0], sizes = [8, 32], strides = [1, 1]} : vector<32x32xf32> to vector<8x32xf32>
    %cst_77 = arith.constant dense<0.000000e+00> : vector<16x32xf32>
    %231 = tpu.matmul %229, %230, %cst_77 {dimension_numbers = #tpu.dot_dimension_numbers<[1], [0], [0], [1], [0, 0, 1, 1], [], []>} : vector<16x8xf32>, vector<8x32xf32>, vector<16x32xf32> -> vector<16x32xf32>
    %232 = arith.addf %214, %231 : vector<16x32xf32>
    %233 = vector.extract_strided_slice %166 {offsets = [0, 24], sizes = [16, 8], strides = [1, 1]} : vector<16x32xf32> to vector<16x8xf32>
    %234 = vector.extract_strided_slice %177 {offsets = [24, 0], sizes = [8, 32], strides = [1, 1]} : vector<32x32xf32> to vector<8x32xf32>
    %cst_78 = arith.constant dense<0.000000e+00> : vector<16x32xf32>
    %235 = tpu.matmul %233, %234, %cst_78 {dimension_numbers = #tpu.dot_dimension_numbers<[1], [0], [0], [1], [0, 0, 1, 1], [], []>} : vector<16x8xf32>, vector<8x32xf32>, vector<16x32xf32> -> vector<16x32xf32>
    %cst_79 = arith.constant 0.353553385 : f32
    %236 = vector.broadcast %cst_79 : f32 to vector<16x32xf32>
    %237 = arith.mulf %235, %236 : vector<16x32xf32>
    %238 = math.exp %237 : vector<16x32xf32>
    %cst_80 = arith.constant 0.000000e+00 : f32
    %239 = vector.broadcast %cst_80 : f32 to vector<16x32xf32>
    %240 = arith.select %9, %238, %239 : vector<16x32xi1>, vector<16x32xf32>
    %cst_81 = arith.constant dense<0.000000e+00> : vector<16xf32>
    %241 = vector.multi_reduction <add>, %240, %cst_81 [1] : vector<16x32xf32> to vector<16xf32>
    %242 = vector.shape_cast %241 : vector<16xf32> to vector<16x1xf32>
    %243 = tpu.reciprocal %242 {approx = true} : vector<16x1xf32> -> vector<16x1xf32>
    %244 = vector.broadcast %243 : vector<16x1xf32> to vector<16x32xf32>
    %245 = arith.mulf %240, %244 : vector<16x32xf32>
    %246 = vector.extract_strided_slice %176 {offsets = [0, 24], sizes = [32, 8], strides = [1, 1]} : vector<32x32xf32> to vector<32x8xf32>
    %cst_82 = arith.constant dense<0.000000e+00> : vector<16x8xf32>
    %247 = tpu.matmul %245, %246, %cst_82 {dimension_numbers = #tpu.dot_dimension_numbers<[1], [0], [0], [1], [0, 0, 1, 1], [], []>} : vector<16x32xf32>, vector<32x8xf32>, vector<16x8xf32> -> vector<16x8xf32>
    %248 = vector.extract_strided_slice %160 {offsets = [24, 0], sizes = [8, 32], strides = [1, 1]} : vector<32x32xf32> to vector<8x32xf32>
    %cst_83 = arith.constant dense<0.000000e+00> : vector<16x32xf32>
    %249 = tpu.matmul %247, %248, %cst_83 {dimension_numbers = #tpu.dot_dimension_numbers<[1], [0], [0], [1], [0, 0, 1, 1], [], []>} : vector<16x8xf32>, vector<8x32xf32>, vector<16x32xf32> -> vector<16x32xf32>
    %250 = arith.addf %232, %249 : vector<16x32xf32>
    %251 = vector.broadcast %161 : vector<1x32xf32> to vector<16x32xf32>
    %252 = arith.addf %250, %251 : vector<16x32xf32>
    %253 = arith.addf %134, %252 : vector<16x32xf32>
    %254 = vector.extract_strided_slice %15 {offsets = [4, 0], sizes = [1, 32], strides = [1, 1]} : vector<6x32xf32> to vector<1x32xf32>
    %255 = vector.extract_strided_slice %15 {offsets = [5, 0], sizes = [1, 32], strides = [1, 1]} : vector<6x32xf32> to vector<1x32xf32>
    %cst_84 = arith.constant dense<0.000000e+00> : vector<16xf32>
    %256 = vector.multi_reduction <add>, %253, %cst_84 [1] : vector<16x32xf32> to vector<16xf32>
    %257 = vector.shape_cast %256 : vector<16xf32> to vector<16x1xf32>
    %cst_85 = arith.constant 3.200000e+01 : f32
    %258 = vector.broadcast %cst_85 : f32 to vector<16x1xf32>
    %259 = arith.divf %257, %258 : vector<16x1xf32>
    %260 = vector.broadcast %259 : vector<16x1xf32> to vector<16x32xf32>
    %261 = arith.subf %253, %260 : vector<16x32xf32>
    %262 = arith.mulf %261, %261 : vector<16x32xf32>
    %cst_86 = arith.constant dense<0.000000e+00> : vector<16xf32>
    %263 = vector.multi_reduction <add>, %262, %cst_86 [1] : vector<16x32xf32> to vector<16xf32>
    %264 = vector.shape_cast %263 : vector<16xf32> to vector<16x1xf32>
    %cst_87 = arith.constant 3.100000e+01 : f32
    %265 = vector.broadcast %cst_87 : f32 to vector<16x1xf32>
    %266 = arith.divf %264, %265 : vector<16x1xf32>
    %267 = math.sqrt %266 : vector<16x1xf32>
    %cst_88 = arith.constant 9.99999997E-7 : f32
    %268 = vector.broadcast %cst_88 : f32 to vector<16x1xf32>
    %269 = arith.addf %267, %268 : vector<16x1xf32>
    %270 = tpu.reciprocal %269 {approx = true} : vector<16x1xf32> -> vector<16x1xf32>
    %271 = vector.broadcast %270 : vector<16x1xf32> to vector<16x32xf32>
    %272 = arith.mulf %261, %271 : vector<16x32xf32>
    %273 = vector.broadcast %254 : vector<1x32xf32> to vector<16x32xf32>
    %274 = arith.mulf %273, %272 : vector<16x32xf32>
    %275 = vector.broadcast %255 : vector<1x32xf32> to vector<16x32xf32>
    %276 = arith.addf %274, %275 : vector<16x32xf32>
    %cst_89 = arith.constant dense<0.000000e+00> : vector<16x64xf32>
    %277 = tpu.matmul %276, %12, %cst_89 {dimension_numbers = #tpu.dot_dimension_numbers<[1], [0], [0], [1], [0, 0, 1, 1], [], []>} : vector<16x32xf32>, vector<32x64xf32>, vector<16x64xf32> -> vector<16x64xf32>
    %278 = vector.broadcast %18 : vector<1x64xf32> to vector<16x64xf32>
    %279 = arith.addf %277, %278 : vector<16x64xf32>
    %cst_90 = arith.constant 0.000000e+00 : f32
    %280 = vector.broadcast %cst_90 : f32 to vector<16x64xf32>
    %281 = arith.maximumf %279, %280 : vector<16x64xf32>
    %cst_91 = arith.constant dense<0.000000e+00> : vector<16x32xf32>
    %282 = tpu.matmul %281, %13, %cst_91 {dimension_numbers = #tpu.dot_dimension_numbers<[1], [0], [0], [1], [0, 0, 1, 1], [], []>} : vector<16x64xf32>, vector<64x32xf32>, vector<16x32xf32> -> vector<16x32xf32>
    %283 = arith.addf %253, %282 : vector<16x32xf32>
    %284 = vector.broadcast %19 : vector<1x32xf32> to vector<16x32xf32>
    %285 = arith.addf %283, %284 : vector<16x32xf32>
    %c0_92 = arith.constant 0 : index
    %c0_93 = arith.constant 0 : index
    %286 = vector.load %arg9[%c0_92, %c0_93] : memref<16x32xf32, #tpu.memory_space<vmem>>, vector<16x32xf32>
    tpu.vector_store %arg9[%c0_92, %c0_93], %285 {strides = array<i32>} : memref<16x32xf32, #tpu.memory_space<vmem>>, vector<16x32xf32>,
    return
  }
  func.func @transform_0(%arg0: i32) -> (i32, i32) {
    %c0_i32 = arith.constant 0 : i32
    %c0_i32_0 = arith.constant 0 : i32
    %c0_i32_1 = arith.constant 0 : i32
    return %c0_i32, %c0_i32_0 : i32, i32
  }
  func.func @transform_1(%arg0: i32) -> (i32, i32) {
    %c0_i32 = arith.constant 0 : i32
    %c0_i32_0 = arith.constant 0 : i32
    %c0_i32_1 = arith.constant 0 : i32
    return %c0_i32, %c0_i32_0 : i32, i32
  }
  func.func @transform_2(%arg0: i32) -> (i32, i32) {
    %c0_i32 = arith.constant 0 : i32
    %c0_i32_0 = arith.constant 0 : i32
    %c0_i32_1 = arith.constant 0 : i32
    return %c0_i32, %c0_i32_0 : i32, i32
  }
  func.func @transform_3(%arg0: i32) -> (i32, i32) {
    %c0_i32 = arith.constant 0 : i32
    %c0_i32_0 = arith.constant 0 : i32
    %c0_i32_1 = arith.constant 0 : i32
    return %c0_i32, %c0_i32_0 : i32, i32
  }
  func.func @transform_4(%arg0: i32) -> (i32, i32) {
    %c0_i32 = arith.constant 0 : i32
    %c0_i32_0 = arith.constant 0 : i32
    %c0_i32_1 = arith.constant 0 : i32
    return %c0_i32, %c0_i32_0 : i32, i32
  }
  func.func @transform_5(%arg0: i32) -> (i32, i32) {
    %c0_i32 = arith.constant 0 : i32
    %c0_i32_0 = arith.constant 0 : i32
    %c0_i32_1 = arith.constant 0 : i32
    return %c0_i32, %c0_i32_0 : i32, i32
  }
  func.func @transform_6(%arg0: i32) -> (i32, i32) {
    %c0_i32 = arith.constant 0 : i32
    %c0_i32_0 = arith.constant 0 : i32
    %c0_i32_1 = arith.constant 0 : i32
    return %c0_i32, %c0_i32_0 : i32, i32
  }
  func.func @transform_7(%arg0: i32) -> (i32, i32) {
    %c0_i32 = arith.constant 0 : i32
    %c0_i32_0 = arith.constant 0 : i32
    %c0_i32_1 = arith.constant 0 : i32
    return %c0_i32, %c0_i32_0 : i32, i32
  }
  func.func @transform_8(%arg0: i32) -> (i32, i32) {
    %c0_i32 = arith.constant 0 : i32
    %c0_i32_0 = arith.constant 0 : i32
    %c0_i32_1 = arith.constant 0 : i32
    return %c0_i32, %c0_i32_0 : i32, i32
  }
}

</mosaic_0001>

<llo_original>
// kernel: decoder_layer_pos_embed.1
$region0: #{decoder_layer_pos_embed.1}
  #allocation0 [shape = 'u32[]', space=smem, size = 0x4, offset = 0x4, fixed_abs, tag = 'smem constant byte address 0x4 - core index']
  #allocation1 [shape = 'u32[144,128]{1,0:T(1,128)}', space=vmem, size = 0x12000, scoped, tag = 'internal scratch']
  %s0 = inlined_call_operand.vmem [shape: f32[16,32], index: 0, kind: input, shape index: {}]
  %s1 = inlined_call_operand.vmem [shape: f32[16,32], index: 1, kind: input, shape index: {}]
  %s2 = inlined_call_operand.vmem [shape: f32[32,32], index: 2, kind: input, shape index: {}]
  %s3 = inlined_call_operand.vmem [shape: f32[32,32], index: 3, kind: input, shape index: {}]
  %s4 = inlined_call_operand.vmem [shape: f32[16,16], index: 4, kind: input, shape index: {}]
  %s5 = inlined_call_operand.vmem [shape: f32[16,32], index: 5, kind: input, shape index: {}]
  %s6 = inlined_call_operand.vmem [shape: f32[160,128], index: 6, kind: input, shape index: {}]
  %s7 = inlined_call_operand.vmem [shape: f32[16,128], index: 7, kind: input, shape index: {}]
  %s8 = inlined_call_operand.hbm [shape: f32[16,32], index: 8, kind: output, shape index: {}]
  %s9 = sld [smem:[#allocation0]]
  $region42: #{decoder_layer_pos_embed.1} parent=0
    _
  %s11 = ssub.s32 1, %s9
  %s12 = scalar_select 0, %s11, %s9
  $region1: #{decoder_layer_pos_embed.1} parent=0
    #allocation2 [shape = 'u8[8192]{0}', space=vmem, size = 0x2000, scoped, tag = 'output window, operand 0, single buffered']
    #allocation3 [shape = 's32[1]{0}', space=sflag, size = 0x4, scoped, tag = 'scoped memory for decoder_layer_pos_embed.1']
    %13 = vsyncpa [#allocation3], 0
    // Predicated region
    $region2: #{decoder_layer_pos_embed.1} parent=1 // pred_check
      _
    $region3: #{decoder_layer_pos_embed.1} parent=1 // pred_check_branch
      %15 = sbr.rel (0) target = $region5
    $region4: #{decoder_layer_pos_embed.1} parent=1 // pred_region
      _
    $region5: #{decoder_layer_pos_embed.1} parent=1 // pred_fallthru
      _
    // Predicated region
    $region6: #{decoder_layer_pos_embed.1} parent=1 // pred_check
      _
    $region7: #{decoder_layer_pos_embed.1} parent=1 // pred_check_branch
      %17 = sbr.rel (0) target = $region9
    $region8: #{decoder_layer_pos_embed.1} parent=1 // pred_region
      _
    $region9: #{decoder_layer_pos_embed.1} parent=1 // pred_fallthru
      _
    // Predicated region
    $region10: #{decoder_layer_pos_embed.1} parent=1 // pred_check
      _
    $region11: #{decoder_layer_pos_embed.1} parent=1 // pred_check_branch
      %19 = sbr.rel (0) target = $region13
    $region12: #{decoder_layer_pos_embed.1} parent=1 // pred_region
      _
    $region13: #{decoder_layer_pos_embed.1} parent=1 // pred_fallthru
      _
    // Predicated region
    $region14: #{decoder_layer_pos_embed.1} parent=1 // pred_check
      _
    $region15: #{decoder_layer_pos_embed.1} parent=1 // pred_check_branch
      %21 = sbr.rel (0) target = $region17
    $region16: #{decoder_layer_pos_embed.1} parent=1 // pred_region
      _
    $region17: #{decoder_layer_pos_embed.1} parent=1 // pred_fallthru
      _
    // Predicated region
    $region18: #{decoder_layer_pos_embed.1} parent=1 // pred_check
      _
    $region19: #{decoder_layer_pos_embed.1} parent=1 // pred_check_branch
      %23 = sbr.rel (0) target = $region21
    $region20: #{decoder_layer_pos_embed.1} parent=1 // pred_region
      _
    $region21: #{decoder_layer_pos_embed.1} parent=1 // pred_fallthru
      _
    // Predicated region
    $region22: #{decoder_layer_pos_embed.1} parent=1 // pred_check
      _
    $region23: #{decoder_layer_pos_embed.1} parent=1 // pred_check_branch
      %25 = sbr.rel (0) target = $region25
    $region24: #{decoder_layer_pos_embed.1} parent=1 // pred_region
      _
    $region25: #{decoder_layer_pos_embed.1} parent=1 // pred_fallthru
      _
    // Predicated region
    $region26: #{decoder_layer_pos_embed.1} parent=1 // pred_check
      _
    $region27: #{decoder_layer_pos_embed.1} parent=1 // pred_check_branch
      %27 = sbr.rel (0) target = $region29
    $region28: #{decoder_layer_pos_embed.1} parent=1 // pred_region
      _
    $region29: #{decoder_layer_pos_embed.1} parent=1 // pred_fallthru
      _
    // Predicated region
    $region30: #{decoder_layer_pos_embed.1} parent=1 // pred_check
      _
    $region31: #{decoder_layer_pos_embed.1} parent=1 // pred_check_branch
      %29 = sbr.rel (0) target = $region33
    $region32: #{decoder_layer_pos_embed.1} parent=1 // pred_region
      _
    $region33: #{decoder_layer_pos_embed.1} parent=1 // pred_fallthru
      _
    %v30 = vld [vmem:[%s0] sm:$0xff]
    %v31 = vld [vmem:[%s0 + $0x8] sm:$0xff]
    %v32 = vld [vmem:[%s1] sm:$0xff]
    %v33 = vld [vmem:[%s1 + $0x8] sm:$0xff]
    %v34 = vld [vmem:[%s2] sm:$0xff]
    %v35 = vld [vmem:[%s2 + $0x8] sm:$0xff]
    %v36 = vld [vmem:[%s2 + $0x10] sm:$0xff]
    %v37 = vld [vmem:[%s2 + $0x18] sm:$0xff]
    %v38 = vld [vmem:[%s3] sm:$0xff]
    %v39 = vld [vmem:[%s3 + $0x8] sm:$0xff]
    %v40 = vld [vmem:[%s3 + $0x10] sm:$0xff]
    %v41 = vld [vmem:[%s3 + $0x18] sm:$0xff]
    %v42 = vld [vmem:[%s4] sm:$0xff]
    %v43 = vld [vmem:[%s4 + $0x8] sm:$0xff]
    %vm44 = vcmp.ne.f32.partialorder %v42, 0.0
    %vm45 = vcmp.ne.f32.partialorder %v43, 0.0
    %v46 = vld [vmem:[%s5] sm:$0xff]
    %v47 = vld [vmem:[%s5 + $0x8] sm:$0xff]
    %vm48 = vcmp.ne.f32.partialorder %v46, 0.0
    %vm49 = vcmp.ne.f32.partialorder %v47, 0.0
    %v50 = vld [vmem:[%s6] sm:$0xff]
    %v51 = vld [vmem:[%s6 + $0x8] sm:$0xff]
    %v52 = vld [vmem:[%s6 + $0x10] sm:$0xff]
    %v53 = vld [vmem:[%s6 + $0x18] sm:$0xff]
    %v54 = vld [vmem:[%s6 + $0x20] sm:$0xff]
    %v55 = vld [vmem:[%s6 + $0x28] sm:$0xff]
    %v56 = vld [vmem:[%s6 + $0x30] sm:$0xff]
    %v57 = vld [vmem:[%s6 + $0x38] sm:$0xff]
    %v58 = vld [vmem:[%s6 + $0x40] sm:$0xff]
    %v59 = vld [vmem:[%s6 + $0x48] sm:$0xff]
    %v60 = vld [vmem:[%s6 + $0x50] sm:$0xff]
    %v61 = vld [vmem:[%s6 + $0x58] sm:$0xff]
    %v62 = vld [vmem:[%s6 + $0x60] sm:$0xff]
    %v63 = vld [vmem:[%s6 + $0x68] sm:$0xff]
    %v64 = vld [vmem:[%s6 + $0x70] sm:$0xff]
    %v65 = vld [vmem:[%s6 + $0x78] sm:$0xff]
    %v66 = vld [vmem:[%s6 + $0x80] sm:$0xff]
    %v67 = vld [vmem:[%s6 + $0x88] sm:$0xff]
    %v68 = vld [vmem:[%s6 + $0x90] sm:$0xff]
    %v69 = vld [vmem:[%s6 + $0x98] sm:$0xff]
    %v70 = vld [vmem:[%s7] sm:$0xff]
    %v71 = vld [vmem:[%s7 + $0x8] sm:$0xff]
    %vm72 = vcmask 261120
    %v73 = vsel %vm72, %v30, 0.0
    %74 = vadd.xlane.f32.xlu0 %v73
    %v75 = vpop.xlane.xlu0 %74
    %v76 = vsel %vm72, %v31, 0.0
    %77 = vadd.xlane.f32.xlu0 %v76
    %v78 = vpop.xlane.xlu0 %77
    %v79 = vrcp.pop 32.0
    %v80 = vmul.f32 %v75, %v79
    %v81 = vmul.f32 %v78, %v79
    %v82 = vsub.f32 %v30, %v80
    %v83 = vsub.f32 %v31, %v81
    %v84 = vmul.f32 %v82, %v82
    %v85 = vmul.f32 %v83, %v83
    %v86 = vsel %vm72, %v84, 0.0
    %87 = vadd.xlane.f32.xlu0 %v86
    %v88 = vpop.xlane.xlu0 %87
    %v89 = vsel %vm72, %v85, 0.0
    %90 = vadd.xlane.f32.xlu0 %v89
    %v91 = vpop.xlane.xlu0 %90
    %v92 = vrcp.pop 31.0
    %v93 = vmul.f32 %v88, %v92
    %v94 = vmul.f32 %v91, %v92
    %v95 = vrsqrt.pop %v93
    %v96 = vmul.f32 %v93, %v95
    %vm97 = vcmp.eq.f32.partialorder %v93, inf
    %v98 = vsel %vm97, %v93, %v96
    %vm99 = vcmp.eq.f32.partialorder %v93, 0.0
    %v100 = vand.u32 %v93, 2147483648
    %v101 = vsel %vm99, %v100, %v98
    %v102 = vrsqrt.pop %v94
    %v103 = vmul.f32 %v94, %v102
    %vm104 = vcmp.eq.f32.partialorder %v94, inf
    %v105 = vsel %vm104, %v94, %v103
    %vm106 = vcmp.eq.f32.partialorder %v94, 0.0
    %v107 = vand.u32 %v94, 2147483648
    %v108 = vsel %vm106, %v107, %v105
    %v109 = vadd.f32 %v101, 1e-06
    %v110 = vadd.f32 %v108, 1e-06
    %v111 = vrcp.pop %v109
    %v112 = vrcp.pop %v110
    %v113 = vmul.f32 %v82, %v111
    %v114 = vmul.f32 %v83, %v112
    %v115 = vlaneseq
    %v116 = vshrl.u32 %v115, 7
    %v117 = vsub.s32 0, %v116
    %v118 = vrot.slane %v70, %v117
    %v119 = vmul.f32 %v118, %v113
    %v120 = vmul.f32 %v118, %v114
    %v121 = vlaneseq
    %v122 = vshrl.u32 %v121, 7
    %v123 = vsub.s32 1, %v122
    %v124 = vrot.slane %v70, %v123
    %v125 = vadd.f32 %v119, %v124
    %v126 = vadd.f32 %v120, %v124
    %v127 = vadd.f32 %v125, %v32
    %v128 = vadd.f32 %v126, %v33
    %v129 = vlaneseq
    %v130 = vshrl.u32 %v129, 7
    %v131 = vsub.s32 6, %v130
    %v132 = vrot.slane %v70, %v131
    %v134 = vsel %vm72, %v127, 0
    %v137 = vsel %vm72, %v128, 0
    %139 = vmatprep.subr.mxu0 0.0
    %140 = vmatpush1.msra.mxu0 0.0
    %141 = vmatprep.subr.mxu0 0.0
    %142 = vmatpush1.msra.mxu0 0.0
    %143 = vmatprep.subr.mxu0 0.0
    %144 = vmatpush1.msra.mxu0 0.0
    %145 = vmatprep.subr.mxu0 0.0
    %146 = vmatpush1.msra.mxu0 0.0
    %147 = vmatprep.subr.mxu0 0.0
    %148 = vmatpush1.msra.mxu0 0.0
    %149 = vmatprep.subr.mxu0 0.0
    %150 = vmatpush1.msra.mxu0 0.0
    %151 = vmatprep.subr.mxu0 0.0
    %152 = vmatpush1.msra.mxu0 0.0
    %153 = vmatprep.subr.mxu0 0.0
    %154 = vmatpush1.msra.mxu0 0.0
    %155 = vmatprep.subr.mxu0 0.0
    %156 = vmatpush1.msra.mxu0 0.0
    %157 = vmatprep.subr.mxu0 0.0
    %158 = vmatpush1.msra.mxu0 0.0
    %159 = vmatprep.subr.mxu0 0.0
    %160 = vmatpush1.msra.mxu0 0.0
    %161 = vmatprep.subr.mxu0 0.0
    %162 = vmatpush1.msra.mxu0 0.0
    %163 = vmatprep.subr.mxu0 0.0
    %164 = vmatpush1.msra.mxu0 %v53
    %165 = vmatprep.subr.mxu0 0.0
    %166 = vmatpush1.msra.mxu0 %v52
    %167 = vmatprep.subr.mxu0 0.0
    %168 = vmatpush1.msra.mxu0 %v51
    %169 = vmatprep.subr.mxu0 0.0
    %170 = vmatpush1.msra.mxu0 %v50
    %171 = vmatprep.subr.mxu0 0.0
    %172 = vmatpush2.msra.mxu0 0.0
    %173 = vmatprep.subr.mxu0 0.0
    %174 = vmatpush2.msra.mxu0 0.0
    %175 = vmatprep.subr.mxu0 0.0
    %176 = vmatpush2.msra.mxu0 0.0
    %177 = vmatprep.subr.mxu0 0.0
    %178 = vmatpush2.msra.mxu0 0.0
    %179 = vmatprep.subr.mxu0 0.0
    %180 = vmatpush2.msra.mxu0 0.0
    %181 = vmatprep.subr.mxu0 0.0
    %182 = vmatpush2.msra.mxu0 0.0
    %183 = vmatprep.subr.mxu0 0.0
    %184 = vmatpush2.msra.mxu0 0.0
    %185 = vmatprep.subr.mxu0 0.0
    %186 = vmatpush2.msra.mxu0 0.0
    %187 = vmatprep.subr.mxu0 0.0
    %188 = vmatpush2.msra.mxu0 0.0
    %189 = vmatprep.subr.mxu0 0.0
    %190 = vmatpush2.msra.mxu0 0.0
    %191 = vmatprep.subr.mxu0 0.0
    %192 = vmatpush2.msra.mxu0 0.0
    %193 = vmatprep.subr.mxu0 0.0
    %194 = vmatpush2.msra.mxu0 0.0
    %195 = vmatprep.subr.mxu0 0.0
    %196 = vmatpush2.msra.mxu0 0.0
    %197 = vmatprep.subr.mxu0 0.0
    %198 = vmatpush2.msra.mxu0 0.0
    %199 = vmatprep.subr.mxu0 0.0
    %200 = vmatpush2.msra.mxu0 0.0
    %201 = vmatprep.subr.mxu0 0.0
    %202 = vmatpush2.msra.mxu0 0.0
    %203 = vmatprep.mubr.f32.mxu0 0.0
    %204 = vmatmul.mubr.f32.gmra.mxu0 %v134
    %v205 = vpop.f32.mrf.mxu0
    %v206 = vadd.f32 %v132, %v205
    %v207 = vpop.f32.mrf.mxu0
    %208 = vmatprep.mubr.f32.mxu0 0.0
    %209 = vmatmul.mubr.f32.gmra.mxu0 %v137
    %v210 = vpop.f32.mrf.mxu0
    %v211 = vadd.f32 %v132, %v210
    %v212 = vpop.f32.mrf.mxu0
    %213 = vdwg.mxu0
    %218 = vrot.lane.b32.xlu0 %v50, 64
    %v219 = vpop.permute.xlu0 %218
    %220 = vrot.lane.b32.xlu0 %v51, 64
    %v221 = vpop.permute.xlu0 %220
    %222 = vrot.lane.b32.xlu0 %v52, 64
    %v223 = vpop.permute.xlu0 %222
    %224 = vrot.lane.b32.xlu0 %v53, 64
    %v225 = vpop.permute.xlu0 %224
    %231 = vrot.lane.b32.xlu0 %v132, 64
    %v232 = vpop.permute.xlu0 %231
    %v235 = vsel %vm72, %v125, 0
    %v238 = vsel %vm72, %v126, 0
    %240 = vmatprep.subr.mxu0 0.0
    %241 = vmatpush1.msra.mxu0 0.0
    %242 = vmatprep.subr.mxu0 0.0
    %243 = vmatpush1.msra.mxu0 0.0
    %244 = vmatprep.subr.mxu0 0.0
    %245 = vmatpush1.msra.mxu0 0.0
    %246 = vmatprep.subr.mxu0 0.0
    %247 = vmatpush1.msra.mxu0 0.0
    %248 = vmatprep.subr.mxu0 0.0
    %249 = vmatpush1.msra.mxu0 0.0
    %250 = vmatprep.subr.mxu0 0.0
    %251 = vmatpush1.msra.mxu0 0.0
    %252 = vmatprep.subr.mxu0 0.0
    %253 = vmatpush1.msra.mxu0 0.0
    %254 = vmatprep.subr.mxu0 0.0
    %255 = vmatpush1.msra.mxu0 0.0
    %256 = vmatprep.subr.mxu0 0.0
    %257 = vmatpush1.msra.mxu0 0.0
    %258 = vmatprep.subr.mxu0 0.0
    %259 = vmatpush1.msra.mxu0 0.0
    %260 = vmatprep.subr.mxu0 0.0
    %261 = vmatpush1.msra.mxu0 0.0
    %262 = vmatprep.subr.mxu0 0.0
    %263 = vmatpush1.msra.mxu0 0.0
    %264 = vmatprep.subr.mxu0 0.0
    %265 = vmatpush1.msra.mxu0 %v225
    %266 = vmatprep.subr.mxu0 0.0
    %267 = vmatpush1.msra.mxu0 %v223
    %268 = vmatprep.subr.mxu0 0.0
    %269 = vmatpush1.msra.mxu0 %v221
    %270 = vmatprep.subr.mxu0 0.0
    %271 = vmatpush1.msra.mxu0 %v219
    %272 = vmatprep.subr.mxu0 0.0
    %273 = vmatpush2.msra.mxu0 0.0
    %274 = vmatprep.subr.mxu0 0.0
    %275 = vmatpush2.msra.mxu0 0.0
    %276 = vmatprep.subr.mxu0 0.0
    %277 = vmatpush2.msra.mxu0 0.0
    %278 = vmatprep.subr.mxu0 0.0
    %279 = vmatpush2.msra.mxu0 0.0
    %280 = vmatprep.subr.mxu0 0.0
    %281 = vmatpush2.msra.mxu0 0.0
    %282 = vmatprep.subr.mxu0 0.0
    %283 = vmatpush2.msra.mxu0 0.0
    %284 = vmatprep.subr.mxu0 0.0
    %285 = vmatpush2.msra.mxu0 0.0
    %286 = vmatprep.subr.mxu0 0.0
    %287 = vmatpush2.msra.mxu0 0.0
    %288 = vmatprep.subr.mxu0 0.0
    %289 = vmatpush2.msra.mxu0 0.0
    %290 = vmatprep.subr.mxu0 0.0
    %291 = vmatpush2.msra.mxu0 0.0
    %292 = vmatprep.subr.mxu0 0.0
    %293 = vmatpush2.msra.mxu0 0.0
    %294 = vmatprep.subr.mxu0 0.0
    %295 = vmatpush2.msra.mxu0 0.0
    %296 = vmatprep.subr.mxu0 0.0
    %297 = vmatpush2.msra.mxu0 0.0
    %298 = vmatprep.subr.mxu0 0.0
    %299 = vmatpush2.msra.mxu0 0.0
    %300 = vmatprep.subr.mxu0 0.0
    %301 = vmatpush2.msra.mxu0 0.0
    %302 = vmatprep.subr.mxu0 0.0
    %303 = vmatpush2.msra.mxu0 0.0
    %304 = vmatprep.mubr.f32.mxu0 0.0
    %305 = vmatmul.mubr.f32.gmra.mxu0 %v235
    %v306 = vpop.f32.mrf.mxu0
    %v307 = vadd.f32 %v232, %v306
    %v308 = vpop.f32.mrf.mxu0
    %309 = vmatprep.mubr.f32.mxu0 0.0
    %310 = vmatmul.mubr.f32.gmra.mxu0 %v238
    %v311 = vpop.f32.mrf.mxu0
    %v312 = vadd.f32 %v232, %v311
    %v313 = vpop.f32.mrf.mxu0
    %314 = vdwg.mxu0
    %317 = vrot.lane.b32.xlu0 %v206, 96
    %v318 = vpop.permute.xlu0 %317
    %319 = vrot.lane.b32.xlu0 %v211, 96
    %v320 = vpop.permute.xlu0 %319
    %vm321 = vcmask 64512
    %v322 = vsel %vm321, %v206, 0
    %v324 = vsel %vm321, %v211, 0
    %v326 = vsel %vm321, %v318, 0
    %v328 = vsel %vm321, %v320, 0
    %330 = vmatprep.subr.mxu0 0.0
    %331 = vmatpush1.xpose.msra.mxu0 0.0
    %332 = vmatprep.subr.mxu0 0.0
    %333 = vmatpush1.xpose.msra.mxu0 0.0
    %334 = vmatprep.subr.mxu0 0.0
    %335 = vmatpush1.xpose.msra.mxu0 0.0
    %336 = vmatprep.subr.mxu0 0.0
    %337 = vmatpush1.xpose.msra.mxu0 0.0
    %338 = vmatprep.subr.mxu0 0.0
    %339 = vmatpush1.xpose.msra.mxu0 0.0
    %340 = vmatprep.subr.mxu0 0.0
    %341 = vmatpush1.xpose.msra.mxu0 0.0
    %342 = vmatprep.subr.mxu0 0.0
    %343 = vmatpush1.xpose.msra.mxu0 0.0
    %344 = vmatprep.subr.mxu0 0.0
    %345 = vmatpush1.xpose.msra.mxu0 0.0
    %346 = vmatprep.subr.mxu0 0.0
    %347 = vmatpush1.xpose.msra.mxu0 0.0
    %348 = vmatprep.subr.mxu0 0.0
    %349 = vmatpush1.xpose.msra.mxu0 0.0
    %350 = vmatprep.subr.mxu0 0.0
    %351 = vmatpush1.xpose.msra.mxu0 0.0
    %352 = vmatprep.subr.mxu0 0.0
    %353 = vmatpush1.xpose.msra.mxu0 0.0
    %354 = vmatprep.subr.mxu0 0.0
    %355 = vmatpush1.xpose.msra.mxu0 0.0
    %356 = vmatprep.subr.mxu0 0.0
    %357 = vmatpush1.xpose.msra.mxu0 0.0
    %358 = vmatprep.subr.mxu0 0.0
    %359 = vmatpush1.xpose.msra.mxu0 %v328
    %360 = vmatprep.subr.mxu0 0.0
    %361 = vmatpush1.xpose.msra.mxu0 %v326
    %362 = vmatprep.subr.mxu0 0.0
    %363 = vmatpush2.xpose.msra.mxu0 0.0
    %364 = vmatprep.subr.mxu0 0.0
    %365 = vmatpush2.xpose.msra.mxu0 0.0
    %366 = vmatprep.subr.mxu0 0.0
    %367 = vmatpush2.xpose.msra.mxu0 0.0
    %368 = vmatprep.subr.mxu0 0.0
    %369 = vmatpush2.xpose.msra.mxu0 0.0
    %370 = vmatprep.subr.mxu0 0.0
    %371 = vmatpush2.xpose.msra.mxu0 0.0
    %372 = vmatprep.subr.mxu0 0.0
    %373 = vmatpush2.xpose.msra.mxu0 0.0
    %374 = vmatprep.subr.mxu0 0.0
    %375 = vmatpush2.xpose.msra.mxu0 0.0
    %376 = vmatprep.subr.mxu0 0.0
    %377 = vmatpush2.xpose.msra.mxu0 0.0
    %378 = vmatprep.subr.mxu0 0.0
    %379 = vmatpush2.xpose.msra.mxu0 0.0
    %380 = vmatprep.subr.mxu0 0.0
    %381 = vmatpush2.xpose.msra.mxu0 0.0
    %382 = vmatprep.subr.mxu0 0.0
    %383 = vmatpush2.xpose.msra.mxu0 0.0
    %384 = vmatprep.subr.mxu0 0.0
    %385 = vmatpush2.xpose.msra.mxu0 0.0
    %386 = vmatprep.subr.mxu0 0.0
    %387 = vmatpush2.xpose.msra.mxu0 0.0
    %388 = vmatprep.subr.mxu0 0.0
    %389 = vmatpush2.xpose.msra.mxu0 0.0
    %390 = vmatprep.subr.mxu0 0.0
    %391 = vmatpush2.xpose.msra.mxu0 0.0
    %392 = vmatprep.subr.mxu0 0.0
    %393 = vmatpush2.xpose.msra.mxu0 0.0
    %394 = vmatprep.mubr.f32.mxu0 0.0
    %395 = vmatmul.mubr.f32.gmra.mxu0 %v322
    %v396 = vpop.f32.mrf.mxu0
    %v397 = vadd.f32 0.0, %v396
    %v398 = vpop.f32.mrf.mxu0
    %399 = vmatprep.mubr.f32.mxu0 0.0
    %400 = vmatmul.mubr.f32.gmra.mxu0 %v324
    %v401 = vpop.f32.mrf.mxu0
    %v402 = vadd.f32 0.0, %v401
    %v403 = vpop.f32.mrf.mxu0
    %404 = vdwg.mxu0
    %v405 = vmul.f32 %v397, 0.35355338
    %v406 = vmul.f32 %v402, 0.35355338
    %v407 = vmul.f32 %v405, 1.442695
    %v408 = vpow.pop %v407
    %v409 = vmul.f32 %v406, 1.442695
    %v410 = vpow.pop %v409
    %v411 = vsel %vm44, %v408, 0.0
    %v412 = vsel %vm45, %v410, 0.0
    %vm413 = vcmask 130048
    %v414 = vsel %vm413, %v411, 0.0
    %415 = vadd.xlane.f32.xlu0 %v414
    %v416 = vpop.xlane.xlu0 %415
    %v417 = vsel %vm413, %v412, 0.0
    %418 = vadd.xlane.f32.xlu0 %v417
    %v419 = vpop.xlane.xlu0 %418
    %v420 = vrcp.pop %v416
    %v421 = vrcp.pop %v419
    %v422 = vmul.f32 %v411, %v420
    %v423 = vmul.f32 %v412, %v421
    %v425 = vsel %vm413, %v422, 0
    %v428 = vsel %vm413, %v423, 0
    %430 = vmatprep.subr.mxu0 0.0
    %431 = vmatpush1.msra.mxu0 0.0
    %432 = vmatprep.subr.mxu0 0.0
    %433 = vmatpush1.msra.mxu0 0.0
    %434 = vmatprep.subr.mxu0 0.0
    %435 = vmatpush1.msra.mxu0 0.0
    %436 = vmatprep.subr.mxu0 0.0
    %437 = vmatpush1.msra.mxu0 0.0
    %438 = vmatprep.subr.mxu0 0.0
    %439 = vmatpush1.msra.mxu0 0.0
    %440 = vmatprep.subr.mxu0 0.0
    %441 = vmatpush1.msra.mxu0 0.0
    %442 = vmatprep.subr.mxu0 0.0
    %443 = vmatpush1.msra.mxu0 0.0
    %444 = vmatprep.subr.mxu0 0.0
    %445 = vmatpush1.msra.mxu0 0.0
    %446 = vmatprep.subr.mxu0 0.0
    %447 = vmatpush1.msra.mxu0 0.0
    %448 = vmatprep.subr.mxu0 0.0
    %449 = vmatpush1.msra.mxu0 0.0
    %450 = vmatprep.subr.mxu0 0.0
    %451 = vmatpush1.msra.mxu0 0.0
    %452 = vmatprep.subr.mxu0 0.0
    %453 = vmatpush1.msra.mxu0 0.0
    %454 = vmatprep.subr.mxu0 0.0
    %455 = vmatpush1.msra.mxu0 0.0
    %456 = vmatprep.subr.mxu0 0.0
    %457 = vmatpush1.msra.mxu0 0.0
    %458 = vmatprep.subr.mxu0 0.0
    %459 = vmatpush1.msra.mxu0 %v312
    %460 = vmatprep.subr.mxu0 0.0
    %461 = vmatpush1.msra.mxu0 %v307
    %462 = vmatprep.subr.mxu0 0.0
    %463 = vmatpush2.msra.mxu0 0.0
    %464 = vmatprep.subr.mxu0 0.0
    %465 = vmatpush2.msra.mxu0 0.0
    %466 = vmatprep.subr.mxu0 0.0
    %467 = vmatpush2.msra.mxu0 0.0
    %468 = vmatprep.subr.mxu0 0.0
    %469 = vmatpush2.msra.mxu0 0.0
    %470 = vmatprep.subr.mxu0 0.0
    %471 = vmatpush2.msra.mxu0 0.0
    %472 = vmatprep.subr.mxu0 0.0
    %473 = vmatpush2.msra.mxu0 0.0
    %474 = vmatprep.subr.mxu0 0.0
    %475 = vmatpush2.msra.mxu0 0.0
    %476 = vmatprep.subr.mxu0 0.0
    %477 = vmatpush2.msra.mxu0 0.0
    %478 = vmatprep.subr.mxu0 0.0
    %479 = vmatpush2.msra.mxu0 0.0
    %480 = vmatprep.subr.mxu0 0.0
    %481 = vmatpush2.msra.mxu0 0.0
    %482 = vmatprep.subr.mxu0 0.0
    %483 = vmatpush2.msra.mxu0 0.0
    %484 = vmatprep.subr.mxu0 0.0
    %485 = vmatpush2.msra.mxu0 0.0
    %486 = vmatprep.subr.mxu0 0.0
    %487 = vmatpush2.msra.mxu0 0.0
    %488 = vmatprep.subr.mxu0 0.0
    %489 = vmatpush2.msra.mxu0 0.0
    %490 = vmatprep.subr.mxu0 0.0
    %491 = vmatpush2.msra.mxu0 0.0
    %492 = vmatprep.subr.mxu0 0.0
    %493 = vmatpush2.msra.mxu0 0.0
    %494 = vmatprep.mubr.f32.mxu0 0.0
    %495 = vmatmul.mubr.f32.gmra.mxu0 %v425
    %v496 = vpop.f32.mrf.mxu0
    %v497 = vadd.f32 0.0, %v496
    %v498 = vpop.f32.mrf.mxu0
    %499 = vmatprep.mubr.f32.mxu0 0.0
    %500 = vmatmul.mubr.f32.gmra.mxu0 %v428
    %v501 = vpop.f32.mrf.mxu0
    %v502 = vadd.f32 0.0, %v501
    %v503 = vpop.f32.mrf.mxu0
    %504 = vdwg.mxu0
    %505 = vrot.lane.b32.xlu0 %v206, 120
    %v506 = vpop.permute.xlu0 %505
    %507 = vrot.lane.b32.xlu0 %v211, 120
    %v508 = vpop.permute.xlu0 %507
    %509 = vrot.lane.b32.xlu0 %v206, 88
    %v510 = vpop.permute.xlu0 %509
    %511 = vrot.lane.b32.xlu0 %v211, 88
    %v512 = vpop.permute.xlu0 %511
    %v513 = vsel %vm321, %v506, 0
    %v515 = vsel %vm321, %v508, 0
    %v517 = vsel %vm321, %v510, 0
    %v519 = vsel %vm321, %v512, 0
    %521 = vmatprep.subr.mxu0 0.0
    %522 = vmatpush1.xpose.msra.mxu0 0.0
    %523 = vmatprep.subr.mxu0 0.0
    %524 = vmatpush1.xpose.msra.mxu0 0.0
    %525 = vmatprep.subr.mxu0 0.0
    %526 = vmatpush1.xpose.msra.mxu0 0.0
    %527 = vmatprep.subr.mxu0 0.0
    %528 = vmatpush1.xpose.msra.mxu0 0.0
    %529 = vmatprep.subr.mxu0 0.0
    %530 = vmatpush1.xpose.msra.mxu0 0.0
    %531 = vmatprep.subr.mxu0 0.0
    %532 = vmatpush1.xpose.msra.mxu0 0.0
    %533 = vmatprep.subr.mxu0 0.0
    %534 = vmatpush1.xpose.msra.mxu0 0.0
    %535 = vmatprep.subr.mxu0 0.0
    %536 = vmatpush1.xpose.msra.mxu0 0.0
    %537 = vmatprep.subr.mxu0 0.0
    %538 = vmatpush1.xpose.msra.mxu0 0.0
    %539 = vmatprep.subr.mxu0 0.0
    %540 = vmatpush1.xpose.msra.mxu0 0.0
    %541 = vmatprep.subr.mxu0 0.0
    %542 = vmatpush1.xpose.msra.mxu0 0.0
    %543 = vmatprep.subr.mxu0 0.0
    %544 = vmatpush1.xpose.msra.mxu0 0.0
    %545 = vmatprep.subr.mxu0 0.0
    %546 = vmatpush1.xpose.msra.mxu0 0.0
    %547 = vmatprep.subr.mxu0 0.0
    %548 = vmatpush1.xpose.msra.mxu0 0.0
    %549 = vmatprep.subr.mxu0 0.0
    %550 = vmatpush1.xpose.msra.mxu0 %v519
    %551 = vmatprep.subr.mxu0 0.0
    %552 = vmatpush1.xpose.msra.mxu0 %v517
    %553 = vmatprep.subr.mxu0 0.0
    %554 = vmatpush2.xpose.msra.mxu0 0.0
    %555 = vmatprep.subr.mxu0 0.0
    %556 = vmatpush2.xpose.msra.mxu0 0.0
    %557 = vmatprep.subr.mxu0 0.0
    %558 = vmatpush2.xpose.msra.mxu0 0.0
    %559 = vmatprep.subr.mxu0 0.0
    %560 = vmatpush2.xpose.msra.mxu0 0.0
    %561 = vmatprep.subr.mxu0 0.0
    %562 = vmatpush2.xpose.msra.mxu0 0.0
    %563 = vmatprep.subr.mxu0 0.0
    %564 = vmatpush2.xpose.msra.mxu0 0.0
    %565 = vmatprep.subr.mxu0 0.0
    %566 = vmatpush2.xpose.msra.mxu0 0.0
    %567 = vmatprep.subr.mxu0 0.0
    %568 = vmatpush2.xpose.msra.mxu0 0.0
    %569 = vmatprep.subr.mxu0 0.0
    %570 = vmatpush2.xpose.msra.mxu0 0.0
    %571 = vmatprep.subr.mxu0 0.0
    %572 = vmatpush2.xpose.msra.mxu0 0.0
    %573 = vmatprep.subr.mxu0 0.0
    %574 = vmatpush2.xpose.msra.mxu0 0.0
    %575 = vmatprep.subr.mxu0 0.0
    %576 = vmatpush2.xpose.msra.mxu0 0.0
    %577 = vmatprep.subr.mxu0 0.0
    %578 = vmatpush2.xpose.msra.mxu0 0.0
    %579 = vmatprep.subr.mxu0 0.0
    %580 = vmatpush2.xpose.msra.mxu0 0.0
    %581 = vmatprep.subr.mxu0 0.0
    %582 = vmatpush2.xpose.msra.mxu0 0.0
    %583 = vmatprep.subr.mxu0 0.0
    %584 = vmatpush2.xpose.msra.mxu0 0.0
    %585 = vmatprep.mubr.f32.mxu0 0.0
    %586 = vmatmul.mubr.f32.gmra.mxu0 %v513
    %v587 = vpop.f32.mrf.mxu0
    %v588 = vadd.f32 0.0, %v587
    %v589 = vpop.f32.mrf.mxu0
    %590 = vmatprep.mubr.f32.mxu0 0.0
    %591 = vmatmul.mubr.f32.gmra.mxu0 %v515
    %v592 = vpop.f32.mrf.mxu0
    %v593 = vadd.f32 0.0, %v592
    %v594 = vpop.f32.mrf.mxu0
    %595 = vdwg.mxu0
    %v596 = vmul.f32 %v588, 0.35355338
    %v597 = vmul.f32 %v593, 0.35355338
    %v598 = vmul.f32 %v596, 1.442695
    %v599 = vpow.pop %v598
    %v600 = vmul.f32 %v597, 1.442695
    %v601 = vpow.pop %v600
    %v602 = vsel %vm44, %v599, 0.0
    %v603 = vsel %vm45, %v601, 0.0
    %v604 = vsel %vm413, %v602, 0.0
    %605 = vadd.xlane.f32.xlu0 %v604
    %v606 = vpop.xlane.xlu0 %605
    %v607 = vsel %vm413, %v603, 0.0
    %608 = vadd.xlane.f32.xlu0 %v607
    %v609 = vpop.xlane.xlu0 %608
    %v610 = vrcp.pop %v606
    %v611 = vrcp.pop %v609
    %v612 = vmul.f32 %v602, %v610
    %v613 = vmul.f32 %v603, %v611
    %616 = vrot.lane.b32.xlu0 %v307, 120
    %v617 = vpop.permute.xlu0 %616
    %618 = vrot.lane.b32.xlu0 %v312, 120
    %v619 = vpop.permute.xlu0 %618
    %v623 = vsel %vm413, %v612, 0
    %v626 = vsel %vm413, %v613, 0
    %628 = vmatprep.subr.mxu0 0.0
    %629 = vmatpush1.msra.mxu0 0.0
    %630 = vmatprep.subr.mxu0 0.0
    %631 = vmatpush1.msra.mxu0 0.0
    %632 = vmatprep.subr.mxu0 0.0
    %633 = vmatpush1.msra.mxu0 0.0
    %634 = vmatprep.subr.mxu0 0.0
    %635 = vmatpush1.msra.mxu0 0.0
    %636 = vmatprep.subr.mxu0 0.0
    %637 = vmatpush1.msra.mxu0 0.0
    %638 = vmatprep.subr.mxu0 0.0
    %639 = vmatpush1.msra.mxu0 0.0
    %640 = vmatprep.subr.mxu0 0.0
    %641 = vmatpush1.msra.mxu0 0.0
    %642 = vmatprep.subr.mxu0 0.0
    %643 = vmatpush1.msra.mxu0 0.0
    %644 = vmatprep.subr.mxu0 0.0
    %645 = vmatpush1.msra.mxu0 0.0
    %646 = vmatprep.subr.mxu0 0.0
    %647 = vmatpush1.msra.mxu0 0.0
    %648 = vmatprep.subr.mxu0 0.0
    %649 = vmatpush1.msra.mxu0 0.0
    %650 = vmatprep.subr.mxu0 0.0
    %651 = vmatpush1.msra.mxu0 0.0
    %652 = vmatprep.subr.mxu0 0.0
    %653 = vmatpush1.msra.mxu0 0.0
    %654 = vmatprep.subr.mxu0 0.0
    %655 = vmatpush1.msra.mxu0 0.0
    %656 = vmatprep.subr.mxu0 0.0
    %657 = vmatpush1.msra.mxu0 %v619
    %658 = vmatprep.subr.mxu0 0.0
    %659 = vmatpush1.msra.mxu0 %v617
    %660 = vmatprep.subr.mxu0 0.0
    %661 = vmatpush2.msra.mxu0 0.0
    %662 = vmatprep.subr.mxu0 0.0
    %663 = vmatpush2.msra.mxu0 0.0
    %664 = vmatprep.subr.mxu0 0.0
    %665 = vmatpush2.msra.mxu0 0.0
    %666 = vmatprep.subr.mxu0 0.0
    %667 = vmatpush2.msra.mxu0 0.0
    %668 = vmatprep.subr.mxu0 0.0
    %669 = vmatpush2.msra.mxu0 0.0
    %670 = vmatprep.subr.mxu0 0.0
    %671 = vmatpush2.msra.mxu0 0.0
    %672 = vmatprep.subr.mxu0 0.0
    %673 = vmatpush2.msra.mxu0 0.0
    %674 = vmatprep.subr.mxu0 0.0
    %675 = vmatpush2.msra.mxu0 0.0
    %676 = vmatprep.subr.mxu0 0.0
    %677 = vmatpush2.msra.mxu0 0.0
    %678 = vmatprep.subr.mxu0 0.0
    %679 = vmatpush2.msra.mxu0 0.0
    %680 = vmatprep.subr.mxu0 0.0
    %681 = vmatpush2.msra.mxu0 0.0
    %682 = vmatprep.subr.mxu0 0.0
    %683 = vmatpush2.msra.mxu0 0.0
    %684 = vmatprep.subr.mxu0 0.0
    %685 = vmatpush2.msra.mxu0 0.0
    %686 = vmatprep.subr.mxu0 0.0
    %687 = vmatpush2.msra.mxu0 0.0
    %688 = vmatprep.subr.mxu0 0.0
    %689 = vmatpush2.msra.mxu0 0.0
    %690 = vmatprep.subr.mxu0 0.0
    %691 = vmatpush2.msra.mxu0 0.0
    %692 = vmatprep.mubr.f32.mxu0 0.0
    %693 = vmatmul.mubr.f32.gmra.mxu0 %v623
    %v694 = vpop.f32.mrf.mxu0
    %v695 = vadd.f32 0.0, %v694
    %v696 = vpop.f32.mrf.mxu0
    %697 = vmatprep.mubr.f32.mxu0 0.0
    %698 = vmatmul.mubr.f32.gmra.mxu0 %v626
    %v699 = vpop.f32.mrf.mxu0
    %v700 = vadd.f32 0.0, %v699
    %v701 = vpop.f32.mrf.mxu0
    %702 = vdwg.mxu0
    %703 = vrot.lane.b32.xlu0 %v51, 32
    %v704 = vpop.permute.xlu0 %703
    %v707 = vsel %vm321, %v695, 0
    %v710 = vsel %vm321, %v700, 0
    %712 = vmatprep.subr.mxu0 0.0
    %713 = vmatpush1.msra.mxu0 0.0
    %714 = vmatprep.subr.mxu0 0.0
    %715 = vmatpush1.msra.mxu0 0.0
    %716 = vmatprep.subr.mxu0 0.0
    %717 = vmatpush1.msra.mxu0 0.0
    %718 = vmatprep.subr.mxu0 0.0
    %719 = vmatpush1.msra.mxu0 0.0
    %720 = vmatprep.subr.mxu0 0.0
    %721 = vmatpush1.msra.mxu0 0.0
    %722 = vmatprep.subr.mxu0 0.0
    %723 = vmatpush1.msra.mxu0 0.0
    %724 = vmatprep.subr.mxu0 0.0
    %725 = vmatpush1.msra.mxu0 0.0
    %726 = vmatprep.subr.mxu0 0.0
    %727 = vmatpush1.msra.mxu0 0.0
    %728 = vmatprep.subr.mxu0 0.0
    %729 = vmatpush1.msra.mxu0 0.0
    %730 = vmatprep.subr.mxu0 0.0
    %731 = vmatpush1.msra.mxu0 0.0
    %732 = vmatprep.subr.mxu0 0.0
    %733 = vmatpush1.msra.mxu0 0.0
    %734 = vmatprep.subr.mxu0 0.0
    %735 = vmatpush1.msra.mxu0 0.0
    %736 = vmatprep.subr.mxu0 0.0
    %737 = vmatpush1.msra.mxu0 0.0
    %738 = vmatprep.subr.mxu0 0.0
    %739 = vmatpush1.msra.mxu0 0.0
    %740 = vmatprep.subr.mxu0 0.0
    %741 = vmatpush1.msra.mxu0 0.0
    %742 = vmatprep.subr.mxu0 0.0
    %743 = vmatpush1.msra.mxu0 %v704
    %744 = vmatprep.subr.mxu0 0.0
    %745 = vmatpush2.msra.mxu0 0.0
    %746 = vmatprep.subr.mxu0 0.0
    %747 = vmatpush2.msra.mxu0 0.0
    %748 = vmatprep.subr.mxu0 0.0
    %749 = vmatpush2.msra.mxu0 0.0
    %750 = vmatprep.subr.mxu0 0.0
    %751 = vmatpush2.msra.mxu0 0.0
    %752 = vmatprep.subr.mxu0 0.0
    %753 = vmatpush2.msra.mxu0 0.0
    %754 = vmatprep.subr.mxu0 0.0
    %755 = vmatpush2.msra.mxu0 0.0
    %756 = vmatprep.subr.mxu0 0.0
    %757 = vmatpush2.msra.mxu0 0.0
    %758 = vmatprep.subr.mxu0 0.0
    %759 = vmatpush2.msra.mxu0 0.0
    %760 = vmatprep.subr.mxu0 0.0
    %761 = vmatpush2.msra.mxu0 0.0
    %762 = vmatprep.subr.mxu0 0.0
    %763 = vmatpush2.msra.mxu0 0.0
    %764 = vmatprep.subr.mxu0 0.0
    %765 = vmatpush2.msra.mxu0 0.0
    %766 = vmatprep.subr.mxu0 0.0
    %767 = vmatpush2.msra.mxu0 0.0
    %768 = vmatprep.subr.mxu0 0.0
    %769 = vmatpush2.msra.mxu0 0.0
    %770 = vmatprep.subr.mxu0 0.0
    %771 = vmatpush2.msra.mxu0 0.0
    %772 = vmatprep.subr.mxu0 0.0
    %773 = vmatpush2.msra.mxu0 0.0
    %774 = vmatprep.subr.mxu0 0.0
    %775 = vmatpush2.msra.mxu0 0.0
    %776 = vmatprep.mubr.f32.mxu0 0.0
    %777 = vmatmul.mubr.f32.gmra.mxu0 %v707
    %v778 = vpop.f32.mrf.mxu0
    %v779 = vadd.f32 0.0, %v778
    %v780 = vpop.f32.mrf.mxu0
    %781 = vmatprep.mubr.f32.mxu0 0.0
    %782 = vmatmul.mubr.f32.gmra.mxu0 %v710
    %v783 = vpop.f32.mrf.mxu0
    %v784 = vadd.f32 0.0, %v783
    %v785 = vpop.f32.mrf.mxu0
    %786 = vdwg.mxu0
    %787 = vrot.lane.b32.xlu0 %v50, 32
    %v788 = vpop.permute.xlu0 %787
    %v791 = vsel %vm321, %v497, 0
    %v794 = vsel %vm321, %v502, 0
    %796 = vmatprep.subr.mxu0 0.0
    %797 = vmatpush1.msra.mxu0 0.0
    %798 = vmatprep.subr.mxu0 0.0
    %799 = vmatpush1.msra.mxu0 0.0
    %800 = vmatprep.subr.mxu0 0.0
    %801 = vmatpush1.msra.mxu0 0.0
    %802 = vmatprep.subr.mxu0 0.0
    %803 = vmatpush1.msra.mxu0 0.0
    %804 = vmatprep.subr.mxu0 0.0
    %805 = vmatpush1.msra.mxu0 0.0
    %806 = vmatprep.subr.mxu0 0.0
    %807 = vmatpush1.msra.mxu0 0.0
    %808 = vmatprep.subr.mxu0 0.0
    %809 = vmatpush1.msra.mxu0 0.0
    %810 = vmatprep.subr.mxu0 0.0
    %811 = vmatpush1.msra.mxu0 0.0
    %812 = vmatprep.subr.mxu0 0.0
    %813 = vmatpush1.msra.mxu0 0.0
    %814 = vmatprep.subr.mxu0 0.0
    %815 = vmatpush1.msra.mxu0 0.0
    %816 = vmatprep.subr.mxu0 0.0
    %817 = vmatpush1.msra.mxu0 0.0
    %818 = vmatprep.subr.mxu0 0.0
    %819 = vmatpush1.msra.mxu0 0.0
    %820 = vmatprep.subr.mxu0 0.0
    %821 = vmatpush1.msra.mxu0 0.0
    %822 = vmatprep.subr.mxu0 0.0
    %823 = vmatpush1.msra.mxu0 0.0
    %824 = vmatprep.subr.mxu0 0.0
    %825 = vmatpush1.msra.mxu0 0.0
    %826 = vmatprep.subr.mxu0 0.0
    %827 = vmatpush1.msra.mxu0 %v788
    %828 = vmatprep.subr.mxu0 0.0
    %829 = vmatpush2.msra.mxu0 0.0
    %830 = vmatprep.subr.mxu0 0.0
    %831 = vmatpush2.msra.mxu0 0.0
    %832 = vmatprep.subr.mxu0 0.0
    %833 = vmatpush2.msra.mxu0 0.0
    %834 = vmatprep.subr.mxu0 0.0
    %835 = vmatpush2.msra.mxu0 0.0
    %836 = vmatprep.subr.mxu0 0.0
    %837 = vmatpush2.msra.mxu0 0.0
    %838 = vmatprep.subr.mxu0 0.0
    %839 = vmatpush2.msra.mxu0 0.0
    %840 = vmatprep.subr.mxu0 0.0
    %841 = vmatpush2.msra.mxu0 0.0
    %842 = vmatprep.subr.mxu0 0.0
    %843 = vmatpush2.msra.mxu0 0.0
    %844 = vmatprep.subr.mxu0 0.0
    %845 = vmatpush2.msra.mxu0 0.0
    %846 = vmatprep.subr.mxu0 0.0
    %847 = vmatpush2.msra.mxu0 0.0
    %848 = vmatprep.subr.mxu0 0.0
    %849 = vmatpush2.msra.mxu0 0.0
    %850 = vmatprep.subr.mxu0 0.0
    %851 = vmatpush2.msra.mxu0 0.0
    %852 = vmatprep.subr.mxu0 0.0
    %853 = vmatpush2.msra.mxu0 0.0
    %854 = vmatprep.subr.mxu0 0.0
    %855 = vmatpush2.msra.mxu0 0.0
    %856 = vmatprep.subr.mxu0 0.0
    %857 = vmatpush2.msra.mxu0 0.0
    %858 = vmatprep.subr.mxu0 0.0
    %859 = vmatpush2.msra.mxu0 0.0
    %860 = vmatprep.mubr.f32.mxu0 0.0
    %861 = vmatmul.mubr.f32.gmra.mxu0 %v791
    %v862 = vpop.f32.mrf.mxu0
    %v863 = vadd.f32 %v779, %v862
    %v864 = vpop.f32.mrf.mxu0
    %865 = vmatprep.mubr.f32.mxu0 0.0
    %866 = vmatmul.mubr.f32.gmra.mxu0 %v794
    %v867 = vpop.f32.mrf.mxu0
    %v868 = vadd.f32 %v784, %v867
    %v869 = vpop.f32.mrf.mxu0
    %870 = vdwg.mxu0
    %871 = vrot.lane.b32.xlu0 %v206, 112
    %v872 = vpop.permute.xlu0 %871
    %873 = vrot.lane.b32.xlu0 %v211, 112
    %v874 = vpop.permute.xlu0 %873
    %875 = vrot.lane.b32.xlu0 %v206, 80
    %v876 = vpop.permute.xlu0 %875
    %877 = vrot.lane.b32.xlu0 %v211, 80
    %v878 = vpop.permute.xlu0 %877
    %v879 = vsel %vm321, %v872, 0
    %v881 = vsel %vm321, %v874, 0
    %v883 = vsel %vm321, %v876, 0
    %v885 = vsel %vm321, %v878, 0
    %887 = vmatprep.subr.mxu0 0.0
    %888 = vmatpush1.xpose.msra.mxu0 0.0
    %889 = vmatprep.subr.mxu0 0.0
    %890 = vmatpush1.xpose.msra.mxu0 0.0
    %891 = vmatprep.subr.mxu0 0.0
    %892 = vmatpush1.xpose.msra.mxu0 0.0
    %893 = vmatprep.subr.mxu0 0.0
    %894 = vmatpush1.xpose.msra.mxu0 0.0
    %895 = vmatprep.subr.mxu0 0.0
    %896 = vmatpush1.xpose.msra.mxu0 0.0
    %897 = vmatprep.subr.mxu0 0.0
    %898 = vmatpush1.xpose.msra.mxu0 0.0
    %899 = vmatprep.subr.mxu0 0.0
    %900 = vmatpush1.xpose.msra.mxu0 0.0
    %901 = vmatprep.subr.mxu0 0.0
    %902 = vmatpush1.xpose.msra.mxu0 0.0
    %903 = vmatprep.subr.mxu0 0.0
    %904 = vmatpush1.xpose.msra.mxu0 0.0
    %905 = vmatprep.subr.mxu0 0.0
    %906 = vmatpush1.xpose.msra.mxu0 0.0
    %907 = vmatprep.subr.mxu0 0.0
    %908 = vmatpush1.xpose.msra.mxu0 0.0
    %909 = vmatprep.subr.mxu0 0.0
    %910 = vmatpush1.xpose.msra.mxu0 0.0
    %911 = vmatprep.subr.mxu0 0.0
    %912 = vmatpush1.xpose.msra.mxu0 0.0
    %913 = vmatprep.subr.mxu0 0.0
    %914 = vmatpush1.xpose.msra.mxu0 0.0
    %915 = vmatprep.subr.mxu0 0.0
    %916 = vmatpush1.xpose.msra.mxu0 %v885
    %917 = vmatprep.subr.mxu0 0.0
    %918 = vmatpush1.xpose.msra.mxu0 %v883
    %919 = vmatprep.subr.mxu0 0.0
    %920 = vmatpush2.xpose.msra.mxu0 0.0
    %921 = vmatprep.subr.mxu0 0.0
    %922 = vmatpush2.xpose.msra.mxu0 0.0
    %923 = vmatprep.subr.mxu0 0.0
    %924 = vmatpush2.xpose.msra.mxu0 0.0
    %925 = vmatprep.subr.mxu0 0.0
    %926 = vmatpush2.xpose.msra.mxu0 0.0
    %927 = vmatprep.subr.mxu0 0.0
    %928 = vmatpush2.xpose.msra.mxu0 0.0
    %929 = vmatprep.subr.mxu0 0.0
    %930 = vmatpush2.xpose.msra.mxu0 0.0
    %931 = vmatprep.subr.mxu0 0.0
    %932 = vmatpush2.xpose.msra.mxu0 0.0
    %933 = vmatprep.subr.mxu0 0.0
    %934 = vmatpush2.xpose.msra.mxu0 0.0
    %935 = vmatprep.subr.mxu0 0.0
    %936 = vmatpush2.xpose.msra.mxu0 0.0
    %937 = vmatprep.subr.mxu0 0.0
    %938 = vmatpush2.xpose.msra.mxu0 0.0
    %939 = vmatprep.subr.mxu0 0.0
    %940 = vmatpush2.xpose.msra.mxu0 0.0
    %941 = vmatprep.subr.mxu0 0.0
    %942 = vmatpush2.xpose.msra.mxu0 0.0
    %943 = vmatprep.subr.mxu0 0.0
    %944 = vmatpush2.xpose.msra.mxu0 0.0
    %945 = vmatprep.subr.mxu0 0.0
    %946 = vmatpush2.xpose.msra.mxu0 0.0
    %947 = vmatprep.subr.mxu0 0.0
    %948 = vmatpush2.xpose.msra.mxu0 0.0
    %949 = vmatprep.subr.mxu0 0.0
    %950 = vmatpush2.xpose.msra.mxu0 0.0
    %951 = vmatprep.mubr.f32.mxu0 0.0
    %952 = vmatmul.mubr.f32.gmra.mxu0 %v879
    %v953 = vpop.f32.mrf.mxu0
    %v954 = vadd.f32 0.0, %v953
    %v955 = vpop.f32.mrf.mxu0
    %956 = vmatprep.mubr.f32.mxu0 0.0
    %957 = vmatmul.mubr.f32.gmra.mxu0 %v881
    %v958 = vpop.f32.mrf.mxu0
    %v959 = vadd.f32 0.0, %v958
    %v960 = vpop.f32.mrf.mxu0
    %961 = vdwg.mxu0
    %v962 = vmul.f32 %v954, 0.35355338
    %v963 = vmul.f32 %v959, 0.35355338
    %v964 = vmul.f32 %v962, 1.442695
    %v965 = vpow.pop %v964
    %v966 = vmul.f32 %v963, 1.442695
    %v967 = vpow.pop %v966
    %v968 = vsel %vm44, %v965, 0.0
    %v969 = vsel %vm45, %v967, 0.0
    %v970 = vsel %vm413, %v968, 0.0
    %971 = vadd.xlane.f32.xlu0 %v970
    %v972 = vpop.xlane.xlu0 %971
    %v973 = vsel %vm413, %v969, 0.0
    %974 = vadd.xlane.f32.xlu0 %v973
    %v975 = vpop.xlane.xlu0 %974
    %v976 = vrcp.pop %v972
    %v977 = vrcp.pop %v975
    %v978 = vmul.f32 %v968, %v976
    %v979 = vmul.f32 %v969, %v977
    %980 = vrot.lane.b32.xlu0 %v307, 112
    %v981 = vpop.permute.xlu0 %980
    %982 = vrot.lane.b32.xlu0 %v312, 112
    %v983 = vpop.permute.xlu0 %982
    %v987 = vsel %vm413, %v978, 0
    %v990 = vsel %vm413, %v979, 0
    %992 = vmatprep.subr.mxu0 0.0
    %993 = vmatpush1.msra.mxu0 0.0
    %994 = vmatprep.subr.mxu0 0.0
    %995 = vmatpush1.msra.mxu0 0.0
    %996 = vmatprep.subr.mxu0 0.0
    %997 = vmatpush1.msra.mxu0 0.0
    %998 = vmatprep.subr.mxu0 0.0
    %999 = vmatpush1.msra.mxu0 0.0
    %1000 = vmatprep.subr.mxu0 0.0
    %1001 = vmatpush1.msra.mxu0 0.0
    %1002 = vmatprep.subr.mxu0 0.0
    %1003 = vmatpush1.msra.mxu0 0.0
    %1004 = vmatprep.subr.mxu0 0.0
    %1005 = vmatpush1.msra.mxu0 0.0
    %1006 = vmatprep.subr.mxu0 0.0
    %1007 = vmatpush1.msra.mxu0 0.0
    %1008 = vmatprep.subr.mxu0 0.0
    %1009 = vmatpush1.msra.mxu0 0.0
    %1010 = vmatprep.subr.mxu0 0.0
    %1011 = vmatpush1.msra.mxu0 0.0
    %1012 = vmatprep.subr.mxu0 0.0
    %1013 = vmatpush1.msra.mxu0 0.0
    %1014 = vmatprep.subr.mxu0 0.0
    %1015 = vmatpush1.msra.mxu0 0.0
    %1016 = vmatprep.subr.mxu0 0.0
    %1017 = vmatpush1.msra.mxu0 0.0
    %1018 = vmatprep.subr.mxu0 0.0
    %1019 = vmatpush1.msra.mxu0 0.0
    %1020 = vmatprep.subr.mxu0 0.0
    %1021 = vmatpush1.msra.mxu0 %v983
    %1022 = vmatprep.subr.mxu0 0.0
    %1023 = vmatpush1.msra.mxu0 %v981
    %1024 = vmatprep.subr.mxu0 0.0
    %1025 = vmatpush2.msra.mxu0 0.0
    %1026 = vmatprep.subr.mxu0 0.0
    %1027 = vmatpush2.msra.mxu0 0.0
    %1028 = vmatprep.subr.mxu0 0.0
    %1029 = vmatpush2.msra.mxu0 0.0
    %1030 = vmatprep.subr.mxu0 0.0
    %1031 = vmatpush2.msra.mxu0 0.0
    %1032 = vmatprep.subr.mxu0 0.0
    %1033 = vmatpush2.msra.mxu0 0.0
    %1034 = vmatprep.subr.mxu0 0.0
    %1035 = vmatpush2.msra.mxu0 0.0
    %1036 = vmatprep.subr.mxu0 0.0
    %1037 = vmatpush2.msra.mxu0 0.0
    %1038 = vmatprep.subr.mxu0 0.0
    %1039 = vmatpush2.msra.mxu0 0.0
    %1040 = vmatprep.subr.mxu0 0.0
    %1041 = vmatpush2.msra.mxu0 0.0
    %1042 = vmatprep.subr.mxu0 0.0
    %1043 = vmatpush2.msra.mxu0 0.0
    %1044 = vmatprep.subr.mxu0 0.0
    %1045 = vmatpush2.msra.mxu0 0.0
    %1046 = vmatprep.subr.mxu0 0.0
    %1047 = vmatpush2.msra.mxu0 0.0
    %1048 = vmatprep.subr.mxu0 0.0
    %1049 = vmatpush2.msra.mxu0 0.0
    %1050 = vmatprep.subr.mxu0 0.0
    %1051 = vmatpush2.msra.mxu0 0.0
    %1052 = vmatprep.subr.mxu0 0.0
    %1053 = vmatpush2.msra.mxu0 0.0
    %1054 = vmatprep.subr.mxu0 0.0
    %1055 = vmatpush2.msra.mxu0 0.0
    %1056 = vmatprep.mubr.f32.mxu0 0.0
    %1057 = vmatmul.mubr.f32.gmra.mxu0 %v987
    %v1058 = vpop.f32.mrf.mxu0
    %v1059 = vadd.f32 0.0, %v1058
    %v1060 = vpop.f32.mrf.mxu0
    %1061 = vmatprep.mubr.f32.mxu0 0.0
    %1062 = vmatmul.mubr.f32.gmra.mxu0 %v990
    %v1063 = vpop.f32.mrf.mxu0
    %v1064 = vadd.f32 0.0, %v1063
    %v1065 = vpop.f32.mrf.mxu0
    %1066 = vdwg.mxu0
    %1067 = vrot.lane.b32.xlu0 %v52, 32
    %v1068 = vpop.permute.xlu0 %1067
    %v1071 = vsel %vm321, %v1059, 0
    %v1074 = vsel %vm321, %v1064, 0
    %1076 = vmatprep.subr.mxu0 0.0
    %1077 = vmatpush1.msra.mxu0 0.0
    %1078 = vmatprep.subr.mxu0 0.0
    %1079 = vmatpush1.msra.mxu0 0.0
    %1080 = vmatprep.subr.mxu0 0.0
    %1081 = vmatpush1.msra.mxu0 0.0
    %1082 = vmatprep.subr.mxu0 0.0
    %1083 = vmatpush1.msra.mxu0 0.0
    %1084 = vmatprep.subr.mxu0 0.0
    %1085 = vmatpush1.msra.mxu0 0.0
    %1086 = vmatprep.subr.mxu0 0.0
    %1087 = vmatpush1.msra.mxu0 0.0
    %1088 = vmatprep.subr.mxu0 0.0
    %1089 = vmatpush1.msra.mxu0 0.0
    %1090 = vmatprep.subr.mxu0 0.0
    %1091 = vmatpush1.msra.mxu0 0.0
    %1092 = vmatprep.subr.mxu0 0.0
    %1093 = vmatpush1.msra.mxu0 0.0
    %1094 = vmatprep.subr.mxu0 0.0
    %1095 = vmatpush1.msra.mxu0 0.0
    %1096 = vmatprep.subr.mxu0 0.0
    %1097 = vmatpush1.msra.mxu0 0.0
    %1098 = vmatprep.subr.mxu0 0.0
    %1099 = vmatpush1.msra.mxu0 0.0
    %1100 = vmatprep.subr.mxu0 0.0
    %1101 = vmatpush1.msra.mxu0 0.0
    %1102 = vmatprep.subr.mxu0 0.0
    %1103 = vmatpush1.msra.mxu0 0.0
    %1104 = vmatprep.subr.mxu0 0.0
    %1105 = vmatpush1.msra.mxu0 0.0
    %1106 = vmatprep.subr.mxu0 0.0
    %1107 = vmatpush1.msra.mxu0 %v1068
    %1108 = vmatprep.subr.mxu0 0.0
    %1109 = vmatpush2.msra.mxu0 0.0
    %1110 = vmatprep.subr.mxu0 0.0
    %1111 = vmatpush2.msra.mxu0 0.0
    %1112 = vmatprep.subr.mxu0 0.0
    %1113 = vmatpush2.msra.mxu0 0.0
    %1114 = vmatprep.subr.mxu0 0.0
    %1115 = vmatpush2.msra.mxu0 0.0
    %1116 = vmatprep.subr.mxu0 0.0
    %1117 = vmatpush2.msra.mxu0 0.0
    %1118 = vmatprep.subr.mxu0 0.0
    %1119 = vmatpush2.msra.mxu0 0.0
    %1120 = vmatprep.subr.mxu0 0.0
    %1121 = vmatpush2.msra.mxu0 0.0
    %1122 = vmatprep.subr.mxu0 0.0
    %1123 = vmatpush2.msra.mxu0 0.0
    %1124 = vmatprep.subr.mxu0 0.0
    %1125 = vmatpush2.msra.mxu0 0.0
    %1126 = vmatprep.subr.mxu0 0.0
    %1127 = vmatpush2.msra.mxu0 0.0
    %1128 = vmatprep.subr.mxu0 0.0
    %1129 = vmatpush2.msra.mxu0 0.0
    %1130 = vmatprep.subr.mxu0 0.0
    %1131 = vmatpush2.msra.mxu0 0.0
    %1132 = vmatprep.subr.mxu0 0.0
    %1133 = vmatpush2.msra.mxu0 0.0
    %1134 = vmatprep.subr.mxu0 0.0
    %1135 = vmatpush2.msra.mxu0 0.0
    %1136 = vmatprep.subr.mxu0 0.0
    %1137 = vmatpush2.msra.mxu0 0.0
    %1138 = vmatprep.subr.mxu0 0.0
    %1139 = vmatpush2.msra.mxu0 0.0
    %1140 = vmatprep.mubr.f32.mxu0 0.0
    %1141 = vmatmul.mubr.f32.gmra.mxu0 %v1071
    %v1142 = vpop.f32.mrf.mxu0
    %v1143 = vadd.f32 0.0, %v1142
    %v1144 = vpop.f32.mrf.mxu0
    %1145 = vmatprep.mubr.f32.mxu0 0.0
    %1146 = vmatmul.mubr.f32.gmra.mxu0 %v1074
    %v1147 = vpop.f32.mrf.mxu0
    %v1148 = vadd.f32 0.0, %v1147
    %v1149 = vpop.f32.mrf.mxu0
    %1150 = vdwg.mxu0
    %v1151 = vadd.f32 %v863, %v1143
    %v1152 = vadd.f32 %v868, %v1148
    %1153 = vrot.lane.b32.xlu0 %v206, 104
    %v1154 = vpop.permute.xlu0 %1153
    %1155 = vrot.lane.b32.xlu0 %v211, 104
    %v1156 = vpop.permute.xlu0 %1155
    %1157 = vrot.lane.b32.xlu0 %v206, 72
    %v1158 = vpop.permute.xlu0 %1157
    %1159 = vrot.lane.b32.xlu0 %v211, 72
    %v1160 = vpop.permute.xlu0 %1159
    %v1161 = vsel %vm321, %v1154, 0
    %v1163 = vsel %vm321, %v1156, 0
    %v1165 = vsel %vm321, %v1158, 0
    %v1167 = vsel %vm321, %v1160, 0
    %1169 = vmatprep.subr.mxu0 0.0
    %1170 = vmatpush1.xpose.msra.mxu0 0.0
    %1171 = vmatprep.subr.mxu0 0.0
    %1172 = vmatpush1.xpose.msra.mxu0 0.0
    %1173 = vmatprep.subr.mxu0 0.0
    %1174 = vmatpush1.xpose.msra.mxu0 0.0
    %1175 = vmatprep.subr.mxu0 0.0
    %1176 = vmatpush1.xpose.msra.mxu0 0.0
    %1177 = vmatprep.subr.mxu0 0.0
    %1178 = vmatpush1.xpose.msra.mxu0 0.0
    %1179 = vmatprep.subr.mxu0 0.0
    %1180 = vmatpush1.xpose.msra.mxu0 0.0
    %1181 = vmatprep.subr.mxu0 0.0
    %1182 = vmatpush1.xpose.msra.mxu0 0.0
    %1183 = vmatprep.subr.mxu0 0.0
    %1184 = vmatpush1.xpose.msra.mxu0 0.0
    %1185 = vmatprep.subr.mxu0 0.0
    %1186 = vmatpush1.xpose.msra.mxu0 0.0
    %1187 = vmatprep.subr.mxu0 0.0
    %1188 = vmatpush1.xpose.msra.mxu0 0.0
    %1189 = vmatprep.subr.mxu0 0.0
    %1190 = vmatpush1.xpose.msra.mxu0 0.0
    %1191 = vmatprep.subr.mxu0 0.0
    %1192 = vmatpush1.xpose.msra.mxu0 0.0
    %1193 = vmatprep.subr.mxu0 0.0
    %1194 = vmatpush1.xpose.msra.mxu0 0.0
    %1195 = vmatprep.subr.mxu0 0.0
    %1196 = vmatpush1.xpose.msra.mxu0 0.0
    %1197 = vmatprep.subr.mxu0 0.0
    %1198 = vmatpush1.xpose.msra.mxu0 %v1167
    %1199 = vmatprep.subr.mxu0 0.0
    %1200 = vmatpush1.xpose.msra.mxu0 %v1165
    %1201 = vmatprep.subr.mxu0 0.0
    %1202 = vmatpush2.xpose.msra.mxu0 0.0
    %1203 = vmatprep.subr.mxu0 0.0
    %1204 = vmatpush2.xpose.msra.mxu0 0.0
    %1205 = vmatprep.subr.mxu0 0.0
    %1206 = vmatpush2.xpose.msra.mxu0 0.0
    %1207 = vmatprep.subr.mxu0 0.0
    %1208 = vmatpush2.xpose.msra.mxu0 0.0
    %1209 = vmatprep.subr.mxu0 0.0
    %1210 = vmatpush2.xpose.msra.mxu0 0.0
    %1211 = vmatprep.subr.mxu0 0.0
    %1212 = vmatpush2.xpose.msra.mxu0 0.0
    %1213 = vmatprep.subr.mxu0 0.0
    %1214 = vmatpush2.xpose.msra.mxu0 0.0
    %1215 = vmatprep.subr.mxu0 0.0
    %1216 = vmatpush2.xpose.msra.mxu0 0.0
    %1217 = vmatprep.subr.mxu0 0.0
    %1218 = vmatpush2.xpose.msra.mxu0 0.0
    %1219 = vmatprep.subr.mxu0 0.0
    %1220 = vmatpush2.xpose.msra.mxu0 0.0
    %1221 = vmatprep.subr.mxu0 0.0
    %1222 = vmatpush2.xpose.msra.mxu0 0.0
    %1223 = vmatprep.subr.mxu0 0.0
    %1224 = vmatpush2.xpose.msra.mxu0 0.0
    %1225 = vmatprep.subr.mxu0 0.0
    %1226 = vmatpush2.xpose.msra.mxu0 0.0
    %1227 = vmatprep.subr.mxu0 0.0
    %1228 = vmatpush2.xpose.msra.mxu0 0.0
    %1229 = vmatprep.subr.mxu0 0.0
    %1230 = vmatpush2.xpose.msra.mxu0 0.0
    %1231 = vmatprep.subr.mxu0 0.0
    %1232 = vmatpush2.xpose.msra.mxu0 0.0
    %1233 = vmatprep.mubr.f32.mxu0 0.0
    %1234 = vmatmul.mubr.f32.gmra.mxu0 %v1161
    %v1235 = vpop.f32.mrf.mxu0
    %v1236 = vadd.f32 0.0, %v1235
    %v1237 = vpop.f32.mrf.mxu0
    %1238 = vmatprep.mubr.f32.mxu0 0.0
    %1239 = vmatmul.mubr.f32.gmra.mxu0 %v1163
    %v1240 = vpop.f32.mrf.mxu0
    %v1241 = vadd.f32 0.0, %v1240
    %v1242 = vpop.f32.mrf.mxu0
    %1243 = vdwg.mxu0
    %v1244 = vmul.f32 %v1236, 0.35355338
    %v1245 = vmul.f32 %v1241, 0.35355338
    %v1246 = vmul.f32 %v1244, 1.442695
    %v1247 = vpow.pop %v1246
    %v1248 = vmul.f32 %v1245, 1.442695
    %v1249 = vpow.pop %v1248
    %v1250 = vsel %vm44, %v1247, 0.0
    %v1251 = vsel %vm45, %v1249, 0.0
    %v1252 = vsel %vm413, %v1250, 0.0
    %1253 = vadd.xlane.f32.xlu0 %v1252
    %v1254 = vpop.xlane.xlu0 %1253
    %v1255 = vsel %vm413, %v1251, 0.0
    %1256 = vadd.xlane.f32.xlu0 %v1255
    %v1257 = vpop.xlane.xlu0 %1256
    %v1258 = vrcp.pop %v1254
    %v1259 = vrcp.pop %v1257
    %v1260 = vmul.f32 %v1250, %v1258
    %v1261 = vmul.f32 %v1251, %v1259
    %1262 = vrot.lane.b32.xlu0 %v307, 104
    %v1263 = vpop.permute.xlu0 %1262
    %1264 = vrot.lane.b32.xlu0 %v312, 104
    %v1265 = vpop.permute.xlu0 %1264
    %v1269 = vsel %vm413, %v1260, 0
    %v1272 = vsel %vm413, %v1261, 0
    %1274 = vmatprep.subr.mxu0 0.0
    %1275 = vmatpush1.msra.mxu0 0.0
    %1276 = vmatprep.subr.mxu0 0.0
    %1277 = vmatpush1.msra.mxu0 0.0
    %1278 = vmatprep.subr.mxu0 0.0
    %1279 = vmatpush1.msra.mxu0 0.0
    %1280 = vmatprep.subr.mxu0 0.0
    %1281 = vmatpush1.msra.mxu0 0.0
    %1282 = vmatprep.subr.mxu0 0.0
    %1283 = vmatpush1.msra.mxu0 0.0
    %1284 = vmatprep.subr.mxu0 0.0
    %1285 = vmatpush1.msra.mxu0 0.0
    %1286 = vmatprep.subr.mxu0 0.0
    %1287 = vmatpush1.msra.mxu0 0.0
    %1288 = vmatprep.subr.mxu0 0.0
    %1289 = vmatpush1.msra.mxu0 0.0
    %1290 = vmatprep.subr.mxu0 0.0
    %1291 = vmatpush1.msra.mxu0 0.0
    %1292 = vmatprep.subr.mxu0 0.0
    %1293 = vmatpush1.msra.mxu0 0.0
    %1294 = vmatprep.subr.mxu0 0.0
    %1295 = vmatpush1.msra.mxu0 0.0
    %1296 = vmatprep.subr.mxu0 0.0
    %1297 = vmatpush1.msra.mxu0 0.0
    %1298 = vmatprep.subr.mxu0 0.0
    %1299 = vmatpush1.msra.mxu0 0.0
    %1300 = vmatprep.subr.mxu0 0.0
    %1301 = vmatpush1.msra.mxu0 0.0
    %1302 = vmatprep.subr.mxu0 0.0
    %1303 = vmatpush1.msra.mxu0 %v1265
    %1304 = vmatprep.subr.mxu0 0.0
    %1305 = vmatpush1.msra.mxu0 %v1263
    %1306 = vmatprep.subr.mxu0 0.0
    %1307 = vmatpush2.msra.mxu0 0.0
    %1308 = vmatprep.subr.mxu0 0.0
    %1309 = vmatpush2.msra.mxu0 0.0
    %1310 = vmatprep.subr.mxu0 0.0
    %1311 = vmatpush2.msra.mxu0 0.0
    %1312 = vmatprep.subr.mxu0 0.0
    %1313 = vmatpush2.msra.mxu0 0.0
    %1314 = vmatprep.subr.mxu0 0.0
    %1315 = vmatpush2.msra.mxu0 0.0
    %1316 = vmatprep.subr.mxu0 0.0
    %1317 = vmatpush2.msra.mxu0 0.0
    %1318 = vmatprep.subr.mxu0 0.0
    %1319 = vmatpush2.msra.mxu0 0.0
    %1320 = vmatprep.subr.mxu0 0.0
    %1321 = vmatpush2.msra.mxu0 0.0
    %1322 = vmatprep.subr.mxu0 0.0
    %1323 = vmatpush2.msra.mxu0 0.0
    %1324 = vmatprep.subr.mxu0 0.0
    %1325 = vmatpush2.msra.mxu0 0.0
    %1326 = vmatprep.subr.mxu0 0.0
    %1327 = vmatpush2.msra.mxu0 0.0
    %1328 = vmatprep.subr.mxu0 0.0
    %1329 = vmatpush2.msra.mxu0 0.0
    %1330 = vmatprep.subr.mxu0 0.0
    %1331 = vmatpush2.msra.mxu0 0.0
    %1332 = vmatprep.subr.mxu0 0.0
    %1333 = vmatpush2.msra.mxu0 0.0
    %1334 = vmatprep.subr.mxu0 0.0
    %1335 = vmatpush2.msra.mxu0 0.0
    %1336 = vmatprep.subr.mxu0 0.0
    %1337 = vmatpush2.msra.mxu0 0.0
    %1338 = vmatprep.mubr.f32.mxu0 0.0
    %1339 = vmatmul.mubr.f32.gmra.mxu0 %v1269
    %v1340 = vpop.f32.mrf.mxu0
    %v1341 = vadd.f32 0.0, %v1340
    %v1342 = vpop.f32.mrf.mxu0
    %1343 = vmatprep.mubr.f32.mxu0 0.0
    %1344 = vmatmul.mubr.f32.gmra.mxu0 %v1272
    %v1345 = vpop.f32.mrf.mxu0
    %v1346 = vadd.f32 0.0, %v1345
    %v1347 = vpop.f32.mrf.mxu0
    %1348 = vdwg.mxu0
    %1349 = vrot.lane.b32.xlu0 %v53, 32
    %v1350 = vpop.permute.xlu0 %1349
    %v1353 = vsel %vm321, %v1341, 0
    %v1356 = vsel %vm321, %v1346, 0
    %1358 = vmatprep.subr.mxu0 0.0
    %1359 = vmatpush1.msra.mxu0 0.0
    %1360 = vmatprep.subr.mxu0 0.0
    %1361 = vmatpush1.msra.mxu0 0.0
    %1362 = vmatprep.subr.mxu0 0.0
    %1363 = vmatpush1.msra.mxu0 0.0
    %1364 = vmatprep.subr.mxu0 0.0
    %1365 = vmatpush1.msra.mxu0 0.0
    %1366 = vmatprep.subr.mxu0 0.0
    %1367 = vmatpush1.msra.mxu0 0.0
    %1368 = vmatprep.subr.mxu0 0.0
    %1369 = vmatpush1.msra.mxu0 0.0
    %1370 = vmatprep.subr.mxu0 0.0
    %1371 = vmatpush1.msra.mxu0 0.0
    %1372 = vmatprep.subr.mxu0 0.0
    %1373 = vmatpush1.msra.mxu0 0.0
    %1374 = vmatprep.subr.mxu0 0.0
    %1375 = vmatpush1.msra.mxu0 0.0
    %1376 = vmatprep.subr.mxu0 0.0
    %1377 = vmatpush1.msra.mxu0 0.0
    %1378 = vmatprep.subr.mxu0 0.0
    %1379 = vmatpush1.msra.mxu0 0.0
    %1380 = vmatprep.subr.mxu0 0.0
    %1381 = vmatpush1.msra.mxu0 0.0
    %1382 = vmatprep.subr.mxu0 0.0
    %1383 = vmatpush1.msra.mxu0 0.0
    %1384 = vmatprep.subr.mxu0 0.0
    %1385 = vmatpush1.msra.mxu0 0.0
    %1386 = vmatprep.subr.mxu0 0.0
    %1387 = vmatpush1.msra.mxu0 0.0
    %1388 = vmatprep.subr.mxu0 0.0
    %1389 = vmatpush1.msra.mxu0 %v1350
    %1390 = vmatprep.subr.mxu0 0.0
    %1391 = vmatpush2.msra.mxu0 0.0
    %1392 = vmatprep.subr.mxu0 0.0
    %1393 = vmatpush2.msra.mxu0 0.0
    %1394 = vmatprep.subr.mxu0 0.0
    %1395 = vmatpush2.msra.mxu0 0.0
    %1396 = vmatprep.subr.mxu0 0.0
    %1397 = vmatpush2.msra.mxu0 0.0
    %1398 = vmatprep.subr.mxu0 0.0
    %1399 = vmatpush2.msra.mxu0 0.0
    %1400 = vmatprep.subr.mxu0 0.0
    %1401 = vmatpush2.msra.mxu0 0.0
    %1402 = vmatprep.subr.mxu0 0.0
    %1403 = vmatpush2.msra.mxu0 0.0
    %1404 = vmatprep.subr.mxu0 0.0
    %1405 = vmatpush2.msra.mxu0 0.0
    %1406 = vmatprep.subr.mxu0 0.0
    %1407 = vmatpush2.msra.mxu0 0.0
    %1408 = vmatprep.subr.mxu0 0.0
    %1409 = vmatpush2.msra.mxu0 0.0
    %1410 = vmatprep.subr.mxu0 0.0
    %1411 = vmatpush2.msra.mxu0 0.0
    %1412 = vmatprep.subr.mxu0 0.0
    %1413 = vmatpush2.msra.mxu0 0.0
    %1414 = vmatprep.subr.mxu0 0.0
    %1415 = vmatpush2.msra.mxu0 0.0
    %1416 = vmatprep.subr.mxu0 0.0
    %1417 = vmatpush2.msra.mxu0 0.0
    %1418 = vmatprep.subr.mxu0 0.0
    %1419 = vmatpush2.msra.mxu0 0.0
    %1420 = vmatprep.subr.mxu0 0.0
    %1421 = vmatpush2.msra.mxu0 0.0
    %1422 = vmatprep.mubr.f32.mxu0 0.0
    %1423 = vmatmul.mubr.f32.gmra.mxu0 %v1353
    %v1424 = vpop.f32.mrf.mxu0
    %v1425 = vadd.f32 0.0, %v1424
    %v1426 = vpop.f32.mrf.mxu0
    %1427 = vmatprep.mubr.f32.mxu0 0.0
    %1428 = vmatmul.mubr.f32.gmra.mxu0 %v1356
    %v1429 = vpop.f32.mrf.mxu0
    %v1430 = vadd.f32 0.0, %v1429
    %v1431 = vpop.f32.mrf.mxu0
    %1432 = vdwg.mxu0
    %v1433 = vadd.f32 %v1151, %v1425
    %v1434 = vadd.f32 %v1152, %v1430
    %1435 = vrot.lane.b32.xlu0 %v132, 32
    %v1436 = vpop.permute.xlu0 %1435
    %v1438 = vadd.f32 %v1433, %v1436
    %v1439 = vadd.f32 %v1434, %v1436
    %v1440 = vadd.f32 %v30, %v1438
    %v1441 = vadd.f32 %v31, %v1439
    %v1442 = vsel %vm72, %v1440, 0.0
    %1443 = vadd.xlane.f32.xlu0 %v1442
    %v1444 = vpop.xlane.xlu0 %1443
    %v1445 = vsel %vm72, %v1441, 0.0
    %1446 = vadd.xlane.f32.xlu0 %v1445
    %v1447 = vpop.xlane.xlu0 %1446
    %v1448 = vmul.f32 %v1444, %v79
    %v1449 = vmul.f32 %v1447, %v79
    %v1450 = vsub.f32 %v1440, %v1448
    %v1451 = vsub.f32 %v1441, %v1449
    %v1452 = vmul.f32 %v1450, %v1450
    %v1453 = vmul.f32 %v1451, %v1451
    %v1454 = vsel %vm72, %v1452, 0.0
    %1455 = vadd.xlane.f32.xlu0 %v1454
    %v1456 = vpop.xlane.xlu0 %1455
    %v1457 = vsel %vm72, %v1453, 0.0
    %1458 = vadd.xlane.f32.xlu0 %v1457
    %v1459 = vpop.xlane.xlu0 %1458
    %v1460 = vmul.f32 %v1456, %v92
    %v1461 = vmul.f32 %v1459, %v92
    %v1462 = vrsqrt.pop %v1460
    %v1463 = vmul.f32 %v1460, %v1462
    %vm1464 = vcmp.eq.f32.partialorder %v1460, inf
    %v1465 = vsel %vm1464, %v1460, %v1463
    %vm1466 = vcmp.eq.f32.partialorder %v1460, 0.0
    %v1467 = vand.u32 %v1460, 2147483648
    %v1468 = vsel %vm1466, %v1467, %v1465
    %v1469 = vrsqrt.pop %v1461
    %v1470 = vmul.f32 %v1461, %v1469
    %vm1471 = vcmp.eq.f32.partialorder %v1461, inf
    %v1472 = vsel %vm1471, %v1461, %v1470
    %vm1473 = vcmp.eq.f32.partialorder %v1461, 0.0
    %v1474 = vand.u32 %v1461, 2147483648
    %v1475 = vsel %vm1473, %v1474, %v1472
    %v1476 = vadd.f32 %v1468, 1e-06
    %v1477 = vadd.f32 %v1475, 1e-06
    %v1478 = vrcp.pop %v1476
    %v1479 = vrcp.pop %v1477
    %v1480 = vmul.f32 %v1450, %v1478
    %v1481 = vmul.f32 %v1451, %v1479
    %v1482 = vlaneseq
    %v1483 = vshrl.u32 %v1482, 7
    %v1484 = vsub.s32 2, %v1483
    %v1485 = vrot.slane %v70, %v1484
    %v1486 = vmul.f32 %v1485, %v1480
    %v1487 = vmul.f32 %v1485, %v1481
    %v1488 = vlaneseq
    %v1489 = vshrl.u32 %v1488, 7
    %v1490 = vsub.s32 3, %v1489
    %v1491 = vrot.slane %v70, %v1490
    %v1492 = vadd.f32 %v1486, %v1491
    %v1493 = vadd.f32 %v1487, %v1491
    %v1494 = vadd.f32 %v1492, %v32
    %v1495 = vadd.f32 %v1493, %v33
    %v1496 = vadd.f32 %v34, %v38
    %v1497 = vadd.f32 %v35, %v39
    %v1498 = vadd.f32 %v36, %v40
    %v1499 = vadd.f32 %v37, %v41
    %v1500 = vlaneseq
    %v1501 = vshrl.u32 %v1500, 7
    %v1502 = vsub.s32 7, %v1501
    %v1503 = vrot.slane %v70, %v1502
    %v1505 = vsel %vm72, %v1494, 0
    %v1508 = vsel %vm72, %v1495, 0
    %1510 = vmatprep.subr.mxu0 0.0
    %1511 = vmatpush1.msra.mxu0 0.0
    %1512 = vmatprep.subr.mxu0 0.0
    %1513 = vmatpush1.msra.mxu0 0.0
    %1514 = vmatprep.subr.mxu0 0.0
    %1515 = vmatpush1.msra.mxu0 0.0
    %1516 = vmatprep.subr.mxu0 0.0
    %1517 = vmatpush1.msra.mxu0 0.0
    %1518 = vmatprep.subr.mxu0 0.0
    %1519 = vmatpush1.msra.mxu0 0.0
    %1520 = vmatprep.subr.mxu0 0.0
    %1521 = vmatpush1.msra.mxu0 0.0
    %1522 = vmatprep.subr.mxu0 0.0
    %1523 = vmatpush1.msra.mxu0 0.0
    %1524 = vmatprep.subr.mxu0 0.0
    %1525 = vmatpush1.msra.mxu0 0.0
    %1526 = vmatprep.subr.mxu0 0.0
    %1527 = vmatpush1.msra.mxu0 0.0
    %1528 = vmatprep.subr.mxu0 0.0
    %1529 = vmatpush1.msra.mxu0 0.0
    %1530 = vmatprep.subr.mxu0 0.0
    %1531 = vmatpush1.msra.mxu0 0.0
    %1532 = vmatprep.subr.mxu0 0.0
    %1533 = vmatpush1.msra.mxu0 0.0
    %1534 = vmatprep.subr.mxu0 0.0
    %1535 = vmatpush1.msra.mxu0 %v57
    %1536 = vmatprep.subr.mxu0 0.0
    %1537 = vmatpush1.msra.mxu0 %v56
    %1538 = vmatprep.subr.mxu0 0.0
    %1539 = vmatpush1.msra.mxu0 %v55
    %1540 = vmatprep.subr.mxu0 0.0
    %1541 = vmatpush1.msra.mxu0 %v54
    %1542 = vmatprep.subr.mxu0 0.0
    %1543 = vmatpush2.msra.mxu0 0.0
    %1544 = vmatprep.subr.mxu0 0.0
    %1545 = vmatpush2.msra.mxu0 0.0
    %1546 = vmatprep.subr.mxu0 0.0
    %1547 = vmatpush2.msra.mxu0 0.0
    %1548 = vmatprep.subr.mxu0 0.0
    %1549 = vmatpush2.msra.mxu0 0.0
    %1550 = vmatprep.subr.mxu0 0.0
    %1551 = vmatpush2.msra.mxu0 0.0
    %1552 = vmatprep.subr.mxu0 0.0
    %1553 = vmatpush2.msra.mxu0 0.0
    %1554 = vmatprep.subr.mxu0 0.0
    %1555 = vmatpush2.msra.mxu0 0.0
    %1556 = vmatprep.subr.mxu0 0.0
    %1557 = vmatpush2.msra.mxu0 0.0
    %1558 = vmatprep.subr.mxu0 0.0
    %1559 = vmatpush2.msra.mxu0 0.0
    %1560 = vmatprep.subr.mxu0 0.0
    %1561 = vmatpush2.msra.mxu0 0.0
    %1562 = vmatprep.subr.mxu0 0.0
    %1563 = vmatpush2.msra.mxu0 0.0
    %1564 = vmatprep.subr.mxu0 0.0
    %1565 = vmatpush2.msra.mxu0 0.0
    %1566 = vmatprep.subr.mxu0 0.0
    %1567 = vmatpush2.msra.mxu0 0.0
    %1568 = vmatprep.subr.mxu0 0.0
    %1569 = vmatpush2.msra.mxu0 0.0
    %1570 = vmatprep.subr.mxu0 0.0
    %1571 = vmatpush2.msra.mxu0 0.0
    %1572 = vmatprep.subr.mxu0 0.0
    %1573 = vmatpush2.msra.mxu0 0.0
    %1574 = vmatprep.mubr.f32.mxu0 0.0
    %1575 = vmatmul.mubr.f32.gmra.mxu0 %v1505
    %v1576 = vpop.f32.mrf.mxu0
    %v1577 = vadd.f32 %v1503, %v1576
    %v1578 = vpop.f32.mrf.mxu0
    %1579 = vmatprep.mubr.f32.mxu0 0.0
    %1580 = vmatmul.mubr.f32.gmra.mxu0 %v1508
    %v1581 = vpop.f32.mrf.mxu0
    %v1582 = vadd.f32 %v1503, %v1581
    %v1583 = vpop.f32.mrf.mxu0
    %1584 = vdwg.mxu0
    %1589 = vrot.lane.b32.xlu0 %v54, 96
    %v1590 = vpop.permute.xlu0 %1589
    %1591 = vrot.lane.b32.xlu0 %v55, 96
    %v1592 = vpop.permute.xlu0 %1591
    %1593 = vrot.lane.b32.xlu0 %v56, 96
    %v1594 = vpop.permute.xlu0 %1593
    %1595 = vrot.lane.b32.xlu0 %v57, 96
    %v1596 = vpop.permute.xlu0 %1595
    %1602 = vrot.lane.b32.xlu0 %v1503, 96
    %v1603 = vpop.permute.xlu0 %1602
    %v1606 = vsel %vm72, %v1496, 0
    %v1609 = vsel %vm72, %v1497, 0
    %v1612 = vsel %vm72, %v1498, 0
    %v1615 = vsel %vm72, %v1499, 0
    %1617 = vmatprep.subr.mxu0 0.0
    %1618 = vmatpush1.msra.mxu0 0.0
    %1619 = vmatprep.subr.mxu0 0.0
    %1620 = vmatpush1.msra.mxu0 0.0
    %1621 = vmatprep.subr.mxu0 0.0
    %1622 = vmatpush1.msra.mxu0 0.0
    %1623 = vmatprep.subr.mxu0 0.0
    %1624 = vmatpush1.msra.mxu0 0.0
    %1625 = vmatprep.subr.mxu0 0.0
    %1626 = vmatpush1.msra.mxu0 0.0
    %1627 = vmatprep.subr.mxu0 0.0
    %1628 = vmatpush1.msra.mxu0 0.0
    %1629 = vmatprep.subr.mxu0 0.0
    %1630 = vmatpush1.msra.mxu0 0.0
    %1631 = vmatprep.subr.mxu0 0.0
    %1632 = vmatpush1.msra.mxu0 0.0
    %1633 = vmatprep.subr.mxu0 0.0
    %1634 = vmatpush1.msra.mxu0 0.0
    %1635 = vmatprep.subr.mxu0 0.0
    %1636 = vmatpush1.msra.mxu0 0.0
    %1637 = vmatprep.subr.mxu0 0.0
    %1638 = vmatpush1.msra.mxu0 0.0
    %1639 = vmatprep.subr.mxu0 0.0
    %1640 = vmatpush1.msra.mxu0 0.0
    %1641 = vmatprep.subr.mxu0 0.0
    %1642 = vmatpush1.msra.mxu0 %v1596
    %1643 = vmatprep.subr.mxu0 0.0
    %1644 = vmatpush1.msra.mxu0 %v1594
    %1645 = vmatprep.subr.mxu0 0.0
    %1646 = vmatpush1.msra.mxu0 %v1592
    %1647 = vmatprep.subr.mxu0 0.0
    %1648 = vmatpush1.msra.mxu0 %v1590
    %1649 = vmatprep.subr.mxu0 0.0
    %1650 = vmatpush2.msra.mxu0 0.0
    %1651 = vmatprep.subr.mxu0 0.0
    %1652 = vmatpush2.msra.mxu0 0.0
    %1653 = vmatprep.subr.mxu0 0.0
    %1654 = vmatpush2.msra.mxu0 0.0
    %1655 = vmatprep.subr.mxu0 0.0
    %1656 = vmatpush2.msra.mxu0 0.0
    %1657 = vmatprep.subr.mxu0 0.0
    %1658 = vmatpush2.msra.mxu0 0.0
    %1659 = vmatprep.subr.mxu0 0.0
    %1660 = vmatpush2.msra.mxu0 0.0
    %1661 = vmatprep.subr.mxu0 0.0
    %1662 = vmatpush2.msra.mxu0 0.0
    %1663 = vmatprep.subr.mxu0 0.0
    %1664 = vmatpush2.msra.mxu0 0.0
    %1665 = vmatprep.subr.mxu0 0.0
    %1666 = vmatpush2.msra.mxu0 0.0
    %1667 = vmatprep.subr.mxu0 0.0
    %1668 = vmatpush2.msra.mxu0 0.0
    %1669 = vmatprep.subr.mxu0 0.0
    %1670 = vmatpush2.msra.mxu0 0.0
    %1671 = vmatprep.subr.mxu0 0.0
    %1672 = vmatpush2.msra.mxu0 0.0
    %1673 = vmatprep.subr.mxu0 0.0
    %1674 = vmatpush2.msra.mxu0 0.0
    %1675 = vmatprep.subr.mxu0 0.0
    %1676 = vmatpush2.msra.mxu0 0.0
    %1677 = vmatprep.subr.mxu0 0.0
    %1678 = vmatpush2.msra.mxu0 0.0
    %1679 = vmatprep.subr.mxu0 0.0
    %1680 = vmatpush2.msra.mxu0 0.0
    %1681 = vmatprep.mubr.f32.mxu0 0.0
    %1682 = vmatmul.mubr.f32.gmra.mxu0 %v1606
    %v1683 = vpop.f32.mrf.mxu0
    %v1684 = vadd.f32 %v1603, %v1683
    %v1685 = vpop.f32.mrf.mxu0
    %1686 = vmatprep.mubr.f32.mxu0 0.0
    %1687 = vmatmul.mubr.f32.gmra.mxu0 %v1609
    %v1688 = vpop.f32.mrf.mxu0
    %v1689 = vadd.f32 %v1603, %v1688
    %v1690 = vpop.f32.mrf.mxu0
    %1691 = vmatprep.mubr.f32.mxu0 0.0
    %1692 = vmatmul.mubr.f32.gmra.mxu0 %v1612
    %v1693 = vpop.f32.mrf.mxu0
    %v1694 = vadd.f32 %v1603, %v1693
    %v1695 = vpop.f32.mrf.mxu0
    %1696 = vmatprep.mubr.f32.mxu0 0.0
    %1697 = vmatmul.mubr.f32.gmra.mxu0 %v1615
    %v1698 = vpop.f32.mrf.mxu0
    %v1699 = vadd.f32 %v1603, %v1698
    %v1700 = vpop.f32.mrf.mxu0
    %1701 = vdwg.mxu0
    %1702 = vrot.lane.b32.xlu0 %v54, 64
    %v1703 = vpop.permute.xlu0 %1702
    %1704 = vrot.lane.b32.xlu0 %v55, 64
    %v1705 = vpop.permute.xlu0 %1704
    %1706 = vrot.lane.b32.xlu0 %v56, 64
    %v1707 = vpop.permute.xlu0 %1706
    %1708 = vrot.lane.b32.xlu0 %v57, 64
    %v1709 = vpop.permute.xlu0 %1708
    %1714 = vrot.lane.b32.xlu0 %v1503, 64
    %v1715 = vpop.permute.xlu0 %1714
    %v1718 = vsel %vm72, %v34, 0
    %v1721 = vsel %vm72, %v35, 0
    %v1724 = vsel %vm72, %v36, 0
    %v1727 = vsel %vm72, %v37, 0
    %1729 = vmatprep.subr.mxu0 0.0
    %1730 = vmatpush1.msra.mxu0 0.0
    %1731 = vmatprep.subr.mxu0 0.0
    %1732 = vmatpush1.msra.mxu0 0.0
    %1733 = vmatprep.subr.mxu0 0.0
    %1734 = vmatpush1.msra.mxu0 0.0
    %1735 = vmatprep.subr.mxu0 0.0
    %1736 = vmatpush1.msra.mxu0 0.0
    %1737 = vmatprep.subr.mxu0 0.0
    %1738 = vmatpush1.msra.mxu0 0.0
    %1739 = vmatprep.subr.mxu0 0.0
    %1740 = vmatpush1.msra.mxu0 0.0
    %1741 = vmatprep.subr.mxu0 0.0
    %1742 = vmatpush1.msra.mxu0 0.0
    %1743 = vmatprep.subr.mxu0 0.0
    %1744 = vmatpush1.msra.mxu0 0.0
    %1745 = vmatprep.subr.mxu0 0.0
    %1746 = vmatpush1.msra.mxu0 0.0
    %1747 = vmatprep.subr.mxu0 0.0
    %1748 = vmatpush1.msra.mxu0 0.0
    %1749 = vmatprep.subr.mxu0 0.0
    %1750 = vmatpush1.msra.mxu0 0.0
    %1751 = vmatprep.subr.mxu0 0.0
    %1752 = vmatpush1.msra.mxu0 0.0
    %1753 = vmatprep.subr.mxu0 0.0
    %1754 = vmatpush1.msra.mxu0 %v1709
    %1755 = vmatprep.subr.mxu0 0.0
    %1756 = vmatpush1.msra.mxu0 %v1707
    %1757 = vmatprep.subr.mxu0 0.0
    %1758 = vmatpush1.msra.mxu0 %v1705
    %1759 = vmatprep.subr.mxu0 0.0
    %1760 = vmatpush1.msra.mxu0 %v1703
    %1761 = vmatprep.subr.mxu0 0.0
    %1762 = vmatpush2.msra.mxu0 0.0
    %1763 = vmatprep.subr.mxu0 0.0
    %1764 = vmatpush2.msra.mxu0 0.0
    %1765 = vmatprep.subr.mxu0 0.0
    %1766 = vmatpush2.msra.mxu0 0.0
    %1767 = vmatprep.subr.mxu0 0.0
    %1768 = vmatpush2.msra.mxu0 0.0
    %1769 = vmatprep.subr.mxu0 0.0
    %1770 = vmatpush2.msra.mxu0 0.0
    %1771 = vmatprep.subr.mxu0 0.0
    %1772 = vmatpush2.msra.mxu0 0.0
    %1773 = vmatprep.subr.mxu0 0.0
    %1774 = vmatpush2.msra.mxu0 0.0
    %1775 = vmatprep.subr.mxu0 0.0
    %1776 = vmatpush2.msra.mxu0 0.0
    %1777 = vmatprep.subr.mxu0 0.0
    %1778 = vmatpush2.msra.mxu0 0.0
    %1779 = vmatprep.subr.mxu0 0.0
    %1780 = vmatpush2.msra.mxu0 0.0
    %1781 = vmatprep.subr.mxu0 0.0
    %1782 = vmatpush2.msra.mxu0 0.0
    %1783 = vmatprep.subr.mxu0 0.0
    %1784 = vmatpush2.msra.mxu0 0.0
    %1785 = vmatprep.subr.mxu0 0.0
    %1786 = vmatpush2.msra.mxu0 0.0
    %1787 = vmatprep.subr.mxu0 0.0
    %1788 = vmatpush2.msra.mxu0 0.0
    %1789 = vmatprep.subr.mxu0 0.0
    %1790 = vmatpush2.msra.mxu0 0.0
    %1791 = vmatprep.subr.mxu0 0.0
    %1792 = vmatpush2.msra.mxu0 0.0
    %1793 = vmatprep.mubr.f32.mxu0 0.0
    %1794 = vmatmul.mubr.f32.gmra.mxu0 %v1718
    %v1795 = vpop.f32.mrf.mxu0
    %v1796 = vadd.f32 %v1715, %v1795
    %v1797 = vpop.f32.mrf.mxu0
    %1798 = vmatprep.mubr.f32.mxu0 0.0
    %1799 = vmatmul.mubr.f32.gmra.mxu0 %v1721
    %v1800 = vpop.f32.mrf.mxu0
    %v1801 = vadd.f32 %v1715, %v1800
    %v1802 = vpop.f32.mrf.mxu0
    %1803 = vmatprep.mubr.f32.mxu0 0.0
    %1804 = vmatmul.mubr.f32.gmra.mxu0 %v1724
    %v1805 = vpop.f32.mrf.mxu0
    %v1806 = vadd.f32 %v1715, %v1805
    %v1807 = vpop.f32.mrf.mxu0
    %1808 = vmatprep.mubr.f32.mxu0 0.0
    %1809 = vmatmul.mubr.f32.gmra.mxu0 %v1727
    %v1810 = vpop.f32.mrf.mxu0
    %v1811 = vadd.f32 %v1715, %v1810
    %v1812 = vpop.f32.mrf.mxu0
    %1813 = vdwg.mxu0
    %v1815 = vsel %vm321, %v1577, 0
    %v1818 = vsel %vm321, %v1582, 0
    %v1821 = vsel %vm321, %v1684, 0
    %v1824 = vsel %vm321, %v1689, 0
    %v1827 = vsel %vm321, %v1694, 0
    %v1830 = vsel %vm321, %v1699, 0
    %1832 = vmatprep.subr.mxu0 0.0
    %1833 = vmatpush1.xpose.msra.mxu0 0.0
    %1834 = vmatprep.subr.mxu0 0.0
    %1835 = vmatpush1.xpose.msra.mxu0 0.0
    %1836 = vmatprep.subr.mxu0 0.0
    %1837 = vmatpush1.xpose.msra.mxu0 0.0
    %1838 = vmatprep.subr.mxu0 0.0
    %1839 = vmatpush1.xpose.msra.mxu0 0.0
    %1840 = vmatprep.subr.mxu0 0.0
    %1841 = vmatpush1.xpose.msra.mxu0 0.0
    %1842 = vmatprep.subr.mxu0 0.0
    %1843 = vmatpush1.xpose.msra.mxu0 0.0
    %1844 = vmatprep.subr.mxu0 0.0
    %1845 = vmatpush1.xpose.msra.mxu0 0.0
    %1846 = vmatprep.subr.mxu0 0.0
    %1847 = vmatpush1.xpose.msra.mxu0 0.0
    %1848 = vmatprep.subr.mxu0 0.0
    %1849 = vmatpush1.xpose.msra.mxu0 0.0
    %1850 = vmatprep.subr.mxu0 0.0
    %1851 = vmatpush1.xpose.msra.mxu0 0.0
    %1852 = vmatprep.subr.mxu0 0.0
    %1853 = vmatpush1.xpose.msra.mxu0 0.0
    %1854 = vmatprep.subr.mxu0 0.0
    %1855 = vmatpush1.xpose.msra.mxu0 0.0
    %1856 = vmatprep.subr.mxu0 0.0
    %1857 = vmatpush1.xpose.msra.mxu0 %v1830
    %1858 = vmatprep.subr.mxu0 0.0
    %1859 = vmatpush1.xpose.msra.mxu0 %v1827
    %1860 = vmatprep.subr.mxu0 0.0
    %1861 = vmatpush1.xpose.msra.mxu0 %v1824
    %1862 = vmatprep.subr.mxu0 0.0
    %1863 = vmatpush1.xpose.msra.mxu0 %v1821
    %1864 = vmatprep.subr.mxu0 0.0
    %1865 = vmatpush2.xpose.msra.mxu0 0.0
    %1866 = vmatprep.subr.mxu0 0.0
    %1867 = vmatpush2.xpose.msra.mxu0 0.0
    %1868 = vmatprep.subr.mxu0 0.0
    %1869 = vmatpush2.xpose.msra.mxu0 0.0
    %1870 = vmatprep.subr.mxu0 0.0
    %1871 = vmatpush2.xpose.msra.mxu0 0.0
    %1872 = vmatprep.subr.mxu0 0.0
    %1873 = vmatpush2.xpose.msra.mxu0 0.0
    %1874 = vmatprep.subr.mxu0 0.0
    %1875 = vmatpush2.xpose.msra.mxu0 0.0
    %1876 = vmatprep.subr.mxu0 0.0
    %1877 = vmatpush2.xpose.msra.mxu0 0.0
    %1878 = vmatprep.subr.mxu0 0.0
    %1879 = vmatpush2.xpose.msra.mxu0 0.0
    %1880 = vmatprep.subr.mxu0 0.0
    %1881 = vmatpush2.xpose.msra.mxu0 0.0
    %1882 = vmatprep.subr.mxu0 0.0
    %1883 = vmatpush2.xpose.msra.mxu0 0.0
    %1884 = vmatprep.subr.mxu0 0.0
    %1885 = vmatpush2.xpose.msra.mxu0 0.0
    %1886 = vmatprep.subr.mxu0 0.0
    %1887 = vmatpush2.xpose.msra.mxu0 0.0
    %1888 = vmatprep.subr.mxu0 0.0
    %1889 = vmatpush2.xpose.msra.mxu0 0.0
    %1890 = vmatprep.subr.mxu0 0.0
    %1891 = vmatpush2.xpose.msra.mxu0 0.0
    %1892 = vmatprep.subr.mxu0 0.0
    %1893 = vmatpush2.xpose.msra.mxu0 0.0
    %1894 = vmatprep.subr.mxu0 0.0
    %1895 = vmatpush2.xpose.msra.mxu0 0.0
    %1896 = vmatprep.mubr.f32.mxu0 0.0
    %1897 = vmatmul.mubr.f32.gmra.mxu0 %v1815
    %v1898 = vpop.f32.mrf.mxu0
    %v1899 = vadd.f32 0.0, %v1898
    %v1900 = vpop.f32.mrf.mxu0
    %1901 = vmatprep.mubr.f32.mxu0 0.0
    %1902 = vmatmul.mubr.f32.gmra.mxu0 %v1818
    %v1903 = vpop.f32.mrf.mxu0
    %v1904 = vadd.f32 0.0, %v1903
    %v1905 = vpop.f32.mrf.mxu0
    %1906 = vdwg.mxu0
    %v1907 = vmul.f32 %v1899, 0.35355338
    %v1908 = vmul.f32 %v1904, 0.35355338
    %v1909 = vmul.f32 %v1907, 1.442695
    %v1910 = vpow.pop %v1909
    %v1911 = vmul.f32 %v1908, 1.442695
    %v1912 = vpow.pop %v1911
    %v1913 = vsel %vm48, %v1910, 0.0
    %v1914 = vsel %vm49, %v1912, 0.0
    %v1915 = vsel %vm72, %v1913, 0.0
    %1916 = vadd.xlane.f32.xlu0 %v1915
    %v1917 = vpop.xlane.xlu0 %1916
    %v1918 = vsel %vm72, %v1914, 0.0
    %1919 = vadd.xlane.f32.xlu0 %v1918
    %v1920 = vpop.xlane.xlu0 %1919
    %v1921 = vrcp.pop %v1917
    %v1922 = vrcp.pop %v1920
    %v1923 = vmul.f32 %v1913, %v1921
    %v1924 = vmul.f32 %v1914, %v1922
    %v1926 = vsel %vm72, %v1923, 0
    %v1929 = vsel %vm72, %v1924, 0
    %1931 = vmatprep.subr.mxu0 0.0
    %1932 = vmatpush1.msra.mxu0 0.0
    %1933 = vmatprep.subr.mxu0 0.0
    %1934 = vmatpush1.msra.mxu0 0.0
    %1935 = vmatprep.subr.mxu0 0.0
    %1936 = vmatpush1.msra.mxu0 0.0
    %1937 = vmatprep.subr.mxu0 0.0
    %1938 = vmatpush1.msra.mxu0 0.0
    %1939 = vmatprep.subr.mxu0 0.0
    %1940 = vmatpush1.msra.mxu0 0.0
    %1941 = vmatprep.subr.mxu0 0.0
    %1942 = vmatpush1.msra.mxu0 0.0
    %1943 = vmatprep.subr.mxu0 0.0
    %1944 = vmatpush1.msra.mxu0 0.0
    %1945 = vmatprep.subr.mxu0 0.0
    %1946 = vmatpush1.msra.mxu0 0.0
    %1947 = vmatprep.subr.mxu0 0.0
    %1948 = vmatpush1.msra.mxu0 0.0
    %1949 = vmatprep.subr.mxu0 0.0
    %1950 = vmatpush1.msra.mxu0 0.0
    %1951 = vmatprep.subr.mxu0 0.0
    %1952 = vmatpush1.msra.mxu0 0.0
    %1953 = vmatprep.subr.mxu0 0.0
    %1954 = vmatpush1.msra.mxu0 0.0
    %1955 = vmatprep.subr.mxu0 0.0
    %1956 = vmatpush1.msra.mxu0 %v1811
    %1957 = vmatprep.subr.mxu0 0.0
    %1958 = vmatpush1.msra.mxu0 %v1806
    %1959 = vmatprep.subr.mxu0 0.0
    %1960 = vmatpush1.msra.mxu0 %v1801
    %1961 = vmatprep.subr.mxu0 0.0
    %1962 = vmatpush1.msra.mxu0 %v1796
    %1963 = vmatprep.subr.mxu0 0.0
    %1964 = vmatpush2.msra.mxu0 0.0
    %1965 = vmatprep.subr.mxu0 0.0
    %1966 = vmatpush2.msra.mxu0 0.0
    %1967 = vmatprep.subr.mxu0 0.0
    %1968 = vmatpush2.msra.mxu0 0.0
    %1969 = vmatprep.subr.mxu0 0.0
    %1970 = vmatpush2.msra.mxu0 0.0
    %1971 = vmatprep.subr.mxu0 0.0
    %1972 = vmatpush2.msra.mxu0 0.0
    %1973 = vmatprep.subr.mxu0 0.0
    %1974 = vmatpush2.msra.mxu0 0.0
    %1975 = vmatprep.subr.mxu0 0.0
    %1976 = vmatpush2.msra.mxu0 0.0
    %1977 = vmatprep.subr.mxu0 0.0
    %1978 = vmatpush2.msra.mxu0 0.0
    %1979 = vmatprep.subr.mxu0 0.0
    %1980 = vmatpush2.msra.mxu0 0.0
    %1981 = vmatprep.subr.mxu0 0.0
    %1982 = vmatpush2.msra.mxu0 0.0
    %1983 = vmatprep.subr.mxu0 0.0
    %1984 = vmatpush2.msra.mxu0 0.0
    %1985 = vmatprep.subr.mxu0 0.0
    %1986 = vmatpush2.msra.mxu0 0.0
    %1987 = vmatprep.subr.mxu0 0.0
    %1988 = vmatpush2.msra.mxu0 0.0
    %1989 = vmatprep.subr.mxu0 0.0
    %1990 = vmatpush2.msra.mxu0 0.0
    %1991 = vmatprep.subr.mxu0 0.0
    %1992 = vmatpush2.msra.mxu0 0.0
    %1993 = vmatprep.subr.mxu0 0.0
    %1994 = vmatpush2.msra.mxu0 0.0
    %1995 = vmatprep.mubr.f32.mxu0 0.0
    %1996 = vmatmul.mubr.f32.gmra.mxu0 %v1926
    %v1997 = vpop.f32.mrf.mxu0
    %v1998 = vadd.f32 0.0, %v1997
    %v1999 = vpop.f32.mrf.mxu0
    %2000 = vmatprep.mubr.f32.mxu0 0.0
    %2001 = vmatmul.mubr.f32.gmra.mxu0 %v1929
    %v2002 = vpop.f32.mrf.mxu0
    %v2003 = vadd.f32 0.0, %v2002
    %v2004 = vpop.f32.mrf.mxu0
    %2005 = vdwg.mxu0
    %2006 = vrot.lane.b32.xlu0 %v1577, 120
    %v2007 = vpop.permute.xlu0 %2006
    %2008 = vrot.lane.b32.xlu0 %v1582, 120
    %v2009 = vpop.permute.xlu0 %2008
    %2010 = vrot.lane.b32.xlu0 %v1684, 120
    %v2011 = vpop.permute.xlu0 %2010
    %2012 = vrot.lane.b32.xlu0 %v1689, 120
    %v2013 = vpop.permute.xlu0 %2012
    %2014 = vrot.lane.b32.xlu0 %v1694, 120
    %v2015 = vpop.permute.xlu0 %2014
    %2016 = vrot.lane.b32.xlu0 %v1699, 120
    %v2017 = vpop.permute.xlu0 %2016
    %v2018 = vsel %vm321, %v2007, 0
    %v2020 = vsel %vm321, %v2009, 0
    %v2022 = vsel %vm321, %v2011, 0
    %v2024 = vsel %vm321, %v2013, 0
    %v2026 = vsel %vm321, %v2015, 0
    %v2028 = vsel %vm321, %v2017, 0
    %2030 = vmatprep.subr.mxu0 0.0
    %2031 = vmatpush1.xpose.msra.mxu0 0.0
    %2032 = vmatprep.subr.mxu0 0.0
    %2033 = vmatpush1.xpose.msra.mxu0 0.0
    %2034 = vmatprep.subr.mxu0 0.0
    %2035 = vmatpush1.xpose.msra.mxu0 0.0
    %2036 = vmatprep.subr.mxu0 0.0
    %2037 = vmatpush1.xpose.msra.mxu0 0.0
    %2038 = vmatprep.subr.mxu0 0.0
    %2039 = vmatpush1.xpose.msra.mxu0 0.0
    %2040 = vmatprep.subr.mxu0 0.0
    %2041 = vmatpush1.xpose.msra.mxu0 0.0
    %2042 = vmatprep.subr.mxu0 0.0
    %2043 = vmatpush1.xpose.msra.mxu0 0.0
    %2044 = vmatprep.subr.mxu0 0.0
    %2045 = vmatpush1.xpose.msra.mxu0 0.0
    %2046 = vmatprep.subr.mxu0 0.0
    %2047 = vmatpush1.xpose.msra.mxu0 0.0
    %2048 = vmatprep.subr.mxu0 0.0
    %2049 = vmatpush1.xpose.msra.mxu0 0.0
    %2050 = vmatprep.subr.mxu0 0.0
    %2051 = vmatpush1.xpose.msra.mxu0 0.0
    %2052 = vmatprep.subr.mxu0 0.0
    %2053 = vmatpush1.xpose.msra.mxu0 0.0
    %2054 = vmatprep.subr.mxu0 0.0
    %2055 = vmatpush1.xpose.msra.mxu0 %v2028
    %2056 = vmatprep.subr.mxu0 0.0
    %2057 = vmatpush1.xpose.msra.mxu0 %v2026
    %2058 = vmatprep.subr.mxu0 0.0
    %2059 = vmatpush1.xpose.msra.mxu0 %v2024
    %2060 = vmatprep.subr.mxu0 0.0
    %2061 = vmatpush1.xpose.msra.mxu0 %v2022
    %2062 = vmatprep.subr.mxu0 0.0
    %2063 = vmatpush2.xpose.msra.mxu0 0.0
    %2064 = vmatprep.subr.mxu0 0.0
    %2065 = vmatpush2.xpose.msra.mxu0 0.0
    %2066 = vmatprep.subr.mxu0 0.0
    %2067 = vmatpush2.xpose.msra.mxu0 0.0
    %2068 = vmatprep.subr.mxu0 0.0
    %2069 = vmatpush2.xpose.msra.mxu0 0.0
    %2070 = vmatprep.subr.mxu0 0.0
    %2071 = vmatpush2.xpose.msra.mxu0 0.0
    %2072 = vmatprep.subr.mxu0 0.0
    %2073 = vmatpush2.xpose.msra.mxu0 0.0
    %2074 = vmatprep.subr.mxu0 0.0
    %2075 = vmatpush2.xpose.msra.mxu0 0.0
    %2076 = vmatprep.subr.mxu0 0.0
    %2077 = vmatpush2.xpose.msra.mxu0 0.0
    %2078 = vmatprep.subr.mxu0 0.0
    %2079 = vmatpush2.xpose.msra.mxu0 0.0
    %2080 = vmatprep.subr.mxu0 0.0
    %2081 = vmatpush2.xpose.msra.mxu0 0.0
    %2082 = vmatprep.subr.mxu0 0.0
    %2083 = vmatpush2.xpose.msra.mxu0 0.0
    %2084 = vmatprep.subr.mxu0 0.0
    %2085 = vmatpush2.xpose.msra.mxu0 0.0
    %2086 = vmatprep.subr.mxu0 0.0
    %2087 = vmatpush2.xpose.msra.mxu0 0.0
    %2088 = vmatprep.subr.mxu0 0.0
    %2089 = vmatpush2.xpose.msra.mxu0 0.0
    %2090 = vmatprep.subr.mxu0 0.0
    %2091 = vmatpush2.xpose.msra.mxu0 0.0
    %2092 = vmatprep.subr.mxu0 0.0
    %2093 = vmatpush2.xpose.msra.mxu0 0.0
    %2094 = vmatprep.mubr.f32.mxu0 0.0
    %2095 = vmatmul.mubr.f32.gmra.mxu0 %v2018
    %v2096 = vpop.f32.mrf.mxu0
    %v2097 = vadd.f32 0.0, %v2096
    %v2098 = vpop.f32.mrf.mxu0
    %2099 = vmatprep.mubr.f32.mxu0 0.0
    %2100 = vmatmul.mubr.f32.gmra.mxu0 %v2020
    %v2101 = vpop.f32.mrf.mxu0
    %v2102 = vadd.f32 0.0, %v2101
    %v2103 = vpop.f32.mrf.mxu0
    %2104 = vdwg.mxu0
    %v2105 = vmul.f32 %v2097, 0.35355338
    %v2106 = vmul.f32 %v2102, 0.35355338
    %v2107 = vmul.f32 %v2105, 1.442695
    %v2108 = vpow.pop %v2107
    %v2109 = vmul.f32 %v2106, 1.442695
    %v2110 = vpow.pop %v2109
    %v2111 = vsel %vm48, %v2108, 0.0
    %v2112 = vsel %vm49, %v2110, 0.0
    %v2113 = vsel %vm72, %v2111, 0.0
    %2114 = vadd.xlane.f32.xlu0 %v2113
    %v2115 = vpop.xlane.xlu0 %2114
    %v2116 = vsel %vm72, %v2112, 0.0
    %2117 = vadd.xlane.f32.xlu0 %v2116
    %v2118 = vpop.xlane.xlu0 %2117
    %v2119 = vrcp.pop %v2115
    %v2120 = vrcp.pop %v2118
    %v2121 = vmul.f32 %v2111, %v2119
    %v2122 = vmul.f32 %v2112, %v2120
    %2127 = vrot.lane.b32.xlu0 %v1796, 120
    %v2128 = vpop.permute.xlu0 %2127
    %2129 = vrot.lane.b32.xlu0 %v1801, 120
    %v2130 = vpop.permute.xlu0 %2129
    %2131 = vrot.lane.b32.xlu0 %v1806, 120
    %v2132 = vpop.permute.xlu0 %2131
    %2133 = vrot.lane.b32.xlu0 %v1811, 120
    %v2134 = vpop.permute.xlu0 %2133
    %v2140 = vsel %vm72, %v2121, 0
    %v2143 = vsel %vm72, %v2122, 0
    %2145 = vmatprep.subr.mxu0 0.0
    %2146 = vmatpush1.msra.mxu0 0.0
    %2147 = vmatprep.subr.mxu0 0.0
    %2148 = vmatpush1.msra.mxu0 0.0
    %2149 = vmatprep.subr.mxu0 0.0
    %2150 = vmatpush1.msra.mxu0 0.0
    %2151 = vmatprep.subr.mxu0 0.0
    %2152 = vmatpush1.msra.mxu0 0.0
    %2153 = vmatprep.subr.mxu0 0.0
    %2154 = vmatpush1.msra.mxu0 0.0
    %2155 = vmatprep.subr.mxu0 0.0
    %2156 = vmatpush1.msra.mxu0 0.0
    %2157 = vmatprep.subr.mxu0 0.0
    %2158 = vmatpush1.msra.mxu0 0.0
    %2159 = vmatprep.subr.mxu0 0.0
    %2160 = vmatpush1.msra.mxu0 0.0
    %2161 = vmatprep.subr.mxu0 0.0
    %2162 = vmatpush1.msra.mxu0 0.0
    %2163 = vmatprep.subr.mxu0 0.0
    %2164 = vmatpush1.msra.mxu0 0.0
    %2165 = vmatprep.subr.mxu0 0.0
    %2166 = vmatpush1.msra.mxu0 0.0
    %2167 = vmatprep.subr.mxu0 0.0
    %2168 = vmatpush1.msra.mxu0 0.0
    %2169 = vmatprep.subr.mxu0 0.0
    %2170 = vmatpush1.msra.mxu0 %v2134
    %2171 = vmatprep.subr.mxu0 0.0
    %2172 = vmatpush1.msra.mxu0 %v2132
    %2173 = vmatprep.subr.mxu0 0.0
    %2174 = vmatpush1.msra.mxu0 %v2130
    %2175 = vmatprep.subr.mxu0 0.0
    %2176 = vmatpush1.msra.mxu0 %v2128
    %2177 = vmatprep.subr.mxu0 0.0
    %2178 = vmatpush2.msra.mxu0 0.0
    %2179 = vmatprep.subr.mxu0 0.0
    %2180 = vmatpush2.msra.mxu0 0.0
    %2181 = vmatprep.subr.mxu0 0.0
    %2182 = vmatpush2.msra.mxu0 0.0
    %2183 = vmatprep.subr.mxu0 0.0
    %2184 = vmatpush2.msra.mxu0 0.0
    %2185 = vmatprep.subr.mxu0 0.0
    %2186 = vmatpush2.msra.mxu0 0.0
    %2187 = vmatprep.subr.mxu0 0.0
    %2188 = vmatpush2.msra.mxu0 0.0
    %2189 = vmatprep.subr.mxu0 0.0
    %2190 = vmatpush2.msra.mxu0 0.0
    %2191 = vmatprep.subr.mxu0 0.0
    %2192 = vmatpush2.msra.mxu0 0.0
    %2193 = vmatprep.subr.mxu0 0.0
    %2194 = vmatpush2.msra.mxu0 0.0
    %2195 = vmatprep.subr.mxu0 0.0
    %2196 = vmatpush2.msra.mxu0 0.0
    %2197 = vmatprep.subr.mxu0 0.0
    %2198 = vmatpush2.msra.mxu0 0.0
    %2199 = vmatprep.subr.mxu0 0.0
    %2200 = vmatpush2.msra.mxu0 0.0
    %2201 = vmatprep.subr.mxu0 0.0
    %2202 = vmatpush2.msra.mxu0 0.0
    %2203 = vmatprep.subr.mxu0 0.0
    %2204 = vmatpush2.msra.mxu0 0.0
    %2205 = vmatprep.subr.mxu0 0.0
    %2206 = vmatpush2.msra.mxu0 0.0
    %2207 = vmatprep.subr.mxu0 0.0
    %2208 = vmatpush2.msra.mxu0 0.0
    %2209 = vmatprep.mubr.f32.mxu0 0.0
    %2210 = vmatmul.mubr.f32.gmra.mxu0 %v2140
    %v2211 = vpop.f32.mrf.mxu0
    %v2212 = vadd.f32 0.0, %v2211
    %v2213 = vpop.f32.mrf.mxu0
    %2214 = vmatprep.mubr.f32.mxu0 0.0
    %2215 = vmatmul.mubr.f32.gmra.mxu0 %v2143
    %v2216 = vpop.f32.mrf.mxu0
    %v2217 = vadd.f32 0.0, %v2216
    %v2218 = vpop.f32.mrf.mxu0
    %2219 = vdwg.mxu0
    %2220 = vrot.lane.b32.xlu0 %v55, 32
    %v2221 = vpop.permute.xlu0 %2220
    %v2224 = vsel %vm321, %v2212, 0
    %v2227 = vsel %vm321, %v2217, 0
    %2229 = vmatprep.subr.mxu0 0.0
    %2230 = vmatpush1.msra.mxu0 0.0
    %2231 = vmatprep.subr.mxu0 0.0
    %2232 = vmatpush1.msra.mxu0 0.0
    %2233 = vmatprep.subr.mxu0 0.0
    %2234 = vmatpush1.msra.mxu0 0.0
    %2235 = vmatprep.subr.mxu0 0.0
    %2236 = vmatpush1.msra.mxu0 0.0
    %2237 = vmatprep.subr.mxu0 0.0
    %2238 = vmatpush1.msra.mxu0 0.0
    %2239 = vmatprep.subr.mxu0 0.0
    %2240 = vmatpush1.msra.mxu0 0.0
    %2241 = vmatprep.subr.mxu0 0.0
    %2242 = vmatpush1.msra.mxu0 0.0
    %2243 = vmatprep.subr.mxu0 0.0
    %2244 = vmatpush1.msra.mxu0 0.0
    %2245 = vmatprep.subr.mxu0 0.0
    %2246 = vmatpush1.msra.mxu0 0.0
    %2247 = vmatprep.subr.mxu0 0.0
    %2248 = vmatpush1.msra.mxu0 0.0
    %2249 = vmatprep.subr.mxu0 0.0
    %2250 = vmatpush1.msra.mxu0 0.0
    %2251 = vmatprep.subr.mxu0 0.0
    %2252 = vmatpush1.msra.mxu0 0.0
    %2253 = vmatprep.subr.mxu0 0.0
    %2254 = vmatpush1.msra.mxu0 0.0
    %2255 = vmatprep.subr.mxu0 0.0
    %2256 = vmatpush1.msra.mxu0 0.0
    %2257 = vmatprep.subr.mxu0 0.0
    %2258 = vmatpush1.msra.mxu0 0.0
    %2259 = vmatprep.subr.mxu0 0.0
    %2260 = vmatpush1.msra.mxu0 %v2221
    %2261 = vmatprep.subr.mxu0 0.0
    %2262 = vmatpush2.msra.mxu0 0.0
    %2263 = vmatprep.subr.mxu0 0.0
    %2264 = vmatpush2.msra.mxu0 0.0
    %2265 = vmatprep.subr.mxu0 0.0
    %2266 = vmatpush2.msra.mxu0 0.0
    %2267 = vmatprep.subr.mxu0 0.0
    %2268 = vmatpush2.msra.mxu0 0.0
    %2269 = vmatprep.subr.mxu0 0.0
    %2270 = vmatpush2.msra.mxu0 0.0
    %2271 = vmatprep.subr.mxu0 0.0
    %2272 = vmatpush2.msra.mxu0 0.0
    %2273 = vmatprep.subr.mxu0 0.0
    %2274 = vmatpush2.msra.mxu0 0.0
    %2275 = vmatprep.subr.mxu0 0.0
    %2276 = vmatpush2.msra.mxu0 0.0
    %2277 = vmatprep.subr.mxu0 0.0
    %2278 = vmatpush2.msra.mxu0 0.0
    %2279 = vmatprep.subr.mxu0 0.0
    %2280 = vmatpush2.msra.mxu0 0.0
    %2281 = vmatprep.subr.mxu0 0.0
    %2282 = vmatpush2.msra.mxu0 0.0
    %2283 = vmatprep.subr.mxu0 0.0
    %2284 = vmatpush2.msra.mxu0 0.0
    %2285 = vmatprep.subr.mxu0 0.0
    %2286 = vmatpush2.msra.mxu0 0.0
    %2287 = vmatprep.subr.mxu0 0.0
    %2288 = vmatpush2.msra.mxu0 0.0
    %2289 = vmatprep.subr.mxu0 0.0
    %2290 = vmatpush2.msra.mxu0 0.0
    %2291 = vmatprep.subr.mxu0 0.0
    %2292 = vmatpush2.msra.mxu0 0.0
    %2293 = vmatprep.mubr.f32.mxu0 0.0
    %2294 = vmatmul.mubr.f32.gmra.mxu0 %v2224
    %v2295 = vpop.f32.mrf.mxu0
    %v2296 = vadd.f32 0.0, %v2295
    %v2297 = vpop.f32.mrf.mxu0
    %2298 = vmatprep.mubr.f32.mxu0 0.0
    %2299 = vmatmul.mubr.f32.gmra.mxu0 %v2227
    %v2300 = vpop.f32.mrf.mxu0
    %v2301 = vadd.f32 0.0, %v2300
    %v2302 = vpop.f32.mrf.mxu0
    %2303 = vdwg.mxu0
    %2304 = vrot.lane.b32.xlu0 %v54, 32
    %v2305 = vpop.permute.xlu0 %2304
    %v2308 = vsel %vm321, %v1998, 0
    %v2311 = vsel %vm321, %v2003, 0
    %2313 = vmatprep.subr.mxu0 0.0
    %2314 = vmatpush1.msra.mxu0 0.0
    %2315 = vmatprep.subr.mxu0 0.0
    %2316 = vmatpush1.msra.mxu0 0.0
    %2317 = vmatprep.subr.mxu0 0.0
    %2318 = vmatpush1.msra.mxu0 0.0
    %2319 = vmatprep.subr.mxu0 0.0
    %2320 = vmatpush1.msra.mxu0 0.0
    %2321 = vmatprep.subr.mxu0 0.0
    %2322 = vmatpush1.msra.mxu0 0.0
    %2323 = vmatprep.subr.mxu0 0.0
    %2324 = vmatpush1.msra.mxu0 0.0
    %2325 = vmatprep.subr.mxu0 0.0
    %2326 = vmatpush1.msra.mxu0 0.0
    %2327 = vmatprep.subr.mxu0 0.0
    %2328 = vmatpush1.msra.mxu0 0.0
    %2329 = vmatprep.subr.mxu0 0.0
    %2330 = vmatpush1.msra.mxu0 0.0
    %2331 = vmatprep.subr.mxu0 0.0
    %2332 = vmatpush1.msra.mxu0 0.0
    %2333 = vmatprep.subr.mxu0 0.0
    %2334 = vmatpush1.msra.mxu0 0.0
    %2335 = vmatprep.subr.mxu0 0.0
    %2336 = vmatpush1.msra.mxu0 0.0
    %2337 = vmatprep.subr.mxu0 0.0
    %2338 = vmatpush1.msra.mxu0 0.0
    %2339 = vmatprep.subr.mxu0 0.0
    %2340 = vmatpush1.msra.mxu0 0.0
    %2341 = vmatprep.subr.mxu0 0.0
    %2342 = vmatpush1.msra.mxu0 0.0
    %2343 = vmatprep.subr.mxu0 0.0
    %2344 = vmatpush1.msra.mxu0 %v2305
    %2345 = vmatprep.subr.mxu0 0.0
    %2346 = vmatpush2.msra.mxu0 0.0
    %2347 = vmatprep.subr.mxu0 0.0
    %2348 = vmatpush2.msra.mxu0 0.0
    %2349 = vmatprep.subr.mxu0 0.0
    %2350 = vmatpush2.msra.mxu0 0.0
    %2351 = vmatprep.subr.mxu0 0.0
    %2352 = vmatpush2.msra.mxu0 0.0
    %2353 = vmatprep.subr.mxu0 0.0
    %2354 = vmatpush2.msra.mxu0 0.0
    %2355 = vmatprep.subr.mxu0 0.0
    %2356 = vmatpush2.msra.mxu0 0.0
    %2357 = vmatprep.subr.mxu0 0.0
    %2358 = vmatpush2.msra.mxu0 0.0
    %2359 = vmatprep.subr.mxu0 0.0
    %2360 = vmatpush2.msra.mxu0 0.0
    %2361 = vmatprep.subr.mxu0 0.0
    %2362 = vmatpush2.msra.mxu0 0.0
    %2363 = vmatprep.subr.mxu0 0.0
    %2364 = vmatpush2.msra.mxu0 0.0
    %2365 = vmatprep.subr.mxu0 0.0
    %2366 = vmatpush2.msra.mxu0 0.0
    %2367 = vmatprep.subr.mxu0 0.0
    %2368 = vmatpush2.msra.mxu0 0.0
    %2369 = vmatprep.subr.mxu0 0.0
    %2370 = vmatpush2.msra.mxu0 0.0
    %2371 = vmatprep.subr.mxu0 0.0
    %2372 = vmatpush2.msra.mxu0 0.0
    %2373 = vmatprep.subr.mxu0 0.0
    %2374 = vmatpush2.msra.mxu0 0.0
    %2375 = vmatprep.subr.mxu0 0.0
    %2376 = vmatpush2.msra.mxu0 0.0
    %2377 = vmatprep.mubr.f32.mxu0 0.0
    %2378 = vmatmul.mubr.f32.gmra.mxu0 %v2308
    %v2379 = vpop.f32.mrf.mxu0
    %v2380 = vadd.f32 %v2296, %v2379
    %v2381 = vpop.f32.mrf.mxu0
    %2382 = vmatprep.mubr.f32.mxu0 0.0
    %2383 = vmatmul.mubr.f32.gmra.mxu0 %v2311
    %v2384 = vpop.f32.mrf.mxu0
    %v2385 = vadd.f32 %v2301, %v2384
    %v2386 = vpop.f32.mrf.mxu0
    %2387 = vdwg.mxu0
    %2388 = vrot.lane.b32.xlu0 %v1577, 112
    %v2389 = vpop.permute.xlu0 %2388
    %2390 = vrot.lane.b32.xlu0 %v1582, 112
    %v2391 = vpop.permute.xlu0 %2390
    %2392 = vrot.lane.b32.xlu0 %v1684, 112
    %v2393 = vpop.permute.xlu0 %2392
    %2394 = vrot.lane.b32.xlu0 %v1689, 112
    %v2395 = vpop.permute.xlu0 %2394
    %2396 = vrot.lane.b32.xlu0 %v1694, 112
    %v2397 = vpop.permute.xlu0 %2396
    %2398 = vrot.lane.b32.xlu0 %v1699, 112
    %v2399 = vpop.permute.xlu0 %2398
    %v2400 = vsel %vm321, %v2389, 0
    %v2402 = vsel %vm321, %v2391, 0
    %v2404 = vsel %vm321, %v2393, 0
    %v2406 = vsel %vm321, %v2395, 0
    %v2408 = vsel %vm321, %v2397, 0
    %v2410 = vsel %vm321, %v2399, 0
    %2412 = vmatprep.subr.mxu0 0.0
    %2413 = vmatpush1.xpose.msra.mxu0 0.0
    %2414 = vmatprep.subr.mxu0 0.0
    %2415 = vmatpush1.xpose.msra.mxu0 0.0
    %2416 = vmatprep.subr.mxu0 0.0
    %2417 = vmatpush1.xpose.msra.mxu0 0.0
    %2418 = vmatprep.subr.mxu0 0.0
    %2419 = vmatpush1.xpose.msra.mxu0 0.0
    %2420 = vmatprep.subr.mxu0 0.0
    %2421 = vmatpush1.xpose.msra.mxu0 0.0
    %2422 = vmatprep.subr.mxu0 0.0
    %2423 = vmatpush1.xpose.msra.mxu0 0.0
    %2424 = vmatprep.subr.mxu0 0.0
    %2425 = vmatpush1.xpose.msra.mxu0 0.0
    %2426 = vmatprep.subr.mxu0 0.0
    %2427 = vmatpush1.xpose.msra.mxu0 0.0
    %2428 = vmatprep.subr.mxu0 0.0
    %2429 = vmatpush1.xpose.msra.mxu0 0.0
    %2430 = vmatprep.subr.mxu0 0.0
    %2431 = vmatpush1.xpose.msra.mxu0 0.0
    %2432 = vmatprep.subr.mxu0 0.0
    %2433 = vmatpush1.xpose.msra.mxu0 0.0
    %2434 = vmatprep.subr.mxu0 0.0
    %2435 = vmatpush1.xpose.msra.mxu0 0.0
    %2436 = vmatprep.subr.mxu0 0.0
    %2437 = vmatpush1.xpose.msra.mxu0 %v2410
    %2438 = vmatprep.subr.mxu0 0.0
    %2439 = vmatpush1.xpose.msra.mxu0 %v2408
    %2440 = vmatprep.subr.mxu0 0.0
    %2441 = vmatpush1.xpose.msra.mxu0 %v2406
    %2442 = vmatprep.subr.mxu0 0.0
    %2443 = vmatpush1.xpose.msra.mxu0 %v2404
    %2444 = vmatprep.subr.mxu0 0.0
    %2445 = vmatpush2.xpose.msra.mxu0 0.0
    %2446 = vmatprep.subr.mxu0 0.0
    %2447 = vmatpush2.xpose.msra.mxu0 0.0
    %2448 = vmatprep.subr.mxu0 0.0
    %2449 = vmatpush2.xpose.msra.mxu0 0.0
    %2450 = vmatprep.subr.mxu0 0.0
    %2451 = vmatpush2.xpose.msra.mxu0 0.0
    %2452 = vmatprep.subr.mxu0 0.0
    %2453 = vmatpush2.xpose.msra.mxu0 0.0
    %2454 = vmatprep.subr.mxu0 0.0
    %2455 = vmatpush2.xpose.msra.mxu0 0.0
    %2456 = vmatprep.subr.mxu0 0.0
    %2457 = vmatpush2.xpose.msra.mxu0 0.0
    %2458 = vmatprep.subr.mxu0 0.0
    %2459 = vmatpush2.xpose.msra.mxu0 0.0
    %2460 = vmatprep.subr.mxu0 0.0
    %2461 = vmatpush2.xpose.msra.mxu0 0.0
    %2462 = vmatprep.subr.mxu0 0.0
    %2463 = vmatpush2.xpose.msra.mxu0 0.0
    %2464 = vmatprep.subr.mxu0 0.0
    %2465 = vmatpush2.xpose.msra.mxu0 0.0
    %2466 = vmatprep.subr.mxu0 0.0
    %2467 = vmatpush2.xpose.msra.mxu0 0.0
    %2468 = vmatprep.subr.mxu0 0.0
    %2469 = vmatpush2.xpose.msra.mxu0 0.0
    %2470 = vmatprep.subr.mxu0 0.0
    %2471 = vmatpush2.xpose.msra.mxu0 0.0
    %2472 = vmatprep.subr.mxu0 0.0
    %2473 = vmatpush2.xpose.msra.mxu0 0.0
    %2474 = vmatprep.subr.mxu0 0.0
    %2475 = vmatpush2.xpose.msra.mxu0 0.0
    %2476 = vmatprep.mubr.f32.mxu0 0.0
    %2477 = vmatmul.mubr.f32.gmra.mxu0 %v2400
    %v2478 = vpop.f32.mrf.mxu0
    %v2479 = vadd.f32 0.0, %v2478
    %v2480 = vpop.f32.mrf.mxu0
    %2481 = vmatprep.mubr.f32.mxu0 0.0
    %2482 = vmatmul.mubr.f32.gmra.mxu0 %v2402
    %v2483 = vpop.f32.mrf.mxu0
    %v2484 = vadd.f32 0.0, %v2483
    %v2485 = vpop.f32.mrf.mxu0
    %2486 = vdwg.mxu0
    %v2487 = vmul.f32 %v2479, 0.35355338
    %v2488 = vmul.f32 %v2484, 0.35355338
    %v2489 = vmul.f32 %v2487, 1.442695
    %v2490 = vpow.pop %v2489
    %v2491 = vmul.f32 %v2488, 1.442695
    %v2492 = vpow.pop %v2491
    %v2493 = vsel %vm48, %v2490, 0.0
    %v2494 = vsel %vm49, %v2492, 0.0
    %v2495 = vsel %vm72, %v2493, 0.0
    %2496 = vadd.xlane.f32.xlu0 %v2495
    %v2497 = vpop.xlane.xlu0 %2496
    %v2498 = vsel %vm72, %v2494, 0.0
    %2499 = vadd.xlane.f32.xlu0 %v2498
    %v2500 = vpop.xlane.xlu0 %2499
    %v2501 = vrcp.pop %v2497
    %v2502 = vrcp.pop %v2500
    %v2503 = vmul.f32 %v2493, %v2501
    %v2504 = vmul.f32 %v2494, %v2502
    %2505 = vrot.lane.b32.xlu0 %v1796, 112
    %v2506 = vpop.permute.xlu0 %2505
    %2507 = vrot.lane.b32.xlu0 %v1801, 112
    %v2508 = vpop.permute.xlu0 %2507
    %2509 = vrot.lane.b32.xlu0 %v1806, 112
    %v2510 = vpop.permute.xlu0 %2509
    %2511 = vrot.lane.b32.xlu0 %v1811, 112
    %v2512 = vpop.permute.xlu0 %2511
    %v2518 = vsel %vm72, %v2503, 0
    %v2521 = vsel %vm72, %v2504, 0
    %2523 = vmatprep.subr.mxu0 0.0
    %2524 = vmatpush1.msra.mxu0 0.0
    %2525 = vmatprep.subr.mxu0 0.0
    %2526 = vmatpush1.msra.mxu0 0.0
    %2527 = vmatprep.subr.mxu0 0.0
    %2528 = vmatpush1.msra.mxu0 0.0
    %2529 = vmatprep.subr.mxu0 0.0
    %2530 = vmatpush1.msra.mxu0 0.0
    %2531 = vmatprep.subr.mxu0 0.0
    %2532 = vmatpush1.msra.mxu0 0.0
    %2533 = vmatprep.subr.mxu0 0.0
    %2534 = vmatpush1.msra.mxu0 0.0
    %2535 = vmatprep.subr.mxu0 0.0
    %2536 = vmatpush1.msra.mxu0 0.0
    %2537 = vmatprep.subr.mxu0 0.0
    %2538 = vmatpush1.msra.mxu0 0.0
    %2539 = vmatprep.subr.mxu0 0.0
    %2540 = vmatpush1.msra.mxu0 0.0
    %2541 = vmatprep.subr.mxu0 0.0
    %2542 = vmatpush1.msra.mxu0 0.0
    %2543 = vmatprep.subr.mxu0 0.0
    %2544 = vmatpush1.msra.mxu0 0.0
    %2545 = vmatprep.subr.mxu0 0.0
    %2546 = vmatpush1.msra.mxu0 0.0
    %2547 = vmatprep.subr.mxu0 0.0
    %2548 = vmatpush1.msra.mxu0 %v2512
    %2549 = vmatprep.subr.mxu0 0.0
    %2550 = vmatpush1.msra.mxu0 %v2510
    %2551 = vmatprep.subr.mxu0 0.0
    %2552 = vmatpush1.msra.mxu0 %v2508
    %2553 = vmatprep.subr.mxu0 0.0
    %2554 = vmatpush1.msra.mxu0 %v2506
    %2555 = vmatprep.subr.mxu0 0.0
    %2556 = vmatpush2.msra.mxu0 0.0
    %2557 = vmatprep.subr.mxu0 0.0
    %2558 = vmatpush2.msra.mxu0 0.0
    %2559 = vmatprep.subr.mxu0 0.0
    %2560 = vmatpush2.msra.mxu0 0.0
    %2561 = vmatprep.subr.mxu0 0.0
    %2562 = vmatpush2.msra.mxu0 0.0
    %2563 = vmatprep.subr.mxu0 0.0
    %2564 = vmatpush2.msra.mxu0 0.0
    %2565 = vmatprep.subr.mxu0 0.0
    %2566 = vmatpush2.msra.mxu0 0.0
    %2567 = vmatprep.subr.mxu0 0.0
    %2568 = vmatpush2.msra.mxu0 0.0
    %2569 = vmatprep.subr.mxu0 0.0
    %2570 = vmatpush2.msra.mxu0 0.0
    %2571 = vmatprep.subr.mxu0 0.0
    %2572 = vmatpush2.msra.mxu0 0.0
    %2573 = vmatprep.subr.mxu0 0.0
    %2574 = vmatpush2.msra.mxu0 0.0
    %2575 = vmatprep.subr.mxu0 0.0
    %2576 = vmatpush2.msra.mxu0 0.0
    %2577 = vmatprep.subr.mxu0 0.0
    %2578 = vmatpush2.msra.mxu0 0.0
    %2579 = vmatprep.subr.mxu0 0.0
    %2580 = vmatpush2.msra.mxu0 0.0
    %2581 = vmatprep.subr.mxu0 0.0
    %2582 = vmatpush2.msra.mxu0 0.0
    %2583 = vmatprep.subr.mxu0 0.0
    %2584 = vmatpush2.msra.mxu0 0.0
    %2585 = vmatprep.subr.mxu0 0.0
    %2586 = vmatpush2.msra.mxu0 0.0
    %2587 = vmatprep.mubr.f32.mxu0 0.0
    %2588 = vmatmul.mubr.f32.gmra.mxu0 %v2518
    %v2589 = vpop.f32.mrf.mxu0
    %v2590 = vadd.f32 0.0, %v2589
    %v2591 = vpop.f32.mrf.mxu0
    %2592 = vmatprep.mubr.f32.mxu0 0.0
    %2593 = vmatmul.mubr.f32.gmra.mxu0 %v2521
    %v2594 = vpop.f32.mrf.mxu0
    %v2595 = vadd.f32 0.0, %v2594
    %v2596 = vpop.f32.mrf.mxu0
    %2597 = vdwg.mxu0
    %2598 = vrot.lane.b32.xlu0 %v56, 32
    %v2599 = vpop.permute.xlu0 %2598
    %v2602 = vsel %vm321, %v2590, 0
    %v2605 = vsel %vm321, %v2595, 0
    %2607 = vmatprep.subr.mxu0 0.0
    %2608 = vmatpush1.msra.mxu0 0.0
    %2609 = vmatprep.subr.mxu0 0.0
    %2610 = vmatpush1.msra.mxu0 0.0
    %2611 = vmatprep.subr.mxu0 0.0
    %2612 = vmatpush1.msra.mxu0 0.0
    %2613 = vmatprep.subr.mxu0 0.0
    %2614 = vmatpush1.msra.mxu0 0.0
    %2615 = vmatprep.subr.mxu0 0.0
    %2616 = vmatpush1.msra.mxu0 0.0
    %2617 = vmatprep.subr.mxu0 0.0
    %2618 = vmatpush1.msra.mxu0 0.0
    %2619 = vmatprep.subr.mxu0 0.0
    %2620 = vmatpush1.msra.mxu0 0.0
    %2621 = vmatprep.subr.mxu0 0.0
    %2622 = vmatpush1.msra.mxu0 0.0
    %2623 = vmatprep.subr.mxu0 0.0
    %2624 = vmatpush1.msra.mxu0 0.0
    %2625 = vmatprep.subr.mxu0 0.0
    %2626 = vmatpush1.msra.mxu0 0.0
    %2627 = vmatprep.subr.mxu0 0.0
    %2628 = vmatpush1.msra.mxu0 0.0
    %2629 = vmatprep.subr.mxu0 0.0
    %2630 = vmatpush1.msra.mxu0 0.0
    %2631 = vmatprep.subr.mxu0 0.0
    %2632 = vmatpush1.msra.mxu0 0.0
    %2633 = vmatprep.subr.mxu0 0.0
    %2634 = vmatpush1.msra.mxu0 0.0
    %2635 = vmatprep.subr.mxu0 0.0
    %2636 = vmatpush1.msra.mxu0 0.0
    %2637 = vmatprep.subr.mxu0 0.0
    %2638 = vmatpush1.msra.mxu0 %v2599
    %2639 = vmatprep.subr.mxu0 0.0
    %2640 = vmatpush2.msra.mxu0 0.0
    %2641 = vmatprep.subr.mxu0 0.0
    %2642 = vmatpush2.msra.mxu0 0.0
    %2643 = vmatprep.subr.mxu0 0.0
    %2644 = vmatpush2.msra.mxu0 0.0
    %2645 = vmatprep.subr.mxu0 0.0
    %2646 = vmatpush2.msra.mxu0 0.0
    %2647 = vmatprep.subr.mxu0 0.0
    %2648 = vmatpush2.msra.mxu0 0.0
    %2649 = vmatprep.subr.mxu0 0.0
    %2650 = vmatpush2.msra.mxu0 0.0
    %2651 = vmatprep.subr.mxu0 0.0
    %2652 = vmatpush2.msra.mxu0 0.0
    %2653 = vmatprep.subr.mxu0 0.0
    %2654 = vmatpush2.msra.mxu0 0.0
    %2655 = vmatprep.subr.mxu0 0.0
    %2656 = vmatpush2.msra.mxu0 0.0
    %2657 = vmatprep.subr.mxu0 0.0
    %2658 = vmatpush2.msra.mxu0 0.0
    %2659 = vmatprep.subr.mxu0 0.0
    %2660 = vmatpush2.msra.mxu0 0.0
    %2661 = vmatprep.subr.mxu0 0.0
    %2662 = vmatpush2.msra.mxu0 0.0
    %2663 = vmatprep.subr.mxu0 0.0
    %2664 = vmatpush2.msra.mxu0 0.0
    %2665 = vmatprep.subr.mxu0 0.0
    %2666 = vmatpush2.msra.mxu0 0.0
    %2667 = vmatprep.subr.mxu0 0.0
    %2668 = vmatpush2.msra.mxu0 0.0
    %2669 = vmatprep.subr.mxu0 0.0
    %2670 = vmatpush2.msra.mxu0 0.0
    %2671 = vmatprep.mubr.f32.mxu0 0.0
    %2672 = vmatmul.mubr.f32.gmra.mxu0 %v2602
    %v2673 = vpop.f32.mrf.mxu0
    %v2674 = vadd.f32 0.0, %v2673
    %v2675 = vpop.f32.mrf.mxu0
    %2676 = vmatprep.mubr.f32.mxu0 0.0
    %2677 = vmatmul.mubr.f32.gmra.mxu0 %v2605
    %v2678 = vpop.f32.mrf.mxu0
    %v2679 = vadd.f32 0.0, %v2678
    %v2680 = vpop.f32.mrf.mxu0
    %2681 = vdwg.mxu0
    %v2682 = vadd.f32 %v2380, %v2674
    %v2683 = vadd.f32 %v2385, %v2679
    %2684 = vrot.lane.b32.xlu0 %v1577, 104
    %v2685 = vpop.permute.xlu0 %2684
    %2686 = vrot.lane.b32.xlu0 %v1582, 104
    %v2687 = vpop.permute.xlu0 %2686
    %2688 = vrot.lane.b32.xlu0 %v1684, 104
    %v2689 = vpop.permute.xlu0 %2688
    %2690 = vrot.lane.b32.xlu0 %v1689, 104
    %v2691 = vpop.permute.xlu0 %2690
    %2692 = vrot.lane.b32.xlu0 %v1694, 104
    %v2693 = vpop.permute.xlu0 %2692
    %2694 = vrot.lane.b32.xlu0 %v1699, 104
    %v2695 = vpop.permute.xlu0 %2694
    %v2696 = vsel %vm321, %v2685, 0
    %v2698 = vsel %vm321, %v2687, 0
    %v2700 = vsel %vm321, %v2689, 0
    %v2702 = vsel %vm321, %v2691, 0
    %v2704 = vsel %vm321, %v2693, 0
    %v2706 = vsel %vm321, %v2695, 0
    %2708 = vmatprep.subr.mxu0 0.0
    %2709 = vmatpush1.xpose.msra.mxu0 0.0
    %2710 = vmatprep.subr.mxu0 0.0
    %2711 = vmatpush1.xpose.msra.mxu0 0.0
    %2712 = vmatprep.subr.mxu0 0.0
    %2713 = vmatpush1.xpose.msra.mxu0 0.0
    %2714 = vmatprep.subr.mxu0 0.0
    %2715 = vmatpush1.xpose.msra.mxu0 0.0
    %2716 = vmatprep.subr.mxu0 0.0
    %2717 = vmatpush1.xpose.msra.mxu0 0.0
    %2718 = vmatprep.subr.mxu0 0.0
    %2719 = vmatpush1.xpose.msra.mxu0 0.0
    %2720 = vmatprep.subr.mxu0 0.0
    %2721 = vmatpush1.xpose.msra.mxu0 0.0
    %2722 = vmatprep.subr.mxu0 0.0
    %2723 = vmatpush1.xpose.msra.mxu0 0.0
    %2724 = vmatprep.subr.mxu0 0.0
    %2725 = vmatpush1.xpose.msra.mxu0 0.0
    %2726 = vmatprep.subr.mxu0 0.0
    %2727 = vmatpush1.xpose.msra.mxu0 0.0
    %2728 = vmatprep.subr.mxu0 0.0
    %2729 = vmatpush1.xpose.msra.mxu0 0.0
    %2730 = vmatprep.subr.mxu0 0.0
    %2731 = vmatpush1.xpose.msra.mxu0 0.0
    %2732 = vmatprep.subr.mxu0 0.0
    %2733 = vmatpush1.xpose.msra.mxu0 %v2706
    %2734 = vmatprep.subr.mxu0 0.0
    %2735 = vmatpush1.xpose.msra.mxu0 %v2704
    %2736 = vmatprep.subr.mxu0 0.0
    %2737 = vmatpush1.xpose.msra.mxu0 %v2702
    %2738 = vmatprep.subr.mxu0 0.0
    %2739 = vmatpush1.xpose.msra.mxu0 %v2700
    %2740 = vmatprep.subr.mxu0 0.0
    %2741 = vmatpush2.xpose.msra.mxu0 0.0
    %2742 = vmatprep.subr.mxu0 0.0
    %2743 = vmatpush2.xpose.msra.mxu0 0.0
    %2744 = vmatprep.subr.mxu0 0.0
    %2745 = vmatpush2.xpose.msra.mxu0 0.0
    %2746 = vmatprep.subr.mxu0 0.0
    %2747 = vmatpush2.xpose.msra.mxu0 0.0
    %2748 = vmatprep.subr.mxu0 0.0
    %2749 = vmatpush2.xpose.msra.mxu0 0.0
    %2750 = vmatprep.subr.mxu0 0.0
    %2751 = vmatpush2.xpose.msra.mxu0 0.0
    %2752 = vmatprep.subr.mxu0 0.0
    %2753 = vmatpush2.xpose.msra.mxu0 0.0
    %2754 = vmatprep.subr.mxu0 0.0
    %2755 = vmatpush2.xpose.msra.mxu0 0.0
    %2756 = vmatprep.subr.mxu0 0.0
    %2757 = vmatpush2.xpose.msra.mxu0 0.0
    %2758 = vmatprep.subr.mxu0 0.0
    %2759 = vmatpush2.xpose.msra.mxu0 0.0
    %2760 = vmatprep.subr.mxu0 0.0
    %2761 = vmatpush2.xpose.msra.mxu0 0.0
    %2762 = vmatprep.subr.mxu0 0.0
    %2763 = vmatpush2.xpose.msra.mxu0 0.0
    %2764 = vmatprep.subr.mxu0 0.0
    %2765 = vmatpush2.xpose.msra.mxu0 0.0
    %2766 = vmatprep.subr.mxu0 0.0
    %2767 = vmatpush2.xpose.msra.mxu0 0.0
    %2768 = vmatprep.subr.mxu0 0.0
    %2769 = vmatpush2.xpose.msra.mxu0 0.0
    %2770 = vmatprep.subr.mxu0 0.0
    %2771 = vmatpush2.xpose.msra.mxu0 0.0
    %2772 = vmatprep.mubr.f32.mxu0 0.0
    %2773 = vmatmul.mubr.f32.gmra.mxu0 %v2696
    %v2774 = vpop.f32.mrf.mxu0
    %v2775 = vadd.f32 0.0, %v2774
    %v2776 = vpop.f32.mrf.mxu0
    %2777 = vmatprep.mubr.f32.mxu0 0.0
    %2778 = vmatmul.mubr.f32.gmra.mxu0 %v2698
    %v2779 = vpop.f32.mrf.mxu0
    %v2780 = vadd.f32 0.0, %v2779
    %v2781 = vpop.f32.mrf.mxu0
    %2782 = vdwg.mxu0
    %v2783 = vmul.f32 %v2775, 0.35355338
    %v2784 = vmul.f32 %v2780, 0.35355338
    %v2785 = vmul.f32 %v2783, 1.442695
    %v2786 = vpow.pop %v2785
    %v2787 = vmul.f32 %v2784, 1.442695
    %v2788 = vpow.pop %v2787
    %v2789 = vsel %vm48, %v2786, 0.0
    %v2790 = vsel %vm49, %v2788, 0.0
    %v2791 = vsel %vm72, %v2789, 0.0
    %2792 = vadd.xlane.f32.xlu0 %v2791
    %v2793 = vpop.xlane.xlu0 %2792
    %v2794 = vsel %vm72, %v2790, 0.0
    %2795 = vadd.xlane.f32.xlu0 %v2794
    %v2796 = vpop.xlane.xlu0 %2795
    %v2797 = vrcp.pop %v2793
    %v2798 = vrcp.pop %v2796
    %v2799 = vmul.f32 %v2789, %v2797
    %v2800 = vmul.f32 %v2790, %v2798
    %2801 = vrot.lane.b32.xlu0 %v1796, 104
    %v2802 = vpop.permute.xlu0 %2801
    %2803 = vrot.lane.b32.xlu0 %v1801, 104
    %v2804 = vpop.permute.xlu0 %2803
    %2805 = vrot.lane.b32.xlu0 %v1806, 104
    %v2806 = vpop.permute.xlu0 %2805
    %2807 = vrot.lane.b32.xlu0 %v1811, 104
    %v2808 = vpop.permute.xlu0 %2807
    %v2814 = vsel %vm72, %v2799, 0
    %v2817 = vsel %vm72, %v2800, 0
    %2819 = vmatprep.subr.mxu0 0.0
    %2820 = vmatpush1.msra.mxu0 0.0
    %2821 = vmatprep.subr.mxu0 0.0
    %2822 = vmatpush1.msra.mxu0 0.0
    %2823 = vmatprep.subr.mxu0 0.0
    %2824 = vmatpush1.msra.mxu0 0.0
    %2825 = vmatprep.subr.mxu0 0.0
    %2826 = vmatpush1.msra.mxu0 0.0
    %2827 = vmatprep.subr.mxu0 0.0
    %2828 = vmatpush1.msra.mxu0 0.0
    %2829 = vmatprep.subr.mxu0 0.0
    %2830 = vmatpush1.msra.mxu0 0.0
    %2831 = vmatprep.subr.mxu0 0.0
    %2832 = vmatpush1.msra.mxu0 0.0
    %2833 = vmatprep.subr.mxu0 0.0
    %2834 = vmatpush1.msra.mxu0 0.0
    %2835 = vmatprep.subr.mxu0 0.0
    %2836 = vmatpush1.msra.mxu0 0.0
    %2837 = vmatprep.subr.mxu0 0.0
    %2838 = vmatpush1.msra.mxu0 0.0
    %2839 = vmatprep.subr.mxu0 0.0
    %2840 = vmatpush1.msra.mxu0 0.0
    %2841 = vmatprep.subr.mxu0 0.0
    %2842 = vmatpush1.msra.mxu0 0.0
    %2843 = vmatprep.subr.mxu0 0.0
    %2844 = vmatpush1.msra.mxu0 %v2808
    %2845 = vmatprep.subr.mxu0 0.0
    %2846 = vmatpush1.msra.mxu0 %v2806
    %2847 = vmatprep.subr.mxu0 0.0
    %2848 = vmatpush1.msra.mxu0 %v2804
    %2849 = vmatprep.subr.mxu0 0.0
    %2850 = vmatpush1.msra.mxu0 %v2802
    %2851 = vmatprep.subr.mxu0 0.0
    %2852 = vmatpush2.msra.mxu0 0.0
    %2853 = vmatprep.subr.mxu0 0.0
    %2854 = vmatpush2.msra.mxu0 0.0
    %2855 = vmatprep.subr.mxu0 0.0
    %2856 = vmatpush2.msra.mxu0 0.0
    %2857 = vmatprep.subr.mxu0 0.0
    %2858 = vmatpush2.msra.mxu0 0.0
    %2859 = vmatprep.subr.mxu0 0.0
    %2860 = vmatpush2.msra.mxu0 0.0
    %2861 = vmatprep.subr.mxu0 0.0
    %2862 = vmatpush2.msra.mxu0 0.0
    %2863 = vmatprep.subr.mxu0 0.0
    %2864 = vmatpush2.msra.mxu0 0.0
    %2865 = vmatprep.subr.mxu0 0.0
    %2866 = vmatpush2.msra.mxu0 0.0
    %2867 = vmatprep.subr.mxu0 0.0
    %2868 = vmatpush2.msra.mxu0 0.0
    %2869 = vmatprep.subr.mxu0 0.0
    %2870 = vmatpush2.msra.mxu0 0.0
    %2871 = vmatprep.subr.mxu0 0.0
    %2872 = vmatpush2.msra.mxu0 0.0
    %2873 = vmatprep.subr.mxu0 0.0
    %2874 = vmatpush2.msra.mxu0 0.0
    %2875 = vmatprep.subr.mxu0 0.0
    %2876 = vmatpush2.msra.mxu0 0.0
    %2877 = vmatprep.subr.mxu0 0.0
    %2878 = vmatpush2.msra.mxu0 0.0
    %2879 = vmatprep.subr.mxu0 0.0
    %2880 = vmatpush2.msra.mxu0 0.0
    %2881 = vmatprep.subr.mxu0 0.0
    %2882 = vmatpush2.msra.mxu0 0.0
    %2883 = vmatprep.mubr.f32.mxu0 0.0
    %2884 = vmatmul.mubr.f32.gmra.mxu0 %v2814
    %v2885 = vpop.f32.mrf.mxu0
    %v2886 = vadd.f32 0.0, %v2885
    %v2887 = vpop.f32.mrf.mxu0
    %2888 = vmatprep.mubr.f32.mxu0 0.0
    %2889 = vmatmul.mubr.f32.gmra.mxu0 %v2817
    %v2890 = vpop.f32.mrf.mxu0
    %v2891 = vadd.f32 0.0, %v2890
    %v2892 = vpop.f32.mrf.mxu0
    %2893 = vdwg.mxu0
    %2894 = vrot.lane.b32.xlu0 %v57, 32
    %v2895 = vpop.permute.xlu0 %2894
    %v2898 = vsel %vm321, %v2886, 0
    %v2901 = vsel %vm321, %v2891, 0
    %2903 = vmatprep.subr.mxu0 0.0
    %2904 = vmatpush1.msra.mxu0 0.0
    %2905 = vmatprep.subr.mxu0 0.0
    %2906 = vmatpush1.msra.mxu0 0.0
    %2907 = vmatprep.subr.mxu0 0.0
    %2908 = vmatpush1.msra.mxu0 0.0
    %2909 = vmatprep.subr.mxu0 0.0
    %2910 = vmatpush1.msra.mxu0 0.0
    %2911 = vmatprep.subr.mxu0 0.0
    %2912 = vmatpush1.msra.mxu0 0.0
    %2913 = vmatprep.subr.mxu0 0.0
    %2914 = vmatpush1.msra.mxu0 0.0
    %2915 = vmatprep.subr.mxu0 0.0
    %2916 = vmatpush1.msra.mxu0 0.0
    %2917 = vmatprep.subr.mxu0 0.0
    %2918 = vmatpush1.msra.mxu0 0.0
    %2919 = vmatprep.subr.mxu0 0.0
    %2920 = vmatpush1.msra.mxu0 0.0
    %2921 = vmatprep.subr.mxu0 0.0
    %2922 = vmatpush1.msra.mxu0 0.0
    %2923 = vmatprep.subr.mxu0 0.0
    %2924 = vmatpush1.msra.mxu0 0.0
    %2925 = vmatprep.subr.mxu0 0.0
    %2926 = vmatpush1.msra.mxu0 0.0
    %2927 = vmatprep.subr.mxu0 0.0
    %2928 = vmatpush1.msra.mxu0 0.0
    %2929 = vmatprep.subr.mxu0 0.0
    %2930 = vmatpush1.msra.mxu0 0.0
    %2931 = vmatprep.subr.mxu0 0.0
    %2932 = vmatpush1.msra.mxu0 0.0
    %2933 = vmatprep.subr.mxu0 0.0
    %2934 = vmatpush1.msra.mxu0 %v2895
    %2935 = vmatprep.subr.mxu0 0.0
    %2936 = vmatpush2.msra.mxu0 0.0
    %2937 = vmatprep.subr.mxu0 0.0
    %2938 = vmatpush2.msra.mxu0 0.0
    %2939 = vmatprep.subr.mxu0 0.0
    %2940 = vmatpush2.msra.mxu0 0.0
    %2941 = vmatprep.subr.mxu0 0.0
    %2942 = vmatpush2.msra.mxu0 0.0
    %2943 = vmatprep.subr.mxu0 0.0
    %2944 = vmatpush2.msra.mxu0 0.0
    %2945 = vmatprep.subr.mxu0 0.0
    %2946 = vmatpush2.msra.mxu0 0.0
    %2947 = vmatprep.subr.mxu0 0.0
    %2948 = vmatpush2.msra.mxu0 0.0
    %2949 = vmatprep.subr.mxu0 0.0
    %2950 = vmatpush2.msra.mxu0 0.0
    %2951 = vmatprep.subr.mxu0 0.0
    %2952 = vmatpush2.msra.mxu0 0.0
    %2953 = vmatprep.subr.mxu0 0.0
    %2954 = vmatpush2.msra.mxu0 0.0
    %2955 = vmatprep.subr.mxu0 0.0
    %2956 = vmatpush2.msra.mxu0 0.0
    %2957 = vmatprep.subr.mxu0 0.0
    %2958 = vmatpush2.msra.mxu0 0.0
    %2959 = vmatprep.subr.mxu0 0.0
    %2960 = vmatpush2.msra.mxu0 0.0
    %2961 = vmatprep.subr.mxu0 0.0
    %2962 = vmatpush2.msra.mxu0 0.0
    %2963 = vmatprep.subr.mxu0 0.0
    %2964 = vmatpush2.msra.mxu0 0.0
    %2965 = vmatprep.subr.mxu0 0.0
    %2966 = vmatpush2.msra.mxu0 0.0
    %2967 = vmatprep.mubr.f32.mxu0 0.0
    %2968 = vmatmul.mubr.f32.gmra.mxu0 %v2898
    %v2969 = vpop.f32.mrf.mxu0
    %v2970 = vadd.f32 0.0, %v2969
    %v2971 = vpop.f32.mrf.mxu0
    %2972 = vmatprep.mubr.f32.mxu0 0.0
    %2973 = vmatmul.mubr.f32.gmra.mxu0 %v2901
    %v2974 = vpop.f32.mrf.mxu0
    %v2975 = vadd.f32 0.0, %v2974
    %v2976 = vpop.f32.mrf.mxu0
    %2977 = vdwg.mxu0
    %v2978 = vadd.f32 %v2682, %v2970
    %v2979 = vadd.f32 %v2683, %v2975
    %2980 = vrot.lane.b32.xlu0 %v1503, 32
    %v2981 = vpop.permute.xlu0 %2980
    %v2983 = vadd.f32 %v2978, %v2981
    %v2984 = vadd.f32 %v2979, %v2981
    %v2985 = vadd.f32 %v1440, %v2983
    %v2986 = vadd.f32 %v1441, %v2984
    %v2987 = vsel %vm72, %v2985, 0.0
    %2988 = vadd.xlane.f32.xlu0 %v2987
    %v2989 = vpop.xlane.xlu0 %2988
    %v2990 = vsel %vm72, %v2986, 0.0
    %2991 = vadd.xlane.f32.xlu0 %v2990
    %v2992 = vpop.xlane.xlu0 %2991
    %v2993 = vmul.f32 %v2989, %v79
    %v2994 = vmul.f32 %v2992, %v79
    %v2995 = vsub.f32 %v2985, %v2993
    %v2996 = vsub.f32 %v2986, %v2994
    %v2997 = vmul.f32 %v2995, %v2995
    %v2998 = vmul.f32 %v2996, %v2996
    %v2999 = vsel %vm72, %v2997, 0.0
    %3000 = vadd.xlane.f32.xlu0 %v2999
    %v3001 = vpop.xlane.xlu0 %3000
    %v3002 = vsel %vm72, %v2998, 0.0
    %3003 = vadd.xlane.f32.xlu0 %v3002
    %v3004 = vpop.xlane.xlu0 %3003
    %v3005 = vmul.f32 %v3001, %v92
    %v3006 = vmul.f32 %v3004, %v92
    %v3007 = vrsqrt.pop %v3005
    %v3008 = vmul.f32 %v3005, %v3007
    %vm3009 = vcmp.eq.f32.partialorder %v3005, inf
    %v3010 = vsel %vm3009, %v3005, %v3008
    %vm3011 = vcmp.eq.f32.partialorder %v3005, 0.0
    %v3012 = vand.u32 %v3005, 2147483648
    %v3013 = vsel %vm3011, %v3012, %v3010
    %v3014 = vrsqrt.pop %v3006
    %v3015 = vmul.f32 %v3006, %v3014
    %vm3016 = vcmp.eq.f32.partialorder %v3006, inf
    %v3017 = vsel %vm3016, %v3006, %v3015
    %vm3018 = vcmp.eq.f32.partialorder %v3006, 0.0
    %v3019 = vand.u32 %v3006, 2147483648
    %v3020 = vsel %vm3018, %v3019, %v3017
    %v3021 = vadd.f32 %v3013, 1e-06
    %v3022 = vadd.f32 %v3020, 1e-06
    %v3023 = vrcp.pop %v3021
    %v3024 = vrcp.pop %v3022
    %v3025 = vmul.f32 %v2995, %v3023
    %v3026 = vmul.f32 %v2996, %v3024
    %v3027 = vlaneseq
    %v3028 = vshrl.u32 %v3027, 7
    %v3029 = vsub.s32 4, %v3028
    %v3030 = vrot.slane %v70, %v3029
    %v3031 = vmul.f32 %v3030, %v3025
    %v3032 = vmul.f32 %v3030, %v3026
    %v3033 = vlaneseq
    %v3034 = vshrl.u32 %v3033, 7
    %v3035 = vsub.s32 5, %v3034
    %v3036 = vrot.slane %v70, %v3035
    %v3037 = vadd.f32 %v3031, %v3036
    %v3038 = vadd.f32 %v3032, %v3036
    %v3039 = vlaneseq
    %v3040 = vshrl.u32 %v3039, 7
    %v3041 = vsub.s32 0, %v3040
    %v3042 = vrot.slane %v71, %v3041
    %v3044 = vsel %vm72, %v3037, 0
    %v3047 = vsel %vm72, %v3038, 0
    %3049 = vmatprep.subr.mxu0 0.0
    %3050 = vmatpush1.msra.mxu0 0.0
    %3051 = vmatprep.subr.mxu0 0.0
    %3052 = vmatpush1.msra.mxu0 0.0
    %3053 = vmatprep.subr.mxu0 0.0
    %3054 = vmatpush1.msra.mxu0 0.0
    %3055 = vmatprep.subr.mxu0 0.0
    %3056 = vmatpush1.msra.mxu0 0.0
    %3057 = vmatprep.subr.mxu0 0.0
    %3058 = vmatpush1.msra.mxu0 0.0
    %3059 = vmatprep.subr.mxu0 0.0
    %3060 = vmatpush1.msra.mxu0 0.0
    %3061 = vmatprep.subr.mxu0 0.0
    %3062 = vmatpush1.msra.mxu0 0.0
    %3063 = vmatprep.subr.mxu0 0.0
    %3064 = vmatpush1.msra.mxu0 0.0
    %3065 = vmatprep.subr.mxu0 0.0
    %3066 = vmatpush1.msra.mxu0 0.0
    %3067 = vmatprep.subr.mxu0 0.0
    %3068 = vmatpush1.msra.mxu0 0.0
    %3069 = vmatprep.subr.mxu0 0.0
    %3070 = vmatpush1.msra.mxu0 0.0
    %3071 = vmatprep.subr.mxu0 0.0
    %3072 = vmatpush1.msra.mxu0 0.0
    %3073 = vmatprep.subr.mxu0 0.0
    %3074 = vmatpush1.msra.mxu0 %v61
    %3075 = vmatprep.subr.mxu0 0.0
    %3076 = vmatpush1.msra.mxu0 %v60
    %3077 = vmatprep.subr.mxu0 0.0
    %3078 = vmatpush1.msra.mxu0 %v59
    %3079 = vmatprep.subr.mxu0 0.0
    %3080 = vmatpush1.msra.mxu0 %v58
    %3081 = vmatprep.subr.mxu0 0.0
    %3082 = vmatpush2.msra.mxu0 0.0
    %3083 = vmatprep.subr.mxu0 0.0
    %3084 = vmatpush2.msra.mxu0 0.0
    %3085 = vmatprep.subr.mxu0 0.0
    %3086 = vmatpush2.msra.mxu0 0.0
    %3087 = vmatprep.subr.mxu0 0.0
    %3088 = vmatpush2.msra.mxu0 0.0
    %3089 = vmatprep.subr.mxu0 0.0
    %3090 = vmatpush2.msra.mxu0 0.0
    %3091 = vmatprep.subr.mxu0 0.0
    %3092 = vmatpush2.msra.mxu0 0.0
    %3093 = vmatprep.subr.mxu0 0.0
    %3094 = vmatpush2.msra.mxu0 0.0
    %3095 = vmatprep.subr.mxu0 0.0
    %3096 = vmatpush2.msra.mxu0 0.0
    %3097 = vmatprep.subr.mxu0 0.0
    %3098 = vmatpush2.msra.mxu0 0.0
    %3099 = vmatprep.subr.mxu0 0.0
    %3100 = vmatpush2.msra.mxu0 0.0
    %3101 = vmatprep.subr.mxu0 0.0
    %3102 = vmatpush2.msra.mxu0 0.0
    %3103 = vmatprep.subr.mxu0 0.0
    %3104 = vmatpush2.msra.mxu0 0.0
    %3105 = vmatprep.subr.mxu0 0.0
    %3106 = vmatpush2.msra.mxu0 0.0
    %3107 = vmatprep.subr.mxu0 0.0
    %3108 = vmatpush2.msra.mxu0 0.0
    %3109 = vmatprep.subr.mxu0 0.0
    %3110 = vmatpush2.msra.mxu0 0.0
    %3111 = vmatprep.subr.mxu0 0.0
    %3112 = vmatpush2.msra.mxu0 0.0
    %3113 = vmatprep.mubr.f32.mxu0 0.0
    %3114 = vmatmul.mubr.f32.gmra.mxu0 %v3044
    %v3115 = vpop.f32.mrf.mxu0
    %v3116 = vadd.f32 %v3042, %v3115
    %v3117 = vpop.f32.mrf.mxu0
    %3118 = vmatprep.mubr.f32.mxu0 0.0
    %3119 = vmatmul.mubr.f32.gmra.mxu0 %v3047
    %v3120 = vpop.f32.mrf.mxu0
    %v3121 = vadd.f32 %v3042, %v3120
    %v3122 = vpop.f32.mrf.mxu0
    %3123 = vdwg.mxu0
    %v3124 = vmax.f32 %v3116, 0.0
    %v3125 = vmax.f32 %v3121, 0.0
    %vm3126 = vcmask 523264
    %v3128 = vsel %vm3126, %v3124, 0
    %v3131 = vsel %vm3126, %v3125, 0
    %3133 = vmatprep.subr.mxu0 0.0
    %3134 = vmatpush1.msra.mxu0 0.0
    %3135 = vmatprep.subr.mxu0 0.0
    %3136 = vmatpush1.msra.mxu0 0.0
    %3137 = vmatprep.subr.mxu0 0.0
    %3138 = vmatpush1.msra.mxu0 0.0
    %3139 = vmatprep.subr.mxu0 0.0
    %3140 = vmatpush1.msra.mxu0 0.0
    %3141 = vmatprep.subr.mxu0 0.0
    %3142 = vmatpush1.msra.mxu0 0.0
    %3143 = vmatprep.subr.mxu0 0.0
    %3144 = vmatpush1.msra.mxu0 0.0
    %3145 = vmatprep.subr.mxu0 0.0
    %3146 = vmatpush1.msra.mxu0 0.0
    %3147 = vmatprep.subr.mxu0 0.0
    %3148 = vmatpush1.msra.mxu0 0.0
    %3149 = vmatprep.subr.mxu0 0.0
    %3150 = vmatpush1.msra.mxu0 %v69
    %3151 = vmatprep.subr.mxu0 0.0
    %3152 = vmatpush1.msra.mxu0 %v68
    %3153 = vmatprep.subr.mxu0 0.0
    %3154 = vmatpush1.msra.mxu0 %v67
    %3155 = vmatprep.subr.mxu0 0.0
    %3156 = vmatpush1.msra.mxu0 %v66
    %3157 = vmatprep.subr.mxu0 0.0
    %3158 = vmatpush1.msra.mxu0 %v65
    %3159 = vmatprep.subr.mxu0 0.0
    %3160 = vmatpush1.msra.mxu0 %v64
    %3161 = vmatprep.subr.mxu0 0.0
    %3162 = vmatpush1.msra.mxu0 %v63
    %3163 = vmatprep.subr.mxu0 0.0
    %3164 = vmatpush1.msra.mxu0 %v62
    %3165 = vmatprep.subr.mxu0 0.0
    %3166 = vmatpush2.msra.mxu0 0.0
    %3167 = vmatprep.subr.mxu0 0.0
    %3168 = vmatpush2.msra.mxu0 0.0
    %3169 = vmatprep.subr.mxu0 0.0
    %3170 = vmatpush2.msra.mxu0 0.0
    %3171 = vmatprep.subr.mxu0 0.0
    %3172 = vmatpush2.msra.mxu0 0.0
    %3173 = vmatprep.subr.mxu0 0.0
    %3174 = vmatpush2.msra.mxu0 0.0
    %3175 = vmatprep.subr.mxu0 0.0
    %3176 = vmatpush2.msra.mxu0 0.0
    %3177 = vmatprep.subr.mxu0 0.0
    %3178 = vmatpush2.msra.mxu0 0.0
    %3179 = vmatprep.subr.mxu0 0.0
    %3180 = vmatpush2.msra.mxu0 0.0
    %3181 = vmatprep.subr.mxu0 0.0
    %3182 = vmatpush2.msra.mxu0 0.0
    %3183 = vmatprep.subr.mxu0 0.0
    %3184 = vmatpush2.msra.mxu0 0.0
    %3185 = vmatprep.subr.mxu0 0.0
    %3186 = vmatpush2.msra.mxu0 0.0
    %3187 = vmatprep.subr.mxu0 0.0
    %3188 = vmatpush2.msra.mxu0 0.0
    %3189 = vmatprep.subr.mxu0 0.0
    %3190 = vmatpush2.msra.mxu0 0.0
    %3191 = vmatprep.subr.mxu0 0.0
    %3192 = vmatpush2.msra.mxu0 0.0
    %3193 = vmatprep.subr.mxu0 0.0
    %3194 = vmatpush2.msra.mxu0 0.0
    %3195 = vmatprep.subr.mxu0 0.0
    %3196 = vmatpush2.msra.mxu0 0.0
    %3197 = vmatprep.mubr.f32.mxu0 0.0
    %3198 = vmatmul.mubr.f32.gmra.mxu0 %v3128
    %v3199 = vpop.f32.mrf.mxu0
    %v3200 = vadd.f32 0.0, %v3199
    %v3201 = vpop.f32.mrf.mxu0
    %3202 = vmatprep.mubr.f32.mxu0 0.0
    %3203 = vmatmul.mubr.f32.gmra.mxu0 %v3131
    %v3204 = vpop.f32.mrf.mxu0
    %v3205 = vadd.f32 0.0, %v3204
    %v3206 = vpop.f32.mrf.mxu0
    %3207 = vdwg.mxu0
    %v3208 = vadd.f32 %v2985, %v3200
    %v3209 = vadd.f32 %v2986, %v3205
    %3211 = vrot.lane.b32.xlu0 %v3042, 64
    %v3212 = vpop.permute.xlu0 %3211
    %v3214 = vadd.f32 %v3208, %v3212
    %v3215 = vadd.f32 %v3209, %v3212
    %3216 = vst.msk [vmem:[#allocation2] sm:$0xff] %vm72, %v3214
    %3217 = vst.msk [vmem:[#allocation2 + $0x8] sm:$0xff] %vm72, %v3215
    // Predicated region
    $region34: #{decoder_layer_pos_embed.1} parent=1 // pred_check
      _
    $region35: #{decoder_layer_pos_embed.1} parent=1 // pred_check_branch
      %3219 = sbr.rel (0) target = $region37
    $region36: #{decoder_layer_pos_embed.1} parent=1 // pred_region
      %s3221 = ssub.s32 256, 256
      %3222 = vsyncadd [#allocation3], %s3221
      %s3223 = sshll.u32 [#allocation2], 4
      %s3224 = int_to_ptr.vmem [resolvable:$true] %s3223
      %3229 = dma.vmem_to_hbm [thread:$0]  %s3224, 256, %s8, [#allocation3], 128, 128, 8
    $region37: #{decoder_layer_pos_embed.1} parent=1 // pred_fallthru
      _
    // Predicated region
    $region38: #{decoder_layer_pos_embed.1} parent=1 // pred_check
      _
    $region39: #{decoder_layer_pos_embed.1} parent=1 // pred_check_branch
      %3231 = sbr.rel (0) target = $region41
    $region40: #{decoder_layer_pos_embed.1} parent=1 // pred_region
      %3232 = dma.done [#allocation3], 256
    $region41: #{decoder_layer_pos_embed.1} parent=1 // pred_fallthru
      _
    %3233 = vsyncpa [#allocation3], 1

</llo_original>
